<compile_context>
chip_gen: v6e
topology: v6e:2x2x1
jax: 0.10.0
libtpu: 0.0.40
codegen_flags: <defaults>
</compile_context>

<pallas_src>
import functools
import math

import jax
import jax.numpy as jnp
from jax import lax
from jax.experimental import pallas as pl
from jax.experimental.pallas import tpu as pltpu


# ----------------------------- kernel helpers ------------------------------

def _layer_norm(x, gamma, beta, eps=1e-5):
    # PyTorch nn.LayerNorm: biased variance over last dim.
    mean = jnp.mean(x, axis=-1, keepdims=True)
    var = jnp.mean((x - mean) ** 2, axis=-1, keepdims=True)
    return (x - mean) * lax.rsqrt(var + eps) * gamma + beta


def _gelu_exact(x):
    # nn.GELU default = exact erf formulation.
    return 0.5 * x * (1.0 + lax.erf(x * (1.0 / math.sqrt(2.0))))


# ------------------------------- the kernel --------------------------------

def encoder_layer_kernel(x_ref, pos_ref,
                         ln1_g_ref, ln1_b_ref,
                         wqkv_ref, wproj_ref, bproj_ref,
                         ln2_g_ref, ln2_b_ref,
                         wfc1_ref, bfc1_ref, wfc2_ref, bfc2_ref,
                         out_ref,
                         acc_ref,
                         *, num_heads, compute_dtype, approx_recip):
    l = pl.program_id(1)
    n_layers = pl.num_programs(1)

    # First layer of this batch row: load x into the VMEM accumulator.
    @pl.when(l == 0)
    def _():
        acc_ref[...] = x_ref[0]

    x = acc_ref[...] + pos_ref[0]                      # (N, D) f32
    N, D = x.shape
    H = num_heads
    hd = D // H

    # ------------------------- attention branch ---------------------------
    h = _layer_norm(x, ln1_g_ref[0], ln1_b_ref[0])     # (N, D) f32
    # One fused, lane-dense QKV matmul (attention scale pre-folded into q cols).
    qkv = jnp.dot(h.astype(compute_dtype), wqkv_ref[0],
                  preferred_element_type=jnp.float32)  # (N, 3D) f32

    ctx_heads = []
    for hh in range(H):                                # static unroll over heads
        q_h = qkv[:, hh * hd:(hh + 1) * hd]                    # (N, hd)
        k_h = qkv[:, D + hh * hd:D + (hh + 1) * hd]            # (N, hd)
        v_h = qkv[:, 2 * D + hh * hd:2 * D + (hh + 1) * hd]    # (N, hd)

        s_h = jnp.einsum("qe,ke->qk",
                         q_h.astype(compute_dtype), k_h.astype(compute_dtype),
                         preferred_element_type=jnp.float32)   # (N, N)
        s_h = s_h - jnp.max(s_h, axis=-1, keepdims=True)
        p_h = jnp.exp(s_h)
        denom = jnp.sum(p_h, axis=-1, keepdims=True)
        if approx_recip:
            p_h = p_h * pl.reciprocal(denom, approx=True)      # EUP slot
        else:
            p_h = p_h / denom                                  # exact (f32 config)

        ctx_heads.append(
            jnp.einsum("qk,ke->qe",
                       p_h.astype(compute_dtype), v_h.astype(compute_dtype),
                       preferred_element_type=jnp.float32))    # (N, hd)

    ctx = jnp.concatenate(ctx_heads, axis=-1)                  # (N, D), head-concat
    attn_out = jnp.dot(ctx.astype(compute_dtype), wproj_ref[0],
                       preferred_element_type=jnp.float32) + bproj_ref[0]
    x = x + attn_out

    # ---------------------------- MLP branch -------------------------------
    h2 = _layer_norm(x, ln2_g_ref[0], ln2_b_ref[0])
    h2 = jnp.dot(h2.astype(compute_dtype), wfc1_ref[0],
                 preferred_element_type=jnp.float32) + bfc1_ref[0]
    h2 = _gelu_exact(h2)
    h2 = jnp.dot(h2.astype(compute_dtype), wfc2_ref[0],
                 preferred_element_type=jnp.float32) + bfc2_ref[0]
    x = x + h2

    acc_ref[...] = x

    # Last layer: write the result back for this batch row.
    @pl.when(l == n_layers - 1)
    def _():
        out_ref[0] = x.astype(out_ref.dtype)


# ------------------------------ python wrapper ------------------------------

_WEIGHT_NAMES = ("ln1_g", "ln1_b", "wqkv", "wproj", "bproj",
                 "ln2_g", "ln2_b", "wfc1", "bfc1", "wfc2", "bfc2")


@functools.partial(jax.jit,
                   static_argnames=("num_heads", "compute_dtype", "approx_recip"))
def transformer_encoder(x, pos, params, *, num_heads,
                        compute_dtype=jnp.float32, approx_recip=False):
    B, N, D = x.shape
    weight_args = [params[name] for name in _WEIGHT_NAMES]
    L = weight_args[0].shape[0]
    hidden = params["wfc1"].shape[-1]

    x_spec = pl.BlockSpec((1, N, D), lambda b, l: (b, 0, 0))

    def layer_spec(arr):
        nrest = arr.ndim - 1
        return pl.BlockSpec((1,) + tuple(arr.shape[1:]),
                            lambda b, l, nrest=nrest: (l,) + (0,) * nrest)

    # Rough VMEM budget: double-buffered per-layer weight blocks + x/pos/out blocks
    # + f32 x accumulator + f32 intermediates (qkv, per-head scores, MLP hidden),
    # with headroom; floored at the default 32 MiB scoped limit.
    per_layer_w = sum(math.prod(w.shape[1:]) * w.dtype.itemsize for w in weight_args)
    io_bytes = 3 * N * D * 4
    interm_bytes = (N * 3 * D + N * N + N * hidden + 4 * N * D) * 4
    vmem_limit = int(min(96 * 2 ** 20,
                         max(32 * 2 ** 20,
                             2 * (per_layer_w + io_bytes)
                             + N * D * 4 + 2 * interm_bytes)))

    kernel = functools.partial(encoder_layer_kernel,
                               num_heads=num_heads,
                               compute_dtype=compute_dtype,
                               approx_recip=approx_recip)

    return pl.pallas_call(
        kernel,
        out_shape=jax.ShapeDtypeStruct((B, N, D), jnp.float32),
        grid=(B, L),
        in_specs=[x_spec, x_spec] + [layer_spec(w) for w in weight_args],
        out_specs=x_spec,
        scratch_shapes=[pltpu.VMEM((N, D), jnp.float32)],
        compiler_params=pltpu.CompilerParams(
            dimension_semantics=("parallel", "arbitrary"),
            vmem_limit_bytes=vmem_limit),
    )(x, pos, *weight_args)


# --------------------------- parameter construction --------------------------

def init_block_params(key, dim, num_heads, mlp_ratio=4.0):
    # torch-equivalent layout, pre-transposed so y = x @ W  (== torch x @ W^T)
    hidden = int(dim * mlp_ratio)
    k0, k1, k2, k3 = jax.random.split(key, 4)
    std = 0.02
    return dict(
        ln1_g=jnp.ones((dim,), jnp.float32),
        ln1_b=jnp.zeros((dim,), jnp.float32),
        wqkv=std * jax.random.normal(k0, (dim, 3 * dim), jnp.float32),
        wproj=std * jax.random.normal(k1, (dim, dim), jnp.float32),
        bproj=jnp.zeros((dim,), jnp.float32),
        ln2_g=jnp.ones((dim,), jnp.float32),
        ln2_b=jnp.zeros((dim,), jnp.float32),
        wfc1=std * jax.random.normal(k2, (dim, hidden), jnp.float32),
        bfc1=jnp.zeros((hidden,), jnp.float32),
        wfc2=std * jax.random.normal(k3, (hidden, dim), jnp.float32),
        bfc2=jnp.zeros((dim,), jnp.float32),
    )


def pack_params_for_kernel(block_params, num_heads, compute_dtype=jnp.float32):
    """Stack per-layer params (leading L axis), fold the attention scale into the
    q columns of wqkv, and pre-cast matmul weights to compute_dtype (host side)."""
    D = block_params[0]["wproj"].shape[0]
    hd = D // num_heads
    scale = hd ** -0.5

    def stack(fn):
        return jnp.stack([fn(p) for p in block_params], axis=0)

    def fold_scale(wqkv):
        return jnp.concatenate([wqkv[:, :D] * scale, wqkv[:, D:]], axis=1)

    return dict(
        ln1_g=stack(lambda p: p["ln1_g"][None, :]),                    # (L, 1, D) f32
        ln1_b=stack(lambda p: p["ln1_b"][None, :]),
        wqkv=stack(lambda p: fold_scale(p["wqkv"])).astype(compute_dtype),   # (L, D, 3D)
        wproj=stack(lambda p: p["wproj"]).astype(compute_dtype),             # (L, D, D)
        bproj=stack(lambda p: p["bproj"][None, :]),                    # (L, 1, D) f32
        ln2_g=stack(lambda p: p["ln2_g"][None, :]),
        ln2_b=stack(lambda p: p["ln2_b"][None, :]),
        wfc1=stack(lambda p: p["wfc1"]).astype(compute_dtype),         # (L, D, hidden)
        bfc1=stack(lambda p: p["bfc1"][None, :]),                      # (L, 1, hidden)
        wfc2=stack(lambda p: p["wfc2"]).astype(compute_dtype),         # (L, hidden, D)
        bfc2=stack(lambda p: p["bfc2"][None, :]),
    )


# ------------------------------ pure-JAX reference ---------------------------

def _ref_block(x, pos, p, num_heads):
    x = x + pos
    B, N, D = x.shape
    hd = D // num_heads

    def ln(v, g, b):
        m = jnp.mean(v, -1, keepdims=True)
        var = jnp.mean((v - m) ** 2, -1, keepdims=True)
        return (v - m) / jnp.sqrt(var + 1e-5) * g + b

    h = ln(x, p["ln1_g"], p["ln1_b"])
    qkv = h @ p["wqkv"]
    q, k, v = qkv[..., :D], qkv[..., D:2 * D], qkv[..., 2 * D:]
    q = q.reshape(B, N, num_heads, hd).transpose(0, 2, 1, 3)
    k = k.reshape(B, N, num_heads, hd).transpose(0, 2, 1, 3)
    v = v.reshape(B, N, num_heads, hd).transpose(0, 2, 1, 3)
    attn = jax.nn.softmax((q @ k.transpose(0, 1, 3, 2)) * hd ** -0.5, axis=-1)
    o = (attn @ v).transpose(0, 2, 1, 3).reshape(B, N, D)
    x = x + (o @ p["wproj"] + p["bproj"])
    h2 = ln(x, p["ln2_g"], p["ln2_b"])
    h2 = jax.nn.gelu(h2 @ p["wfc1"] + p["bfc1"], approximate=False)
    return x + (h2 @ p["wfc2"] + p["bfc2"])


def _ref_encoder(x, pos, params, num_heads):
    for p in params:
        x = _ref_block(x, pos, p, num_heads)
    return x


# ----------------------------------- main ------------------------------------

if __name__ == "__main__":
    # Small but lane-dense demo shapes (D multiple of 128, N multiple of 8).
    B, N, D = 2, 32, 128          # batch, tokens, embed dim
    num_heads = 4
    depth = 3
    mlp_ratio = 4.0
    assert D % num_heads == 0

    key = jax.random.PRNGKey(0)
    kx, kp, kw = jax.random.split(key, 3)
    x = jax.random.normal(kx, (B, N, D), jnp.float32)
    pos = jax.random.normal(kp, (B, N, D), jnp.float32)

    block_keys = jax.random.split(kw, depth)
    block_params = [init_block_params(block_keys[i], D, num_heads, mlp_ratio)
                    for i in range(depth)]
    # compute_dtype=jnp.bfloat16, approx_recip=True is the production config
    # (loosen the tolerance / reference accordingly); f32 here keeps the 1e-4 check.
    packed = pack_params_for_kernel(block_params, num_heads,
                                    compute_dtype=jnp.float32)

    out = jax.block_until_ready(
        transformer_encoder(x, pos, packed, num_heads=num_heads,
                            compute_dtype=jnp.float32, approx_recip=False))
    ref = _ref_encoder(x, pos, block_params, num_heads)

    assert out.shape == (B, N, D)
    assert jnp.allclose(out, ref, atol=1e-4, rtol=1e-4), "mismatch vs pure-JAX reference"

    print("KERNEL_OK")
</pallas_src>

<mosaic_0001>
module attributes {stable_mosaic.version = 11 : i64} {
  func.func @encoder_layer_kernel(%arg0: i32, %arg1: i32, %arg2: memref<1x32x128xf32, #tpu.memory_space<vmem>>, %arg3: memref<1x32x128xf32, #tpu.memory_space<vmem>>, %arg4: memref<1x1x128xf32, #tpu.memory_space<vmem>>, %arg5: memref<1x1x128xf32, #tpu.memory_space<vmem>>, %arg6: memref<1x128x384xf32, #tpu.memory_space<vmem>>, %arg7: memref<1x128x128xf32, #tpu.memory_space<vmem>>, %arg8: memref<1x1x128xf32, #tpu.memory_space<vmem>>, %arg9: memref<1x1x128xf32, #tpu.memory_space<vmem>>, %arg10: memref<1x1x128xf32, #tpu.memory_space<vmem>>, %arg11: memref<1x128x512xf32, #tpu.memory_space<vmem>>, %arg12: memref<1x1x512xf32, #tpu.memory_space<vmem>>, %arg13: memref<1x512x128xf32, #tpu.memory_space<vmem>>, %arg14: memref<1x1x128xf32, #tpu.memory_space<vmem>>, %arg15: memref<1x32x128xf32, #tpu.memory_space<vmem>>, %arg16: memref<32x128xf32, #tpu.memory_space<vmem>>) attributes {dimension_semantics = [#tpu.dimension_semantics<parallel>, #tpu.dimension_semantics<arbitrary>], iteration_bounds = array<i64: 2, 3>, scalar_prefetch = 0 : i64, scratch_operands = 1 : i64, tpu.core_type = #tpu.core_type<tc>, window_params = [{transform_indices = @transform_0, window_bounds = array<i64: 1, 32, 128>}, {transform_indices = @transform_1, window_bounds = array<i64: 1, 32, 128>}, {transform_indices = @transform_2, window_bounds = array<i64: 1, 1, 128>}, {transform_indices = @transform_3, window_bounds = array<i64: 1, 1, 128>}, {transform_indices = @transform_4, window_bounds = array<i64: 1, 128, 384>}, {transform_indices = @transform_5, window_bounds = array<i64: 1, 128, 128>}, {transform_indices = @transform_6, window_bounds = array<i64: 1, 1, 128>}, {transform_indices = @transform_7, window_bounds = array<i64: 1, 1, 128>}, {transform_indices = @transform_8, window_bounds = array<i64: 1, 1, 128>}, {transform_indices = @transform_9, window_bounds = array<i64: 1, 128, 512>}, {transform_indices = @transform_10, window_bounds = array<i64: 1, 1, 512>}, {transform_indices = @transform_11, window_bounds = array<i64: 1, 512, 128>}, {transform_indices = @transform_12, window_bounds = array<i64: 1, 1, 128>}, {transform_indices = @transform_13, window_bounds = array<i64: 1, 32, 128>}]} {
    %c0_i32 = arith.constant 0 : i32
    %0 = arith.cmpi eq, %arg1, %c0_i32 : i32
    %1 = arith.extui %0 : i1 to i32
    %c0_i32_0 = arith.constant 0 : i32
    %2 = arith.cmpi ne, %1, %c0_i32_0 : i32
    scf.if %2 {
      %c0_73 = arith.constant 0 : index
      %c0_74 = arith.constant 0 : index
      %c0_75 = arith.constant 0 : index
      %154 = vector.load %arg2[%c0_73, %c0_74, %c0_75] : memref<1x32x128xf32, #tpu.memory_space<vmem>>, vector<1x32x128xf32>
      %155 = vector.shape_cast %154 : vector<1x32x128xf32> to vector<32x128xf32>
      %c0_76 = arith.constant 0 : index
      %c0_77 = arith.constant 0 : index
      %156 = vector.load %arg16[%c0_76, %c0_77] : memref<32x128xf32, #tpu.memory_space<vmem>>, vector<32x128xf32>
      tpu.vector_store %arg16[%c0_76, %c0_77], %155 {strides = array<i32>} : memref<32x128xf32, #tpu.memory_space<vmem>>, vector<32x128xf32>,
    } else {
    }
    %c0 = arith.constant 0 : index
    %c0_1 = arith.constant 0 : index
    %3 = vector.load %arg16[%c0, %c0_1] : memref<32x128xf32, #tpu.memory_space<vmem>>, vector<32x128xf32>
    %c0_2 = arith.constant 0 : index
    %c0_3 = arith.constant 0 : index
    %c0_4 = arith.constant 0 : index
    %4 = vector.load %arg3[%c0_2, %c0_3, %c0_4] : memref<1x32x128xf32, #tpu.memory_space<vmem>>, vector<1x32x128xf32>
    %5 = vector.shape_cast %4 : vector<1x32x128xf32> to vector<32x128xf32>
    %6 = arith.addf %3, %5 : vector<32x128xf32>
    %c0_5 = arith.constant 0 : index
    %c0_6 = arith.constant 0 : index
    %c0_7 = arith.constant 0 : index
    %7 = vector.load %arg4[%c0_5, %c0_6, %c0_7] : memref<1x1x128xf32, #tpu.memory_space<vmem>>, vector<1x1x128xf32>
    %8 = vector.shape_cast %7 : vector<1x1x128xf32> to vector<1x128xf32>
    %c0_8 = arith.constant 0 : index
    %c0_9 = arith.constant 0 : index
    %c0_10 = arith.constant 0 : index
    %9 = vector.load %arg5[%c0_8, %c0_9, %c0_10] : memref<1x1x128xf32, #tpu.memory_space<vmem>>, vector<1x1x128xf32>
    %10 = vector.shape_cast %9 : vector<1x1x128xf32> to vector<1x128xf32>
    %cst = arith.constant dense<0.000000e+00> : vector<32xf32>
    %11 = vector.multi_reduction <add>, %6, %cst [1] : vector<32x128xf32> to vector<32xf32>
    %12 = vector.shape_cast %11 : vector<32xf32> to vector<32x1xf32>
    %cst_11 = arith.constant 1.280000e+02 : f32
    %13 = vector.broadcast %cst_11 : f32 to vector<32x1xf32>
    %14 = arith.divf %12, %13 : vector<32x1xf32>
    %15 = vector.broadcast %14 : vector<32x1xf32> to vector<32x128xf32>
    %16 = arith.subf %6, %15 : vector<32x128xf32>
    %17 = arith.mulf %16, %16 : vector<32x128xf32>
    %cst_12 = arith.constant dense<0.000000e+00> : vector<32xf32>
    %18 = vector.multi_reduction <add>, %17, %cst_12 [1] : vector<32x128xf32> to vector<32xf32>
    %19 = vector.shape_cast %18 : vector<32xf32> to vector<32x1xf32>
    %cst_13 = arith.constant 1.280000e+02 : f32
    %20 = vector.broadcast %cst_13 : f32 to vector<32x1xf32>
    %21 = arith.divf %19, %20 : vector<32x1xf32>
    %22 = vector.broadcast %14 : vector<32x1xf32> to vector<32x128xf32>
    %23 = arith.subf %6, %22 : vector<32x128xf32>
    %cst_14 = arith.constant 9.99999974E-6 : f32
    %24 = vector.broadcast %cst_14 : f32 to vector<32x1xf32>
    %25 = arith.addf %21, %24 : vector<32x1xf32>
    %26 = math.rsqrt %25 : vector<32x1xf32>
    %27 = vector.broadcast %26 : vector<32x1xf32> to vector<32x128xf32>
    %28 = arith.mulf %23, %27 : vector<32x128xf32>
    %29 = vector.broadcast %8 : vector<1x128xf32> to vector<32x128xf32>
    %30 = arith.mulf %28, %29 : vector<32x128xf32>
    %31 = vector.broadcast %10 : vector<1x128xf32> to vector<32x128xf32>
    %32 = arith.addf %30, %31 : vector<32x128xf32>
    %c0_15 = arith.constant 0 : index
    %c0_16 = arith.constant 0 : index
    %c0_17 = arith.constant 0 : index
    %33 = vector.load %arg6[%c0_15, %c0_16, %c0_17] : memref<1x128x384xf32, #tpu.memory_space<vmem>>, vector<1x128x384xf32>
    %34 = vector.shape_cast %33 : vector<1x128x384xf32> to vector<128x384xf32>
    %cst_18 = arith.constant dense<0.000000e+00> : vector<32x384xf32>
    %35 = tpu.matmul %32, %34, %cst_18 {dimension_numbers = #tpu.dot_dimension_numbers<[1], [0], [0], [1], [0, 0, 1, 1], [], []>} : vector<32x128xf32>, vector<128x384xf32>, vector<32x384xf32> -> vector<32x384xf32>
    %36 = vector.extract_strided_slice %35 {offsets = [0, 0], sizes = [32, 32], strides = [1, 1]} : vector<32x384xf32> to vector<32x32xf32>
    %37 = vector.extract_strided_slice %35 {offsets = [0, 128], sizes = [32, 32], strides = [1, 1]} : vector<32x384xf32> to vector<32x32xf32>
    %38 = vector.extract_strided_slice %35 {offsets = [0, 256], sizes = [32, 32], strides = [1, 1]} : vector<32x384xf32> to vector<32x32xf32>
    "tpu.trace_start"() <{level = 10 : i32, message = "qe,ke->qk"}> : () -> ()
    %cst_19 = arith.constant dense<0.000000e+00> : vector<32x32xf32>
    %39 = tpu.matmul %36, %37, %cst_19 {dimension_numbers = #tpu.dot_dimension_numbers<[1], [1], [0], [0], [0, 0, 1, 0], [], []>} : vector<32x32xf32>, vector<32x32xf32>, vector<32x32xf32> -> vector<32x32xf32>
    "tpu.trace_stop"() : () -> ()
    %cst_20 = arith.constant dense<0xFF800000> : vector<32xf32>
    %40 = vector.multi_reduction <maximumf>, %39, %cst_20 [1] : vector<32x32xf32> to vector<32xf32>
    %41 = vector.shape_cast %40 : vector<32xf32> to vector<32x1xf32>
    %42 = vector.broadcast %41 : vector<32x1xf32> to vector<32x32xf32>
    %43 = arith.subf %39, %42 : vector<32x32xf32>
    %44 = math.exp %43 : vector<32x32xf32>
    %cst_21 = arith.constant dense<0.000000e+00> : vector<32xf32>
    %45 = vector.multi_reduction <add>, %44, %cst_21 [1] : vector<32x32xf32> to vector<32xf32>
    %46 = vector.shape_cast %45 : vector<32xf32> to vector<32x1xf32>
    %47 = vector.broadcast %46 : vector<32x1xf32> to vector<32x32xf32>
    %48 = arith.divf %44, %47 : vector<32x32xf32>
    "tpu.trace_start"() <{level = 10 : i32, message = "qk,ke->qe"}> : () -> ()
    %cst_22 = arith.constant dense<0.000000e+00> : vector<32x32xf32>
    %49 = tpu.matmul %48, %38, %cst_22 {dimension_numbers = #tpu.dot_dimension_numbers<[1], [0], [0], [1], [0, 0, 1, 1], [], []>} : vector<32x32xf32>, vector<32x32xf32>, vector<32x32xf32> -> vector<32x32xf32>
    "tpu.trace_stop"() : () -> ()
    %50 = vector.extract_strided_slice %35 {offsets = [0, 32], sizes = [32, 32], strides = [1, 1]} : vector<32x384xf32> to vector<32x32xf32>
    %51 = vector.extract_strided_slice %35 {offsets = [0, 160], sizes = [32, 32], strides = [1, 1]} : vector<32x384xf32> to vector<32x32xf32>
    %52 = vector.extract_strided_slice %35 {offsets = [0, 288], sizes = [32, 32], strides = [1, 1]} : vector<32x384xf32> to vector<32x32xf32>
    "tpu.trace_start"() <{level = 10 : i32, message = "qe,ke->qk"}> : () -> ()
    %cst_23 = arith.constant dense<0.000000e+00> : vector<32x32xf32>
    %53 = tpu.matmul %50, %51, %cst_23 {dimension_numbers = #tpu.dot_dimension_numbers<[1], [1], [0], [0], [0, 0, 1, 0], [], []>} : vector<32x32xf32>, vector<32x32xf32>, vector<32x32xf32> -> vector<32x32xf32>
    "tpu.trace_stop"() : () -> ()
    %cst_24 = arith.constant dense<0xFF800000> : vector<32xf32>
    %54 = vector.multi_reduction <maximumf>, %53, %cst_24 [1] : vector<32x32xf32> to vector<32xf32>
    %55 = vector.shape_cast %54 : vector<32xf32> to vector<32x1xf32>
    %56 = vector.broadcast %55 : vector<32x1xf32> to vector<32x32xf32>
    %57 = arith.subf %53, %56 : vector<32x32xf32>
    %58 = math.exp %57 : vector<32x32xf32>
    %cst_25 = arith.constant dense<0.000000e+00> : vector<32xf32>
    %59 = vector.multi_reduction <add>, %58, %cst_25 [1] : vector<32x32xf32> to vector<32xf32>
    %60 = vector.shape_cast %59 : vector<32xf32> to vector<32x1xf32>
    %61 = vector.broadcast %60 : vector<32x1xf32> to vector<32x32xf32>
    %62 = arith.divf %58, %61 : vector<32x32xf32>
    "tpu.trace_start"() <{level = 10 : i32, message = "qk,ke->qe"}> : () -> ()
    %cst_26 = arith.constant dense<0.000000e+00> : vector<32x32xf32>
    %63 = tpu.matmul %62, %52, %cst_26 {dimension_numbers = #tpu.dot_dimension_numbers<[1], [0], [0], [1], [0, 0, 1, 1], [], []>} : vector<32x32xf32>, vector<32x32xf32>, vector<32x32xf32> -> vector<32x32xf32>
    "tpu.trace_stop"() : () -> ()
    %64 = vector.extract_strided_slice %35 {offsets = [0, 64], sizes = [32, 32], strides = [1, 1]} : vector<32x384xf32> to vector<32x32xf32>
    %65 = vector.extract_strided_slice %35 {offsets = [0, 192], sizes = [32, 32], strides = [1, 1]} : vector<32x384xf32> to vector<32x32xf32>
    %66 = vector.extract_strided_slice %35 {offsets = [0, 320], sizes = [32, 32], strides = [1, 1]} : vector<32x384xf32> to vector<32x32xf32>
    "tpu.trace_start"() <{level = 10 : i32, message = "qe,ke->qk"}> : () -> ()
    %cst_27 = arith.constant dense<0.000000e+00> : vector<32x32xf32>
    %67 = tpu.matmul %64, %65, %cst_27 {dimension_numbers = #tpu.dot_dimension_numbers<[1], [1], [0], [0], [0, 0, 1, 0], [], []>} : vector<32x32xf32>, vector<32x32xf32>, vector<32x32xf32> -> vector<32x32xf32>
    "tpu.trace_stop"() : () -> ()
    %cst_28 = arith.constant dense<0xFF800000> : vector<32xf32>
    %68 = vector.multi_reduction <maximumf>, %67, %cst_28 [1] : vector<32x32xf32> to vector<32xf32>
    %69 = vector.shape_cast %68 : vector<32xf32> to vector<32x1xf32>
    %70 = vector.broadcast %69 : vector<32x1xf32> to vector<32x32xf32>
    %71 = arith.subf %67, %70 : vector<32x32xf32>
    %72 = math.exp %71 : vector<32x32xf32>
    %cst_29 = arith.constant dense<0.000000e+00> : vector<32xf32>
    %73 = vector.multi_reduction <add>, %72, %cst_29 [1] : vector<32x32xf32> to vector<32xf32>
    %74 = vector.shape_cast %73 : vector<32xf32> to vector<32x1xf32>
    %75 = vector.broadcast %74 : vector<32x1xf32> to vector<32x32xf32>
    %76 = arith.divf %72, %75 : vector<32x32xf32>
    "tpu.trace_start"() <{level = 10 : i32, message = "qk,ke->qe"}> : () -> ()
    %cst_30 = arith.constant dense<0.000000e+00> : vector<32x32xf32>
    %77 = tpu.matmul %76, %66, %cst_30 {dimension_numbers = #tpu.dot_dimension_numbers<[1], [0], [0], [1], [0, 0, 1, 1], [], []>} : vector<32x32xf32>, vector<32x32xf32>, vector<32x32xf32> -> vector<32x32xf32>
    "tpu.trace_stop"() : () -> ()
    %78 = vector.extract_strided_slice %35 {offsets = [0, 96], sizes = [32, 32], strides = [1, 1]} : vector<32x384xf32> to vector<32x32xf32>
    %79 = vector.extract_strided_slice %35 {offsets = [0, 224], sizes = [32, 32], strides = [1, 1]} : vector<32x384xf32> to vector<32x32xf32>
    %80 = vector.extract_strided_slice %35 {offsets = [0, 352], sizes = [32, 32], strides = [1, 1]} : vector<32x384xf32> to vector<32x32xf32>
    "tpu.trace_start"() <{level = 10 : i32, message = "qe,ke->qk"}> : () -> ()
    %cst_31 = arith.constant dense<0.000000e+00> : vector<32x32xf32>
    %81 = tpu.matmul %78, %79, %cst_31 {dimension_numbers = #tpu.dot_dimension_numbers<[1], [1], [0], [0], [0, 0, 1, 0], [], []>} : vector<32x32xf32>, vector<32x32xf32>, vector<32x32xf32> -> vector<32x32xf32>
    "tpu.trace_stop"() : () -> ()
    %cst_32 = arith.constant dense<0xFF800000> : vector<32xf32>
    %82 = vector.multi_reduction <maximumf>, %81, %cst_32 [1] : vector<32x32xf32> to vector<32xf32>
    %83 = vector.shape_cast %82 : vector<32xf32> to vector<32x1xf32>
    %84 = vector.broadcast %83 : vector<32x1xf32> to vector<32x32xf32>
    %85 = arith.subf %81, %84 : vector<32x32xf32>
    %86 = math.exp %85 : vector<32x32xf32>
    %cst_33 = arith.constant dense<0.000000e+00> : vector<32xf32>
    %87 = vector.multi_reduction <add>, %86, %cst_33 [1] : vector<32x32xf32> to vector<32xf32>
    %88 = vector.shape_cast %87 : vector<32xf32> to vector<32x1xf32>
    %89 = vector.broadcast %88 : vector<32x1xf32> to vector<32x32xf32>
    %90 = arith.divf %86, %89 : vector<32x32xf32>
    "tpu.trace_start"() <{level = 10 : i32, message = "qk,ke->qe"}> : () -> ()
    %cst_34 = arith.constant dense<0.000000e+00> : vector<32x32xf32>
    %91 = tpu.matmul %90, %80, %cst_34 {dimension_numbers = #tpu.dot_dimension_numbers<[1], [0], [0], [1], [0, 0, 1, 1], [], []>} : vector<32x32xf32>, vector<32x32xf32>, vector<32x32xf32> -> vector<32x32xf32>
    "tpu.trace_stop"() : () -> ()
    %92 = tpu.concatenate %49, %63, %77, %91 in 1 : vector<32x32xf32>, vector<32x32xf32>, vector<32x32xf32>, vector<32x32xf32> -> vector<32x128xf32>
    %c0_35 = arith.constant 0 : index
    %c0_36 = arith.constant 0 : index
    %c0_37 = arith.constant 0 : index
    %93 = vector.load %arg7[%c0_35, %c0_36, %c0_37] : memref<1x128x128xf32, #tpu.memory_space<vmem>>, vector<1x128x128xf32>
    %94 = vector.shape_cast %93 : vector<1x128x128xf32> to vector<128x128xf32>
    %cst_38 = arith.constant dense<0.000000e+00> : vector<32x128xf32>
    %95 = tpu.matmul %92, %94, %cst_38 {dimension_numbers = #tpu.dot_dimension_numbers<[1], [0], [0], [1], [0, 0, 1, 1], [], []>} : vector<32x128xf32>, vector<128x128xf32>, vector<32x128xf32> -> vector<32x128xf32>
    %c0_39 = arith.constant 0 : index
    %c0_40 = arith.constant 0 : index
    %c0_41 = arith.constant 0 : index
    %96 = vector.load %arg8[%c0_39, %c0_40, %c0_41] : memref<1x1x128xf32, #tpu.memory_space<vmem>>, vector<1x1x128xf32>
    %97 = vector.shape_cast %96 : vector<1x1x128xf32> to vector<1x128xf32>
    %98 = vector.broadcast %97 : vector<1x128xf32> to vector<32x128xf32>
    %99 = arith.addf %95, %98 : vector<32x128xf32>
    %100 = arith.addf %6, %99 : vector<32x128xf32>
    %c0_42 = arith.constant 0 : index
    %c0_43 = arith.constant 0 : index
    %c0_44 = arith.constant 0 : index
    %101 = vector.load %arg9[%c0_42, %c0_43, %c0_44] : memref<1x1x128xf32, #tpu.memory_space<vmem>>, vector<1x1x128xf32>
    %102 = vector.shape_cast %101 : vector<1x1x128xf32> to vector<1x128xf32>
    %c0_45 = arith.constant 0 : index
    %c0_46 = arith.constant 0 : index
    %c0_47 = arith.constant 0 : index
    %103 = vector.load %arg10[%c0_45, %c0_46, %c0_47] : memref<1x1x128xf32, #tpu.memory_space<vmem>>, vector<1x1x128xf32>
    %104 = vector.shape_cast %103 : vector<1x1x128xf32> to vector<1x128xf32>
    %cst_48 = arith.constant dense<0.000000e+00> : vector<32xf32>
    %105 = vector.multi_reduction <add>, %100, %cst_48 [1] : vector<32x128xf32> to vector<32xf32>
    %106 = vector.shape_cast %105 : vector<32xf32> to vector<32x1xf32>
    %cst_49 = arith.constant 1.280000e+02 : f32
    %107 = vector.broadcast %cst_49 : f32 to vector<32x1xf32>
    %108 = arith.divf %106, %107 : vector<32x1xf32>
    %109 = vector.broadcast %108 : vector<32x1xf32> to vector<32x128xf32>
    %110 = arith.subf %100, %109 : vector<32x128xf32>
    %111 = arith.mulf %110, %110 : vector<32x128xf32>
    %cst_50 = arith.constant dense<0.000000e+00> : vector<32xf32>
    %112 = vector.multi_reduction <add>, %111, %cst_50 [1] : vector<32x128xf32> to vector<32xf32>
    %113 = vector.shape_cast %112 : vector<32xf32> to vector<32x1xf32>
    %cst_51 = arith.constant 1.280000e+02 : f32
    %114 = vector.broadcast %cst_51 : f32 to vector<32x1xf32>
    %115 = arith.divf %113, %114 : vector<32x1xf32>
    %116 = vector.broadcast %108 : vector<32x1xf32> to vector<32x128xf32>
    %117 = arith.subf %100, %116 : vector<32x128xf32>
    %cst_52 = arith.constant 9.99999974E-6 : f32
    %118 = vector.broadcast %cst_52 : f32 to vector<32x1xf32>
    %119 = arith.addf %115, %118 : vector<32x1xf32>
    %120 = math.rsqrt %119 : vector<32x1xf32>
    %121 = vector.broadcast %120 : vector<32x1xf32> to vector<32x128xf32>
    %122 = arith.mulf %117, %121 : vector<32x128xf32>
    %123 = vector.broadcast %102 : vector<1x128xf32> to vector<32x128xf32>
    %124 = arith.mulf %122, %123 : vector<32x128xf32>
    %125 = vector.broadcast %104 : vector<1x128xf32> to vector<32x128xf32>
    %126 = arith.addf %124, %125 : vector<32x128xf32>
    %c0_53 = arith.constant 0 : index
    %c0_54 = arith.constant 0 : index
    %c0_55 = arith.constant 0 : index
    %127 = vector.load %arg11[%c0_53, %c0_54, %c0_55] : memref<1x128x512xf32, #tpu.memory_space<vmem>>, vector<1x128x512xf32>
    %128 = vector.shape_cast %127 : vector<1x128x512xf32> to vector<128x512xf32>
    %cst_56 = arith.constant dense<0.000000e+00> : vector<32x512xf32>
    %129 = tpu.matmul %126, %128, %cst_56 {dimension_numbers = #tpu.dot_dimension_numbers<[1], [0], [0], [1], [0, 0, 1, 1], [], []>} : vector<32x128xf32>, vector<128x512xf32>, vector<32x512xf32> -> vector<32x512xf32>
    %c0_57 = arith.constant 0 : index
    %c0_58 = arith.constant 0 : index
    %c0_59 = arith.constant 0 : index
    %130 = vector.load %arg12[%c0_57, %c0_58, %c0_59] : memref<1x1x512xf32, #tpu.memory_space<vmem>>, vector<1x1x512xf32>
    %131 = vector.shape_cast %130 : vector<1x1x512xf32> to vector<1x512xf32>
    %132 = vector.broadcast %131 : vector<1x512xf32> to vector<32x512xf32>
    %133 = arith.addf %129, %132 : vector<32x512xf32>
    %cst_60 = arith.constant 5.000000e-01 : f32
    %134 = vector.broadcast %cst_60 : f32 to vector<32x512xf32>
    %135 = arith.mulf %134, %133 : vector<32x512xf32>
    %cst_61 = arith.constant 0.707106769 : f32
    %136 = vector.broadcast %cst_61 : f32 to vector<32x512xf32>
    %137 = arith.mulf %133, %136 : vector<32x512xf32>
    %138 = math.erf %137 : vector<32x512xf32>
    %cst_62 = arith.constant 1.000000e+00 : f32
    %139 = vector.broadcast %cst_62 : f32 to vector<32x512xf32>
    %140 = arith.addf %139, %138 : vector<32x512xf32>
    %141 = arith.mulf %135, %140 : vector<32x512xf32>
    %c0_63 = arith.constant 0 : index
    %c0_64 = arith.constant 0 : index
    %c0_65 = arith.constant 0 : index
    %142 = vector.load %arg13[%c0_63, %c0_64, %c0_65] : memref<1x512x128xf32, #tpu.memory_space<vmem>>, vector<1x512x128xf32>
    %143 = vector.shape_cast %142 : vector<1x512x128xf32> to vector<512x128xf32>
    %cst_66 = arith.constant dense<0.000000e+00> : vector<32x128xf32>
    %144 = tpu.matmul %141, %143, %cst_66 {dimension_numbers = #tpu.dot_dimension_numbers<[1], [0], [0], [1], [0, 0, 1, 1], [], []>} : vector<32x512xf32>, vector<512x128xf32>, vector<32x128xf32> -> vector<32x128xf32>
    %c0_67 = arith.constant 0 : index
    %c0_68 = arith.constant 0 : index
    %c0_69 = arith.constant 0 : index
    %145 = vector.load %arg14[%c0_67, %c0_68, %c0_69] : memref<1x1x128xf32, #tpu.memory_space<vmem>>, vector<1x1x128xf32>
    %146 = vector.shape_cast %145 : vector<1x1x128xf32> to vector<1x128xf32>
    %147 = vector.broadcast %146 : vector<1x128xf32> to vector<32x128xf32>
    %148 = arith.addf %144, %147 : vector<32x128xf32>
    %149 = arith.addf %100, %148 : vector<32x128xf32>
    %c0_70 = arith.constant 0 : index
    %c0_71 = arith.constant 0 : index
    %150 = vector.load %arg16[%c0_70, %c0_71] : memref<32x128xf32, #tpu.memory_space<vmem>>, vector<32x128xf32>
    tpu.vector_store %arg16[%c0_70, %c0_71], %149 {strides = array<i32>} : memref<32x128xf32, #tpu.memory_space<vmem>>, vector<32x128xf32>,
    %c2_i32 = arith.constant 2 : i32
    %151 = arith.cmpi eq, %arg1, %c2_i32 : i32
    %152 = arith.extui %151 : i1 to i32
    %c0_i32_72 = arith.constant 0 : i32
    %153 = arith.cmpi ne, %152, %c0_i32_72 : i32
    scf.if %153 {
      %c0_73 = arith.constant 0 : index
      %c0_74 = arith.constant 0 : index
      %c0_75 = arith.constant 0 : index
      %154 = vector.load %arg15[%c0_73, %c0_74, %c0_75] : memref<1x32x128xf32, #tpu.memory_space<vmem>>, vector<1x32x128xf32>
      %155 = vector.shape_cast %154 : vector<1x32x128xf32> to vector<32x128xf32>
      %156 = vector.shape_cast %149 : vector<32x128xf32> to vector<1x32x128xf32>
      tpu.vector_store %arg15[%c0_73, %c0_74, %c0_75], %156 {strides = array<i32>} : memref<1x32x128xf32, #tpu.memory_space<vmem>>, vector<1x32x128xf32>,
    } else {
    }
    return
  }
  func.func @transform_0(%arg0: i32, %arg1: i32) -> (i32, i32, i32) {
    %c0_i32 = arith.constant 0 : i32
    %c0_i32_0 = arith.constant 0 : i32
    %c0_i32_1 = arith.constant 0 : i32
    return %arg0, %c0_i32, %c0_i32_0 : i32, i32, i32
  }
  func.func @transform_1(%arg0: i32, %arg1: i32) -> (i32, i32, i32) {
    %c0_i32 = arith.constant 0 : i32
    %c0_i32_0 = arith.constant 0 : i32
    %c0_i32_1 = arith.constant 0 : i32
    return %arg0, %c0_i32, %c0_i32_0 : i32, i32, i32
  }
  func.func @transform_2(%arg0: i32, %arg1: i32) -> (i32, i32, i32) {
    %c0_i32 = arith.constant 0 : i32
    %c0_i32_0 = arith.constant 0 : i32
    %c0_i32_1 = arith.constant 0 : i32
    return %arg1, %c0_i32, %c0_i32_0 : i32, i32, i32
  }
  func.func @transform_3(%arg0: i32, %arg1: i32) -> (i32, i32, i32) {
    %c0_i32 = arith.constant 0 : i32
    %c0_i32_0 = arith.constant 0 : i32
    %c0_i32_1 = arith.constant 0 : i32
    return %arg1, %c0_i32, %c0_i32_0 : i32, i32, i32
  }
  func.func @transform_4(%arg0: i32, %arg1: i32) -> (i32, i32, i32) {
    %c0_i32 = arith.constant 0 : i32
    %c0_i32_0 = arith.constant 0 : i32
    %c0_i32_1 = arith.constant 0 : i32
    return %arg1, %c0_i32, %c0_i32_0 : i32, i32, i32
  }
  func.func @transform_5(%arg0: i32, %arg1: i32) -> (i32, i32, i32) {
    %c0_i32 = arith.constant 0 : i32
    %c0_i32_0 = arith.constant 0 : i32
    %c0_i32_1 = arith.constant 0 : i32
    return %arg1, %c0_i32, %c0_i32_0 : i32, i32, i32
  }
  func.func @transform_6(%arg0: i32, %arg1: i32) -> (i32, i32, i32) {
    %c0_i32 = arith.constant 0 : i32
    %c0_i32_0 = arith.constant 0 : i32
    %c0_i32_1 = arith.constant 0 : i32
    return %arg1, %c0_i32, %c0_i32_0 : i32, i32, i32
  }
  func.func @transform_7(%arg0: i32, %arg1: i32) -> (i32, i32, i32) {
    %c0_i32 = arith.constant 0 : i32
    %c0_i32_0 = arith.constant 0 : i32
    %c0_i32_1 = arith.constant 0 : i32
    return %arg1, %c0_i32, %c0_i32_0 : i32, i32, i32
  }
  func.func @transform_8(%arg0: i32, %arg1: i32) -> (i32, i32, i32) {
    %c0_i32 = arith.constant 0 : i32
    %c0_i32_0 = arith.constant 0 : i32
    %c0_i32_1 = arith.constant 0 : i32
    return %arg1, %c0_i32, %c0_i32_0 : i32, i32, i32
  }
  func.func @transform_9(%arg0: i32, %arg1: i32) -> (i32, i32, i32) {
    %c0_i32 = arith.constant 0 : i32
    %c0_i32_0 = arith.constant 0 : i32
    %c0_i32_1 = arith.constant 0 : i32
    return %arg1, %c0_i32, %c0_i32_0 : i32, i32, i32
  }
  func.func @transform_10(%arg0: i32, %arg1: i32) -> (i32, i32, i32) {
    %c0_i32 = arith.constant 0 : i32
    %c0_i32_0 = arith.constant 0 : i32
    %c0_i32_1 = arith.constant 0 : i32
    return %arg1, %c0_i32, %c0_i32_0 : i32, i32, i32
  }
  func.func @transform_11(%arg0: i32, %arg1: i32) -> (i32, i32, i32) {
    %c0_i32 = arith.constant 0 : i32
    %c0_i32_0 = arith.constant 0 : i32
    %c0_i32_1 = arith.constant 0 : i32
    return %arg1, %c0_i32, %c0_i32_0 : i32, i32, i32
  }
  func.func @transform_12(%arg0: i32, %arg1: i32) -> (i32, i32, i32) {
    %c0_i32 = arith.constant 0 : i32
    %c0_i32_0 = arith.constant 0 : i32
    %c0_i32_1 = arith.constant 0 : i32
    return %arg1, %c0_i32, %c0_i32_0 : i32, i32, i32
  }
  func.func @transform_13(%arg0: i32, %arg1: i32) -> (i32, i32, i32) {
    %c0_i32 = arith.constant 0 : i32
    %c0_i32_0 = arith.constant 0 : i32
    %c0_i32_1 = arith.constant 0 : i32
    return %arg0, %c0_i32, %c0_i32_0 : i32, i32, i32
  }
}

</mosaic_0001>

<llo_original>
// kernel: transformer_encoder.1
$region0: #{transformer_encoder.1}
  #allocation0 [shape = 'u32[]', space=smem, size = 0x4, offset = 0x4, fixed_abs, tag = 'smem constant byte address 0x4 - core index']
  #allocation1 [shape = 'u32[144,128]{1,0:T(1,128)}', space=vmem, size = 0x12000, scoped, tag = 'internal scratch']
  #allocation2 [shape = 'f32[32,128]{1,0:T(8,128)}', space=vmem, size = 0x4000, scoped, tag = 'scratch operand']
  %s0 = inlined_call_operand.hbm [shape: f32[2,32,128], index: 0, kind: input, shape index: {}]
  %s1 = inlined_call_operand.hbm [shape: f32[2,32,128], index: 1, kind: input, shape index: {}]
  %s2 = inlined_call_operand.vmem [shape: f32[3,1,128], index: 2, kind: input, shape index: {}]
  %s3 = inlined_call_operand.vmem [shape: f32[3,1,128], index: 3, kind: input, shape index: {}]
  %s4 = inlined_call_operand.hbm [shape: f32[3,128,384], index: 4, kind: input, shape index: {}]
  %s5 = inlined_call_operand.hbm [shape: f32[3,128,128], index: 5, kind: input, shape index: {}]
  %s6 = inlined_call_operand.hbm [shape: f32[3,1,128], index: 6, kind: input, shape index: {}]
  %s7 = inlined_call_operand.vmem [shape: f32[3,1,128], index: 7, kind: input, shape index: {}]
  %s8 = inlined_call_operand.vmem [shape: f32[3,1,128], index: 8, kind: input, shape index: {}]
  %s9 = inlined_call_operand.hbm [shape: f32[3,128,512], index: 9, kind: input, shape index: {}]
  %s10 = inlined_call_operand.hbm [shape: f32[3,1,512], index: 10, kind: input, shape index: {}]
  %s11 = inlined_call_operand.hbm [shape: f32[3,512,128], index: 11, kind: input, shape index: {}]
  %s12 = inlined_call_operand.hbm [shape: f32[3,1,128], index: 12, kind: input, shape index: {}]
  %s13 = inlined_call_operand.hbm [shape: f32[2,32,128], index: 13, kind: output, shape index: {}]
  %s14 = sld [smem:[#allocation0]]
  $region129: #{transformer_encoder.1} parent=0
    _
  %s16 = ssub.s32 1, %s14
  %s17 = scalar_select 0, %s16, %s14
  $region1: #{transformer_encoder.1} parent=0
    #allocation3 [shape = 'u8[32768]{0}', space=vmem, size = 0x8000, scoped, tag = 'input window, operand 0']
    #allocation4 [shape = 's32[2]{0}', space=sflag, size = 0x8, scoped, tag = 'scoped memory for transformer_encoder.1']
    #allocation5 [shape = 's32[2]{0}', space=sflag, size = 0x8, scoped, tag = 'scoped memory for transformer_encoder.1']
    #allocation6 [shape = 'u8[32768]{0}', space=vmem, size = 0x8000, scoped, tag = 'input window, operand 1']
    #allocation7 [shape = 's32[2]{0}', space=sflag, size = 0x8, scoped, tag = 'scoped memory for transformer_encoder.1']
    #allocation8 [shape = 'u8[393216]{0}', space=vmem, size = 0x60000, scoped, tag = 'input window, operand 4']
    #allocation9 [shape = 'u8[131072]{0}', space=vmem, size = 0x20000, scoped, tag = 'input window, operand 5']
    #allocation10 [shape = 's32[2]{0}', space=sflag, size = 0x8, scoped, tag = 'scoped memory for transformer_encoder.1']
    #allocation11 [shape = 'u8[1024]{0}', space=vmem, size = 0x400, scoped, tag = 'input window, operand 6']
    #allocation12 [shape = 'u8[524288]{0}', space=vmem, size = 0x80000, scoped, tag = 'input window, operand 9']
    #allocation13 [shape = 's32[2]{0}', space=sflag, size = 0x8, scoped, tag = 'scoped memory for transformer_encoder.1']
    #allocation14 [shape = 'u8[4096]{0}', space=vmem, size = 0x1000, scoped, tag = 'input window, operand 10']
    #allocation15 [shape = 'u8[524288]{0}', space=vmem, size = 0x80000, scoped, tag = 'input window, operand 11']
    #allocation16 [shape = 's32[2]{0}', space=sflag, size = 0x8, scoped, tag = 'scoped memory for transformer_encoder.1']
    #allocation17 [shape = 'u8[1024]{0}', space=vmem, size = 0x400, scoped, tag = 'input window, operand 12']
    #allocation18 [shape = 'u8[32768]{0}', space=vmem, size = 0x8000, scoped, tag = 'output window, operand 0']
    %18 = vsyncpa [#allocation4], 0
    %s19 = scalar_lea.sflag [#allocation4], 1
    %20 = vsyncpa %s19, 0
    %21 = vsyncpa [#allocation7], 0
    %s22 = scalar_lea.sflag [#allocation7], 1
    %23 = vsyncpa %s22, 0
    %24 = vsyncpa [#allocation10], 0
    %s25 = scalar_lea.sflag [#allocation10], 1
    %26 = vsyncpa %s25, 0
    %27 = vsyncpa [#allocation13], 0
    %s28 = scalar_lea.sflag [#allocation13], 1
    %29 = vsyncpa %s28, 0
    %30 = vsyncpa [#allocation16], 0
    %s31 = scalar_lea.sflag [#allocation16], 1
    %32 = vsyncpa %s31, 0
    %33 = vsyncpa [#allocation5], 0
    %s34 = scalar_lea.sflag [#allocation5], 1
    %35 = vsyncpa %s34, 0
    loop: start=0, step=1, limit=8
    $region2: #{transformer_encoder.1} parent=1 // loop_pre_header
      _
    $region3: #{transformer_encoder.1} parent=1 // loop_header
      %s37 = sphi 0, %s41
      %p38 = scmp.ge.s32.totalorder %s37, 8
      %s44 = sphi 0, %s56
      %s45 = sphi 0, %s52
      %s46 = sphi 0, %s44
      %s47 = sphi 0, %s45
      %s48 = sphi 0, %s46
      %s49 = sphi 0, %s47
      %s59 = sphi 0, %s61
      %s62 = sphi 0, %s59
      %s63 = sphi 0, %s62
      %s79 = sphi 0, %s63
      %s85 = sphi 0, %s87
      %s88 = sphi 0, %s85
      %s89 = sphi 0, %s88
      %s105 = sphi 0, %s89
      %s111 = sphi 0, %s113
      %s114 = sphi 0, %s111
      %s115 = sphi 0, %s114
      %s131 = sphi 0, %s115
      %s137 = sphi 0, %s139
      %s140 = sphi 0, %s137
      %s141 = sphi 0, %s140
      %s157 = sphi 0, %s141
      %s163 = sphi 0, %s165
      %s166 = sphi 0, %s163
      %s167 = sphi 0, %s166
      %s183 = sphi 0, %s167
      %s189 = sphi 0, %s191
      %s192 = sphi 0, %s189
      %s193 = sphi 0, %s192
      %s209 = sphi 0, %s193
      %s215 = sphi 0, %s217
      %s218 = sphi 0, %s215
      %s219 = sphi 0, %s218
      %s235 = sphi 0, %s219
      %s241 = sphi 0, %s243
      %s244 = sphi 0, %s241
      %s245 = sphi 0, %s244
      %s261 = sphi 0, %s245
      %s267 = sphi 0, %s269
      %s270 = sphi 0, %s267
      %s271 = sphi 0, %s270
      %s287 = sphi 0, %s271
      %s293 = sphi 0, %s295
      %s296 = sphi 0, %s293
      %s297 = sphi 0, %s296
      %s313 = sphi 0, %s297
      %s319 = sphi 0, %s321
      %s322 = sphi 0, %s319
      %s323 = sphi 0, %s322
      %s339 = sphi 0, %s323
      %s345 = sphi 0, %s347
      %s348 = sphi 0, %s345
      %s349 = sphi 0, %s348
      %s365 = sphi 0, %s349
      %s371 = sphi 0, %s373
      %s374 = sphi 0, %s371
      %s375 = sphi 0, %s374
      %s391 = sphi 0, %s375
      %s397 = sphi 0, %s399
      %s400 = sphi 0, %s397
      %s401 = sphi 0, %s400
      %s417 = sphi 0, %s401
    $region4: #{transformer_encoder.1} parent=1 // loop_header_branch
      %40 = sbr.rel (%p38) target = $region8
    $region5: #{transformer_encoder.1} parent=1 // loop_body
      %s42 = ssub.s32 %s37, 1
      %s43 = ssub.s32 %s37, 2
      %s50 = sadd.s32 1, %s45
      %p51 = scmp.ge.s32.totalorder %s50, 3
      %s52 = scalar_select %p51, 0, %s50
      %s53 = sadd.s32 1, %s44
      %s54 = scalar_select %p51, %s53, %s44
      %p55 = scmp.ge.s32.totalorder %s54, 2
      %s56 = scalar_select %p55, 0, %s54
      %s57 = ssub.s32 %s44, %s56
      %p58 = scmp.eq.s32.totalorder %s57, 0
      %s60 = sadd.s32 %s59, 1
      %s61 = scalar_select %p58, %s59, %s60
      %p64 = pneg %p58
      %p65 = scmp.eq.s32.totalorder %s37, 5
      %p66 = por %p64, %p65
      %p67 = scmp.ne.s32.totalorder %s59, %s62
      %p68 = scmp.eq.s32.totalorder %s37, 0
      %p69 = por %p67, %p68
      %p70 = scmp.ne.s32.totalorder %s59, %s62
      %p71 = scmp.eq.s32.totalorder %s42, 5
      %p72 = por %p70, %p71
      %p73 = scmp.ne.s32.totalorder %s62, %s63
      %p74 = scmp.eq.s32.totalorder %s42, 0
      %p75 = por %p73, %p74
      %p76 = scmp.ne.s32.totalorder %s62, %s63
      %p77 = scmp.eq.s32.totalorder %s43, 5
      %p78 = por %p76, %p77
      %p80 = scmp.ne.s32.totalorder %s63, %s79
      %p81 = scmp.eq.s32.totalorder %s43, 0
      %p82 = por %p80, %p81
      %s83 = ssub.s32 %s44, %s56
      %p84 = scmp.eq.s32.totalorder %s83, 0
      %s86 = sadd.s32 %s85, 1
      %s87 = scalar_select %p84, %s85, %s86
      %p90 = pneg %p84
      %p91 = scmp.eq.s32.totalorder %s37, 5
      %p92 = por %p90, %p91
      %p93 = scmp.ne.s32.totalorder %s85, %s88
      %p94 = scmp.eq.s32.totalorder %s37, 0
      %p95 = por %p93, %p94
      %p96 = scmp.ne.s32.totalorder %s85, %s88
      %p97 = scmp.eq.s32.totalorder %s42, 5
      %p98 = por %p96, %p97
      %p99 = scmp.ne.s32.totalorder %s88, %s89
      %p100 = scmp.eq.s32.totalorder %s42, 0
      %p101 = por %p99, %p100
      %p102 = scmp.ne.s32.totalorder %s88, %s89
      %p103 = scmp.eq.s32.totalorder %s43, 5
      %p104 = por %p102, %p103
      %p106 = scmp.ne.s32.totalorder %s89, %s105
      %p107 = scmp.eq.s32.totalorder %s43, 0
      %p108 = por %p106, %p107
      %s109 = ssub.s32 %s45, %s52
      %p110 = scmp.eq.s32.totalorder %s109, 0
      %s112 = sadd.s32 %s111, 1
      %s113 = scalar_select %p110, %s111, %s112
      %p116 = pneg %p110
      %p117 = scmp.eq.s32.totalorder %s37, 5
      %p118 = por %p116, %p117
      %p119 = scmp.ne.s32.totalorder %s111, %s114
      %p120 = scmp.eq.s32.totalorder %s37, 0
      %p121 = por %p119, %p120
      %p122 = scmp.ne.s32.totalorder %s111, %s114
      %p123 = scmp.eq.s32.totalorder %s42, 5
      %p124 = por %p122, %p123
      %p125 = scmp.ne.s32.totalorder %s114, %s115
      %p126 = scmp.eq.s32.totalorder %s42, 0
      %p127 = por %p125, %p126
      %p128 = scmp.ne.s32.totalorder %s114, %s115
      %p129 = scmp.eq.s32.totalorder %s43, 5
      %p130 = por %p128, %p129
      %p132 = scmp.ne.s32.totalorder %s115, %s131
      %p133 = scmp.eq.s32.totalorder %s43, 0
      %p134 = por %p132, %p133
      %s135 = ssub.s32 %s45, %s52
      %p136 = scmp.eq.s32.totalorder %s135, 0
      %s138 = sadd.s32 %s137, 1
      %s139 = scalar_select %p136, %s137, %s138
      %p142 = pneg %p136
      %p143 = scmp.eq.s32.totalorder %s37, 5
      %p144 = por %p142, %p143
      %p145 = scmp.ne.s32.totalorder %s137, %s140
      %p146 = scmp.eq.s32.totalorder %s37, 0
      %p147 = por %p145, %p146
      %p148 = scmp.ne.s32.totalorder %s137, %s140
      %p149 = scmp.eq.s32.totalorder %s42, 5
      %p150 = por %p148, %p149
      %p151 = scmp.ne.s32.totalorder %s140, %s141
      %p152 = scmp.eq.s32.totalorder %s42, 0
      %p153 = por %p151, %p152
      %p154 = scmp.ne.s32.totalorder %s140, %s141
      %p155 = scmp.eq.s32.totalorder %s43, 5
      %p156 = por %p154, %p155
      %p158 = scmp.ne.s32.totalorder %s141, %s157
      %p159 = scmp.eq.s32.totalorder %s43, 0
      %p160 = por %p158, %p159
      %s161 = ssub.s32 %s45, %s52
      %p162 = scmp.eq.s32.totalorder %s161, 0
      %s164 = sadd.s32 %s163, 1
      %s165 = scalar_select %p162, %s163, %s164
      %p168 = pneg %p162
      %p169 = scmp.eq.s32.totalorder %s37, 5
      %p170 = por %p168, %p169
      %p171 = scmp.ne.s32.totalorder %s163, %s166
      %p172 = scmp.eq.s32.totalorder %s37, 0
      %p173 = por %p171, %p172
      %p174 = scmp.ne.s32.totalorder %s163, %s166
      %p175 = scmp.eq.s32.totalorder %s42, 5
      %p176 = por %p174, %p175
      %p177 = scmp.ne.s32.totalorder %s166, %s167
      %p178 = scmp.eq.s32.totalorder %s42, 0
      %p179 = por %p177, %p178
      %p180 = scmp.ne.s32.totalorder %s166, %s167
      %p181 = scmp.eq.s32.totalorder %s43, 5
      %p182 = por %p180, %p181
      %p184 = scmp.ne.s32.totalorder %s167, %s183
      %p185 = scmp.eq.s32.totalorder %s43, 0
      %p186 = por %p184, %p185
      %s187 = ssub.s32 %s45, %s52
      %p188 = scmp.eq.s32.totalorder %s187, 0
      %s190 = sadd.s32 %s189, 1
      %s191 = scalar_select %p188, %s189, %s190
      %p194 = pneg %p188
      %p195 = scmp.eq.s32.totalorder %s37, 5
      %p196 = por %p194, %p195
      %p197 = scmp.ne.s32.totalorder %s189, %s192
      %p198 = scmp.eq.s32.totalorder %s37, 0
      %p199 = por %p197, %p198
      %p200 = scmp.ne.s32.totalorder %s189, %s192
      %p201 = scmp.eq.s32.totalorder %s42, 5
      %p202 = por %p200, %p201
      %p203 = scmp.ne.s32.totalorder %s192, %s193
      %p204 = scmp.eq.s32.totalorder %s42, 0
      %p205 = por %p203, %p204
      %p206 = scmp.ne.s32.totalorder %s192, %s193
      %p207 = scmp.eq.s32.totalorder %s43, 5
      %p208 = por %p206, %p207
      %p210 = scmp.ne.s32.totalorder %s193, %s209
      %p211 = scmp.eq.s32.totalorder %s43, 0
      %p212 = por %p210, %p211
      %s213 = ssub.s32 %s45, %s52
      %p214 = scmp.eq.s32.totalorder %s213, 0
      %s216 = sadd.s32 %s215, 1
      %s217 = scalar_select %p214, %s215, %s216
      %p220 = pneg %p214
      %p221 = scmp.eq.s32.totalorder %s37, 5
      %p222 = por %p220, %p221
      %p223 = scmp.ne.s32.totalorder %s215, %s218
      %p224 = scmp.eq.s32.totalorder %s37, 0
      %p225 = por %p223, %p224
      %p226 = scmp.ne.s32.totalorder %s215, %s218
      %p227 = scmp.eq.s32.totalorder %s42, 5
      %p228 = por %p226, %p227
      %p229 = scmp.ne.s32.totalorder %s218, %s219
      %p230 = scmp.eq.s32.totalorder %s42, 0
      %p231 = por %p229, %p230
      %p232 = scmp.ne.s32.totalorder %s218, %s219
      %p233 = scmp.eq.s32.totalorder %s43, 5
      %p234 = por %p232, %p233
      %p236 = scmp.ne.s32.totalorder %s219, %s235
      %p237 = scmp.eq.s32.totalorder %s43, 0
      %p238 = por %p236, %p237
      %s239 = ssub.s32 %s45, %s52
      %p240 = scmp.eq.s32.totalorder %s239, 0
      %s242 = sadd.s32 %s241, 1
      %s243 = scalar_select %p240, %s241, %s242
      %p246 = pneg %p240
      %p247 = scmp.eq.s32.totalorder %s37, 5
      %p248 = por %p246, %p247
      %p249 = scmp.ne.s32.totalorder %s241, %s244
      %p250 = scmp.eq.s32.totalorder %s37, 0
      %p251 = por %p249, %p250
      %p252 = scmp.ne.s32.totalorder %s241, %s244
      %p253 = scmp.eq.s32.totalorder %s42, 5
      %p254 = por %p252, %p253
      %p255 = scmp.ne.s32.totalorder %s244, %s245
      %p256 = scmp.eq.s32.totalorder %s42, 0
      %p257 = por %p255, %p256
      %p258 = scmp.ne.s32.totalorder %s244, %s245
      %p259 = scmp.eq.s32.totalorder %s43, 5
      %p260 = por %p258, %p259
      %p262 = scmp.ne.s32.totalorder %s245, %s261
      %p263 = scmp.eq.s32.totalorder %s43, 0
      %p264 = por %p262, %p263
      %s265 = ssub.s32 %s45, %s52
      %p266 = scmp.eq.s32.totalorder %s265, 0
      %s268 = sadd.s32 %s267, 1
      %s269 = scalar_select %p266, %s267, %s268
      %p272 = pneg %p266
      %p273 = scmp.eq.s32.totalorder %s37, 5
      %p274 = por %p272, %p273
      %p275 = scmp.ne.s32.totalorder %s267, %s270
      %p276 = scmp.eq.s32.totalorder %s37, 0
      %p277 = por %p275, %p276
      %p278 = scmp.ne.s32.totalorder %s267, %s270
      %p279 = scmp.eq.s32.totalorder %s42, 5
      %p280 = por %p278, %p279
      %p281 = scmp.ne.s32.totalorder %s270, %s271
      %p282 = scmp.eq.s32.totalorder %s42, 0
      %p283 = por %p281, %p282
      %p284 = scmp.ne.s32.totalorder %s270, %s271
      %p285 = scmp.eq.s32.totalorder %s43, 5
      %p286 = por %p284, %p285
      %p288 = scmp.ne.s32.totalorder %s271, %s287
      %p289 = scmp.eq.s32.totalorder %s43, 0
      %p290 = por %p288, %p289
      %s291 = ssub.s32 %s45, %s52
      %p292 = scmp.eq.s32.totalorder %s291, 0
      %s294 = sadd.s32 %s293, 1
      %s295 = scalar_select %p292, %s293, %s294
      %p298 = pneg %p292
      %p299 = scmp.eq.s32.totalorder %s37, 5
      %p300 = por %p298, %p299
      %p301 = scmp.ne.s32.totalorder %s293, %s296
      %p302 = scmp.eq.s32.totalorder %s37, 0
      %p303 = por %p301, %p302
      %p304 = scmp.ne.s32.totalorder %s293, %s296
      %p305 = scmp.eq.s32.totalorder %s42, 5
      %p306 = por %p304, %p305
      %p307 = scmp.ne.s32.totalorder %s296, %s297
      %p308 = scmp.eq.s32.totalorder %s42, 0
      %p309 = por %p307, %p308
      %p310 = scmp.ne.s32.totalorder %s296, %s297
      %p311 = scmp.eq.s32.totalorder %s43, 5
      %p312 = por %p310, %p311
      %p314 = scmp.ne.s32.totalorder %s297, %s313
      %p315 = scmp.eq.s32.totalorder %s43, 0
      %p316 = por %p314, %p315
      %s317 = ssub.s32 %s45, %s52
      %p318 = scmp.eq.s32.totalorder %s317, 0
      %s320 = sadd.s32 %s319, 1
      %s321 = scalar_select %p318, %s319, %s320
      %p324 = pneg %p318
      %p325 = scmp.eq.s32.totalorder %s37, 5
      %p326 = por %p324, %p325
      %p327 = scmp.ne.s32.totalorder %s319, %s322
      %p328 = scmp.eq.s32.totalorder %s37, 0
      %p329 = por %p327, %p328
      %p330 = scmp.ne.s32.totalorder %s319, %s322
      %p331 = scmp.eq.s32.totalorder %s42, 5
      %p332 = por %p330, %p331
      %p333 = scmp.ne.s32.totalorder %s322, %s323
      %p334 = scmp.eq.s32.totalorder %s42, 0
      %p335 = por %p333, %p334
      %p336 = scmp.ne.s32.totalorder %s322, %s323
      %p337 = scmp.eq.s32.totalorder %s43, 5
      %p338 = por %p336, %p337
      %p340 = scmp.ne.s32.totalorder %s323, %s339
      %p341 = scmp.eq.s32.totalorder %s43, 0
      %p342 = por %p340, %p341
      %s343 = ssub.s32 %s45, %s52
      %p344 = scmp.eq.s32.totalorder %s343, 0
      %s346 = sadd.s32 %s345, 1
      %s347 = scalar_select %p344, %s345, %s346
      %p350 = pneg %p344
      %p351 = scmp.eq.s32.totalorder %s37, 5
      %p352 = por %p350, %p351
      %p353 = scmp.ne.s32.totalorder %s345, %s348
      %p354 = scmp.eq.s32.totalorder %s37, 0
      %p355 = por %p353, %p354
      %p356 = scmp.ne.s32.totalorder %s345, %s348
      %p357 = scmp.eq.s32.totalorder %s42, 5
      %p358 = por %p356, %p357
      %p359 = scmp.ne.s32.totalorder %s348, %s349
      %p360 = scmp.eq.s32.totalorder %s42, 0
      %p361 = por %p359, %p360
      %p362 = scmp.ne.s32.totalorder %s348, %s349
      %p363 = scmp.eq.s32.totalorder %s43, 5
      %p364 = por %p362, %p363
      %p366 = scmp.ne.s32.totalorder %s349, %s365
      %p367 = scmp.eq.s32.totalorder %s43, 0
      %p368 = por %p366, %p367
      %s369 = ssub.s32 %s45, %s52
      %p370 = scmp.eq.s32.totalorder %s369, 0
      %s372 = sadd.s32 %s371, 1
      %s373 = scalar_select %p370, %s371, %s372
      %p376 = pneg %p370
      %p377 = scmp.eq.s32.totalorder %s37, 5
      %p378 = por %p376, %p377
      %p379 = scmp.ne.s32.totalorder %s371, %s374
      %p380 = scmp.eq.s32.totalorder %s37, 0
      %p381 = por %p379, %p380
      %p382 = scmp.ne.s32.totalorder %s371, %s374
      %p383 = scmp.eq.s32.totalorder %s42, 5
      %p384 = por %p382, %p383
      %p385 = scmp.ne.s32.totalorder %s374, %s375
      %p386 = scmp.eq.s32.totalorder %s42, 0
      %p387 = por %p385, %p386
      %p388 = scmp.ne.s32.totalorder %s374, %s375
      %p389 = scmp.eq.s32.totalorder %s43, 5
      %p390 = por %p388, %p389
      %p392 = scmp.ne.s32.totalorder %s375, %s391
      %p393 = scmp.eq.s32.totalorder %s43, 0
      %p394 = por %p392, %p393
      %s395 = ssub.s32 %s44, %s56
      %p396 = scmp.eq.s32.totalorder %s395, 0
      %s398 = sadd.s32 %s397, 1
      %s399 = scalar_select %p396, %s397, %s398
      %p402 = pneg %p396
      %p403 = scmp.eq.s32.totalorder %s37, 5
      %p404 = por %p402, %p403
      %p405 = scmp.ne.s32.totalorder %s397, %s400
      %p406 = scmp.eq.s32.totalorder %s37, 0
      %p407 = por %p405, %p406
      %p408 = scmp.ne.s32.totalorder %s397, %s400
      %p409 = scmp.eq.s32.totalorder %s42, 5
      %p410 = por %p408, %p409
      %p411 = scmp.ne.s32.totalorder %s400, %s401
      %p412 = scmp.eq.s32.totalorder %s42, 0
      %p413 = por %p411, %p412
      %p414 = scmp.ne.s32.totalorder %s400, %s401
      %p415 = scmp.eq.s32.totalorder %s43, 5
      %p416 = por %p414, %p415
      %p418 = scmp.ne.s32.totalorder %s401, %s417
      %p419 = scmp.eq.s32.totalorder %s43, 0
      %p420 = por %p418, %p419
      %p421 = scmp.le.s32.totalorder 1, %s37
      %p422 = scmp.lt.s32.totalorder %s37, 7
      %p423 = pnand %p421, %p422
      %p424 = pneg %p423
      // Predicated region
      $region9: #{transformer_encoder.1} parent=5 // pred_check
        _
      $region10: #{transformer_encoder.1} parent=5 // pred_check_branch
        %426 = sbr.rel (%p423) target = $region12
      $region11: #{transformer_encoder.1} parent=5 // pred_region
        %s427 = ssub.s32 %s37, 1
      $region12: #{transformer_encoder.1} parent=5 // pred_fallthru
        _
      %p428 = scmp.lt.s32.totalorder %s37, 6
      // Predicated region
      $region13: #{transformer_encoder.1} parent=5 // pred_check
        %p429 = pneg %p428
      $region14: #{transformer_encoder.1} parent=5 // pred_check_branch
        %431 = sbr.rel (%p429) target = $region16
      $region15: #{transformer_encoder.1} parent=5 // pred_region
        // Predicated region
        $region17: #{transformer_encoder.1} parent=15 // pred_check
          %p432 = pneg %p69
        $region18: #{transformer_encoder.1} parent=15 // pred_check_branch
          %434 = sbr.rel (%p432) target = $region20
        $region19: #{transformer_encoder.1} parent=15 // pred_region
          %s435 = sand.u32 %s59, 1
          %s436 = scalar_lea.sflag [#allocation4], %s435
          %s437 = sand.u32 %s59, 1
          %s438 = smul.addr %s437, 32
          %s439 = scalar_lea.vmem [#allocation3], %s438
          %s441 = ssub.s32 512, 512
          %442 = vsyncadd %s436, %s441
          %s443 = smul.addr %s44, 4
          %s444 = smul.addr %s443, 128
          %s445 = scalar_lea.hbm %s0, %s444
          %s446 = sshll.u32 %s439, 4
          %s447 = int_to_ptr.vmem [resolvable:$true] %s446
          %452 = dma.hbm_to_vmem [thread:$0]  %s445, 512, %s447, %s436, 128, 128, 8
        $region20: #{transformer_encoder.1} parent=15 // pred_fallthru
          _
        // Predicated region
        $region21: #{transformer_encoder.1} parent=15 // pred_check
          %p453 = pneg %p95
        $region22: #{transformer_encoder.1} parent=15 // pred_check_branch
          %455 = sbr.rel (%p453) target = $region24
        $region23: #{transformer_encoder.1} parent=15 // pred_region
          %s456 = sand.u32 %s37, 1
          %s457 = scalar_lea.sflag [#allocation7], %s456
          %s458 = sand.u32 %s85, 1
          %s459 = smul.addr %s458, 32
          %s460 = scalar_lea.vmem [#allocation6], %s459
          %s462 = ssub.s32 512, 512
          %463 = vsyncadd %s457, %s462
          %s464 = smul.addr %s44, 4
          %s465 = smul.addr %s464, 128
          %s466 = scalar_lea.hbm %s1, %s465
          %s467 = sshll.u32 %s460, 4
          %s468 = int_to_ptr.vmem [resolvable:$true] %s467
          %473 = dma.hbm_to_vmem [thread:$0]  %s466, 512, %s468, %s457, 128, 128, 8
        $region24: #{transformer_encoder.1} parent=15 // pred_fallthru
          _
        // Predicated region
        $region25: #{transformer_encoder.1} parent=15 // pred_check
          %p474 = pneg %p121
        $region26: #{transformer_encoder.1} parent=15 // pred_check_branch
          %476 = sbr.rel (%p474) target = $region28
        $region27: #{transformer_encoder.1} parent=15 // pred_region
          %p477 = scmp.lt.s32.totalorder %s45, 2
          %s478 = scalar_select %p477, %s45, 2
          %s479 = scalar_lea.vmem %s2, %s478
        $region28: #{transformer_encoder.1} parent=15 // pred_fallthru
          _
        // Predicated region
        $region29: #{transformer_encoder.1} parent=15 // pred_check
          %p480 = pneg %p147
        $region30: #{transformer_encoder.1} parent=15 // pred_check_branch
          %482 = sbr.rel (%p480) target = $region32
        $region31: #{transformer_encoder.1} parent=15 // pred_region
          %p483 = scmp.lt.s32.totalorder %s45, 2
          %s484 = scalar_select %p483, %s45, 2
          %s485 = scalar_lea.vmem %s3, %s484
        $region32: #{transformer_encoder.1} parent=15 // pred_fallthru
          _
        // Predicated region
        $region33: #{transformer_encoder.1} parent=15 // pred_check
          %p486 = pneg %p173
        $region34: #{transformer_encoder.1} parent=15 // pred_check_branch
          %488 = sbr.rel (%p486) target = $region36
        $region35: #{transformer_encoder.1} parent=15 // pred_region
          %s489 = sand.u32 %s37, 1
          %s490 = scalar_lea.sflag [#allocation7], %s489
          %s491 = sand.u32 %s163, 1
          %s492 = smul.addr %s491, 384
          %s493 = scalar_lea.vmem [#allocation8], %s492
          %s495 = ssub.s32 6144, 6144
          %496 = vsyncadd %s490, %s495
          %s497 = smul.addr %s45, 48
          %s498 = smul.addr %s497, 128
          %s499 = scalar_lea.hbm %s4, %s498
          %s500 = sshll.u32 %s493, 4
          %s501 = int_to_ptr.vmem [resolvable:$true] %s500
          %506 = dma.hbm_to_vmem [thread:$0]  %s499, 6144, %s501, %s490, 384, 384, 24
        $region36: #{transformer_encoder.1} parent=15 // pred_fallthru
          _
        // Predicated region
        $region37: #{transformer_encoder.1} parent=15 // pred_check
          %p507 = pneg %p199
        $region38: #{transformer_encoder.1} parent=15 // pred_check_branch
          %509 = sbr.rel (%p507) target = $region40
        $region39: #{transformer_encoder.1} parent=15 // pred_region
          %s510 = sand.u32 %s37, 1
          %s511 = scalar_lea.sflag [#allocation10], %s510
          %s512 = sand.u32 %s189, 1
          %s513 = smul.addr %s512, 128
          %s514 = scalar_lea.vmem [#allocation9], %s513
          %s516 = ssub.s32 2048, 2048
          %517 = vsyncadd %s511, %s516
          %s518 = smul.addr %s45, 16
          %s519 = smul.addr %s518, 128
          %s520 = scalar_lea.hbm %s5, %s519
          %s521 = sshll.u32 %s514, 4
          %s522 = int_to_ptr.vmem [resolvable:$true] %s521
          %527 = dma.hbm_to_vmem [thread:$0]  %s520, 2048, %s522, %s511, 128, 128, 8
        $region40: #{transformer_encoder.1} parent=15 // pred_fallthru
          _
        // Predicated region
        $region41: #{transformer_encoder.1} parent=15 // pred_check
          %p528 = pneg %p225
        $region42: #{transformer_encoder.1} parent=15 // pred_check_branch
          %530 = sbr.rel (%p528) target = $region44
        $region43: #{transformer_encoder.1} parent=15 // pred_region
          %s531 = sand.u32 %s37, 1
          %s532 = scalar_lea.sflag [#allocation10], %s531
          %s533 = sand.u32 %s215, 1
          %s534 = scalar_lea.vmem [#allocation11], %s533
          %s536 = ssub.s32 16, 16
          %537 = vsyncadd %s532, %s536
          %s538 = smul.addr %s45, 16
          %s539 = scalar_lea.hbm %s6, %s538
          %s541 = sshll.u32 %s534, 4
          %s542 = int_to_ptr.vmem [resolvable:$true] %s541
          %544 = dma.hbm_to_vmem [thread:$0]  %s539, 16, %s542, %s532
        $region44: #{transformer_encoder.1} parent=15 // pred_fallthru
          _
        // Predicated region
        $region45: #{transformer_encoder.1} parent=15 // pred_check
          %p545 = pneg %p251
        $region46: #{transformer_encoder.1} parent=15 // pred_check_branch
          %547 = sbr.rel (%p545) target = $region48
        $region47: #{transformer_encoder.1} parent=15 // pred_region
          %p548 = scmp.lt.s32.totalorder %s45, 2
          %s549 = scalar_select %p548, %s45, 2
          %s550 = scalar_lea.vmem %s7, %s549
        $region48: #{transformer_encoder.1} parent=15 // pred_fallthru
          _
        // Predicated region
        $region49: #{transformer_encoder.1} parent=15 // pred_check
          %p551 = pneg %p277
        $region50: #{transformer_encoder.1} parent=15 // pred_check_branch
          %553 = sbr.rel (%p551) target = $region52
        $region51: #{transformer_encoder.1} parent=15 // pred_region
          %p554 = scmp.lt.s32.totalorder %s45, 2
          %s555 = scalar_select %p554, %s45, 2
          %s556 = scalar_lea.vmem %s8, %s555
        $region52: #{transformer_encoder.1} parent=15 // pred_fallthru
          _
        // Predicated region
        $region53: #{transformer_encoder.1} parent=15 // pred_check
          %p557 = pneg %p303
        $region54: #{transformer_encoder.1} parent=15 // pred_check_branch
          %559 = sbr.rel (%p557) target = $region56
        $region55: #{transformer_encoder.1} parent=15 // pred_region
          %s560 = sand.u32 %s37, 1
          %s561 = scalar_lea.sflag [#allocation13], %s560
          %s562 = sand.u32 %s293, 1
          %s563 = smul.addr %s562, 512
          %s564 = scalar_lea.vmem [#allocation12], %s563
          %s566 = ssub.s32 8192, 8192
          %567 = vsyncadd %s561, %s566
          %s568 = smul.addr %s45, 64
          %s569 = smul.addr %s568, 128
          %s570 = scalar_lea.hbm %s9, %s569
          %s571 = sshll.u32 %s564, 4
          %s572 = int_to_ptr.vmem [resolvable:$true] %s571
          %577 = dma.hbm_to_vmem [thread:$0]  %s570, 8192, %s572, %s561, 512, 512, 32
        $region56: #{transformer_encoder.1} parent=15 // pred_fallthru
          _
        // Predicated region
        $region57: #{transformer_encoder.1} parent=15 // pred_check
          %p578 = pneg %p329
        $region58: #{transformer_encoder.1} parent=15 // pred_check_branch
          %580 = sbr.rel (%p578) target = $region60
        $region59: #{transformer_encoder.1} parent=15 // pred_region
          %s581 = sand.u32 %s37, 1
          %s582 = scalar_lea.sflag [#allocation13], %s581
          %s583 = sand.u32 %s319, 1
          %s584 = smul.addr %s583, 4
          %s585 = scalar_lea.vmem [#allocation14], %s584
          %s587 = ssub.s32 64, 64
          %588 = vsyncadd %s582, %s587
          %s589 = smul.addr %s45, 4
          %s590 = smul.addr %s589, 16
          %s591 = scalar_lea.hbm %s10, %s590
          %s593 = sshll.u32 %s585, 4
          %s594 = int_to_ptr.vmem [resolvable:$true] %s593
          %596 = dma.hbm_to_vmem [thread:$0]  %s591, 64, %s594, %s582
        $region60: #{transformer_encoder.1} parent=15 // pred_fallthru
          _
        // Predicated region
        $region61: #{transformer_encoder.1} parent=15 // pred_check
          %p597 = pneg %p355
        $region62: #{transformer_encoder.1} parent=15 // pred_check_branch
          %599 = sbr.rel (%p597) target = $region64
        $region63: #{transformer_encoder.1} parent=15 // pred_region
          %s600 = sand.u32 %s37, 1
          %s601 = scalar_lea.sflag [#allocation16], %s600
          %s602 = sand.u32 %s345, 1
          %s603 = smul.addr %s602, 512
          %s604 = scalar_lea.vmem [#allocation15], %s603
          %s606 = ssub.s32 8192, 8192
          %607 = vsyncadd %s601, %s606
          %s608 = smul.addr %s45, 64
          %s609 = smul.addr %s608, 128
          %s610 = scalar_lea.hbm %s11, %s609
          %s611 = sshll.u32 %s604, 4
          %s612 = int_to_ptr.vmem [resolvable:$true] %s611
          %617 = dma.hbm_to_vmem [thread:$0]  %s610, 8192, %s612, %s601, 128, 128, 8
        $region64: #{transformer_encoder.1} parent=15 // pred_fallthru
          _
        // Predicated region
        $region65: #{transformer_encoder.1} parent=15 // pred_check
          %p618 = pneg %p381
        $region66: #{transformer_encoder.1} parent=15 // pred_check_branch
          %620 = sbr.rel (%p618) target = $region68
        $region67: #{transformer_encoder.1} parent=15 // pred_region
          %s621 = sand.u32 %s37, 1
          %s622 = scalar_lea.sflag [#allocation16], %s621
          %s623 = sand.u32 %s371, 1
          %s624 = scalar_lea.vmem [#allocation17], %s623
          %s626 = ssub.s32 16, 16
          %627 = vsyncadd %s622, %s626
          %s628 = smul.addr %s45, 16
          %s629 = scalar_lea.hbm %s12, %s628
          %s631 = sshll.u32 %s624, 4
          %s632 = int_to_ptr.vmem [resolvable:$true] %s631
          %634 = dma.hbm_to_vmem [thread:$0]  %s629, 16, %s632, %s622
        $region68: #{transformer_encoder.1} parent=15 // pred_fallthru
          _
      $region16: #{transformer_encoder.1} parent=5 // pred_fallthru
        _
      %p635 = scmp.le.s32.totalorder 1, %s37
      %p636 = scmp.lt.s32.totalorder %s37, 7
      %p637 = pnand %p635, %p636
      %p638 = pneg %p637
      // Predicated region
      $region69: #{transformer_encoder.1} parent=5 // pred_check
        _
      $region70: #{transformer_encoder.1} parent=5 // pred_check_branch
        %640 = sbr.rel (%p637) target = $region72
      $region71: #{transformer_encoder.1} parent=5 // pred_region
        %s641 = ssub.s32 %s37, 1
        %s642 = sand.u32 %s62, 1
        %s643 = scalar_lea.sflag [#allocation4], %s642
        %s644 = sand.u32 %s62, 1
        %s645 = smul.addr %s644, 32
        %s646 = scalar_lea.vmem [#allocation3], %s645
        // Predicated region
        $region73: #{transformer_encoder.1} parent=71 // pred_check
          %p647 = pneg %p75
        $region74: #{transformer_encoder.1} parent=71 // pred_check_branch
          %649 = sbr.rel (%p647) target = $region76
        $region75: #{transformer_encoder.1} parent=71 // pred_region
          %650 = dma.done %s643, 512
        $region76: #{transformer_encoder.1} parent=71 // pred_fallthru
          _
        %s651 = sand.u32 %s42, 1
        %s652 = scalar_lea.sflag [#allocation7], %s651
        %s653 = sand.u32 %s88, 1
        %s654 = smul.addr %s653, 32
        %s655 = scalar_lea.vmem [#allocation6], %s654
        // Predicated region
        $region77: #{transformer_encoder.1} parent=71 // pred_check
          %p656 = pneg %p101
        $region78: #{transformer_encoder.1} parent=71 // pred_check_branch
          %658 = sbr.rel (%p656) target = $region80
        $region79: #{transformer_encoder.1} parent=71 // pred_region
          %659 = dma.done %s652, 512
        $region80: #{transformer_encoder.1} parent=71 // pred_fallthru
          _
        %s660 = sand.u32 %s42, 1
        %s661 = scalar_lea.sflag [#allocation7], %s660
        %s662 = sand.u32 %s166, 1
        %s663 = smul.addr %s662, 384
        %s664 = scalar_lea.vmem [#allocation8], %s663
        // Predicated region
        $region81: #{transformer_encoder.1} parent=71 // pred_check
          %p665 = pneg %p179
        $region82: #{transformer_encoder.1} parent=71 // pred_check_branch
          %667 = sbr.rel (%p665) target = $region84
        $region83: #{transformer_encoder.1} parent=71 // pred_region
          %668 = dma.done %s661, 6144
        $region84: #{transformer_encoder.1} parent=71 // pred_fallthru
          _
        %s669 = sand.u32 %s42, 1
        %s670 = scalar_lea.sflag [#allocation10], %s669
        %s671 = sand.u32 %s192, 1
        %s672 = smul.addr %s671, 128
        %s673 = scalar_lea.vmem [#allocation9], %s672
        // Predicated region
        $region85: #{transformer_encoder.1} parent=71 // pred_check
          %p674 = pneg %p205
        $region86: #{transformer_encoder.1} parent=71 // pred_check_branch
          %676 = sbr.rel (%p674) target = $region88
        $region87: #{transformer_encoder.1} parent=71 // pred_region
          %677 = dma.done %s670, 2048
        $region88: #{transformer_encoder.1} parent=71 // pred_fallthru
          _
        %s678 = sand.u32 %s42, 1
        %s679 = scalar_lea.sflag [#allocation10], %s678
        %s680 = sand.u32 %s218, 1
        %s681 = scalar_lea.vmem [#allocation11], %s680
        // Predicated region
        $region89: #{transformer_encoder.1} parent=71 // pred_check
          %p682 = pneg %p231
        $region90: #{transformer_encoder.1} parent=71 // pred_check_branch
          %684 = sbr.rel (%p682) target = $region92
        $region91: #{transformer_encoder.1} parent=71 // pred_region
          %685 = dma.done %s679, 16
        $region92: #{transformer_encoder.1} parent=71 // pred_fallthru
          _
        %s686 = sand.u32 %s42, 1
        %s687 = scalar_lea.sflag [#allocation13], %s686
        %s688 = sand.u32 %s296, 1
        %s689 = smul.addr %s688, 512
        %s690 = scalar_lea.vmem [#allocation12], %s689
        // Predicated region
        $region93: #{transformer_encoder.1} parent=71 // pred_check
          %p691 = pneg %p309
        $region94: #{transformer_encoder.1} parent=71 // pred_check_branch
          %693 = sbr.rel (%p691) target = $region96
        $region95: #{transformer_encoder.1} parent=71 // pred_region
          %694 = dma.done %s687, 8192
        $region96: #{transformer_encoder.1} parent=71 // pred_fallthru
          _
        %s695 = sand.u32 %s42, 1
        %s696 = scalar_lea.sflag [#allocation13], %s695
        %s697 = sand.u32 %s322, 1
        %s698 = smul.addr %s697, 4
        %s699 = scalar_lea.vmem [#allocation14], %s698
        // Predicated region
        $region97: #{transformer_encoder.1} parent=71 // pred_check
          %p700 = pneg %p335
        $region98: #{transformer_encoder.1} parent=71 // pred_check_branch
          %702 = sbr.rel (%p700) target = $region100
        $region99: #{transformer_encoder.1} parent=71 // pred_region
          %703 = dma.done %s696, 64
        $region100: #{transformer_encoder.1} parent=71 // pred_fallthru
          _
        %s704 = sand.u32 %s42, 1
        %s705 = scalar_lea.sflag [#allocation16], %s704
        %s706 = sand.u32 %s348, 1
        %s707 = smul.addr %s706, 512
        %s708 = scalar_lea.vmem [#allocation15], %s707
        // Predicated region
        $region101: #{transformer_encoder.1} parent=71 // pred_check
          %p709 = pneg %p361
        $region102: #{transformer_encoder.1} parent=71 // pred_check_branch
          %711 = sbr.rel (%p709) target = $region104
        $region103: #{transformer_encoder.1} parent=71 // pred_region
          %712 = dma.done %s705, 8192
        $region104: #{transformer_encoder.1} parent=71 // pred_fallthru
          _
        %s713 = sand.u32 %s42, 1
        %s714 = scalar_lea.sflag [#allocation16], %s713
        %s715 = sand.u32 %s374, 1
        %s716 = scalar_lea.vmem [#allocation17], %s715
        // Predicated region
        $region105: #{transformer_encoder.1} parent=71 // pred_check
          %p717 = pneg %p387
        $region106: #{transformer_encoder.1} parent=71 // pred_check_branch
          %719 = sbr.rel (%p717) target = $region108
        $region107: #{transformer_encoder.1} parent=71 // pred_region
          %720 = dma.done %s714, 16
        $region108: #{transformer_encoder.1} parent=71 // pred_fallthru
          _
        %s721 = sand.u32 %s62, 1
        %s722 = scalar_lea.sflag [#allocation4], %s721
        %s723 = sand.u32 %s62, 1
        %s724 = smul.addr %s723, 32
        %s725 = scalar_lea.vmem [#allocation3], %s724
        %p726 = pneg %p75
        %p727 = pneg %p72
        %s728 = sand.u32 %s42, 1
        %s729 = scalar_lea.sflag [#allocation7], %s728
        %s730 = sand.u32 %s88, 1
        %s731 = smul.addr %s730, 32
        %s732 = scalar_lea.vmem [#allocation6], %s731
        %p733 = pneg %p101
        %p734 = pneg %p98
        %p735 = scmp.lt.s32.totalorder %s47, 2
        %s736 = scalar_select %p735, %s47, 2
        %s737 = scalar_lea.vmem %s2, %s736
        %p738 = pneg %p127
        %p739 = pneg %p124
        %p740 = scmp.lt.s32.totalorder %s47, 2
        %s741 = scalar_select %p740, %s47, 2
        %s742 = scalar_lea.vmem %s3, %s741
        %p743 = pneg %p153
        %p744 = pneg %p150
        %s745 = sand.u32 %s42, 1
        %s746 = scalar_lea.sflag [#allocation7], %s745
        %s747 = sand.u32 %s166, 1
        %s748 = smul.addr %s747, 384
        %s749 = scalar_lea.vmem [#allocation8], %s748
        %p750 = pneg %p179
        %p751 = pneg %p176
        %s752 = sand.u32 %s42, 1
        %s753 = scalar_lea.sflag [#allocation10], %s752
        %s754 = sand.u32 %s192, 1
        %s755 = smul.addr %s754, 128
        %s756 = scalar_lea.vmem [#allocation9], %s755
        %p757 = pneg %p205
        %p758 = pneg %p202
        %s759 = sand.u32 %s42, 1
        %s760 = scalar_lea.sflag [#allocation10], %s759
        %s761 = sand.u32 %s218, 1
        %s762 = scalar_lea.vmem [#allocation11], %s761
        %p763 = pneg %p231
        %p764 = pneg %p228
        %p765 = scmp.lt.s32.totalorder %s47, 2
        %s766 = scalar_select %p765, %s47, 2
        %s767 = scalar_lea.vmem %s7, %s766
        %p768 = pneg %p257
        %p769 = pneg %p254
        %p770 = scmp.lt.s32.totalorder %s47, 2
        %s771 = scalar_select %p770, %s47, 2
        %s772 = scalar_lea.vmem %s8, %s771
        %p773 = pneg %p283
        %p774 = pneg %p280
        %s775 = sand.u32 %s42, 1
        %s776 = scalar_lea.sflag [#allocation13], %s775
        %s777 = sand.u32 %s296, 1
        %s778 = smul.addr %s777, 512
        %s779 = scalar_lea.vmem [#allocation12], %s778
        %p780 = pneg %p309
        %p781 = pneg %p306
        %s782 = sand.u32 %s42, 1
        %s783 = scalar_lea.sflag [#allocation13], %s782
        %s784 = sand.u32 %s322, 1
        %s785 = smul.addr %s784, 4
        %s786 = scalar_lea.vmem [#allocation14], %s785
        %p787 = pneg %p335
        %p788 = pneg %p332
        %s789 = sand.u32 %s42, 1
        %s790 = scalar_lea.sflag [#allocation16], %s789
        %s791 = sand.u32 %s348, 1
        %s792 = smul.addr %s791, 512
        %s793 = scalar_lea.vmem [#allocation15], %s792
        %p794 = pneg %p361
        %p795 = pneg %p358
        %s796 = sand.u32 %s42, 1
        %s797 = scalar_lea.sflag [#allocation16], %s796
        %s798 = sand.u32 %s374, 1
        %s799 = scalar_lea.vmem [#allocation17], %s798
        %p800 = pneg %p387
        %p801 = pneg %p384
        %p802 = pneg %p413
        %p803 = pneg %p410
        %s804 = sand.u32 %s400, 1
        %s805 = scalar_lea.sflag [#allocation5], %s804
        %s806 = sand.u32 %s400, 1
        %s807 = smul.addr %s806, 32
        %s808 = scalar_lea.vmem [#allocation18], %s807
        %p809 = scmp.lt.s32.totalorder %s47, 2
        %s810 = scalar_select %p809, %s47, 2
        %s811 = scalar_lea.vmem %s2, %s810
        %p812 = scmp.lt.s32.totalorder %s47, 2
        %s813 = scalar_select %p812, %s47, 2
        %s814 = scalar_lea.vmem %s3, %s813
        %p815 = scmp.lt.s32.totalorder %s47, 2
        %s816 = scalar_select %p815, %s47, 2
        %s817 = scalar_lea.vmem %s7, %s816
        %p818 = scmp.lt.s32.totalorder %s47, 2
        %s819 = scalar_select %p818, %s47, 2
        %s820 = scalar_lea.vmem %s8, %s819
        %p821 = scmp.eq.s32.totalorder %s47, 0
        // Predicated region
        $region109: #{transformer_encoder.1} parent=71 // pred_check
          %p822 = pneg %p821
        $region110: #{transformer_encoder.1} parent=71 // pred_check_branch
          %824 = sbr.rel (%p822) target = $region112
        $region111: #{transformer_encoder.1} parent=71 // pred_region
          %v825 = vld [vmem:[%s646] sm:$0xff]
          %v826 = vld [vmem:[%s646 + $0x8] sm:$0xff]
          %v827 = vld [vmem:[%s646 + $0x10] sm:$0xff]
          %v828 = vld [vmem:[%s646 + $0x18] sm:$0xff]
          %829 = vst [vmem:[#allocation2] sm:$0xff] %v825
          %830 = vst [vmem:[#allocation2 + $0x8] sm:$0xff] %v826
          %831 = vst [vmem:[#allocation2 + $0x10] sm:$0xff] %v827
          %832 = vst [vmem:[#allocation2 + $0x18] sm:$0xff] %v828
        $region112: #{transformer_encoder.1} parent=71 // pred_fallthru
          _
        %v833 = vld [vmem:[#allocation2] sm:$0xff]
        %v834 = vld [vmem:[#allocation2 + $0x8] sm:$0xff]
        %v835 = vld [vmem:[#allocation2 + $0x10] sm:$0xff]
        %v836 = vld [vmem:[#allocation2 + $0x18] sm:$0xff]
        %v837 = vld [vmem:[%s655] sm:$0xff]
        %v838 = vld [vmem:[%s655 + $0x8] sm:$0xff]
        %v839 = vld [vmem:[%s655 + $0x10] sm:$0xff]
        %v840 = vld [vmem:[%s655 + $0x18] sm:$0xff]
        %v841 = vadd.f32 %v833, %v837
        %v842 = vadd.f32 %v834, %v838
        %v843 = vadd.f32 %v835, %v839
        %v844 = vadd.f32 %v836, %v840
        %v845 = vld [vmem:[%s811] sm:$0x1]
        %v846 = vld [vmem:[%s814] sm:$0x1]
        %847 = vadd.xlane.f32.xlu0 %v841
        %v848 = vpop.xlane.xlu0 %847
        %849 = vadd.xlane.f32.xlu0 %v842
        %v850 = vpop.xlane.xlu0 %849
        %851 = vadd.xlane.f32.xlu0 %v843
        %v852 = vpop.xlane.xlu0 %851
        %853 = vadd.xlane.f32.xlu0 %v844
        %v854 = vpop.xlane.xlu0 %853
        %v855 = vrcp.pop 128.0
        %v856 = vmul.f32 %v848, %v855
        %v857 = vmul.f32 %v850, %v855
        %v858 = vmul.f32 %v852, %v855
        %v859 = vmul.f32 %v854, %v855
        %v860 = vsub.f32 %v841, %v856
        %v861 = vsub.f32 %v842, %v857
        %v862 = vsub.f32 %v843, %v858
        %v863 = vsub.f32 %v844, %v859
        %v864 = vmul.f32 %v860, %v860
        %v865 = vmul.f32 %v861, %v861
        %v866 = vmul.f32 %v862, %v862
        %v867 = vmul.f32 %v863, %v863
        %868 = vadd.xlane.f32.xlu0 %v864
        %v869 = vpop.xlane.xlu0 %868
        %870 = vadd.xlane.f32.xlu0 %v865
        %v871 = vpop.xlane.xlu0 %870
        %872 = vadd.xlane.f32.xlu0 %v866
        %v873 = vpop.xlane.xlu0 %872
        %874 = vadd.xlane.f32.xlu0 %v867
        %v875 = vpop.xlane.xlu0 %874
        %v876 = vmul.f32 %v869, %v855
        %v877 = vmul.f32 %v871, %v855
        %v878 = vmul.f32 %v873, %v855
        %v879 = vmul.f32 %v875, %v855
        %v880 = vadd.f32 %v876, 1e-05
        %v881 = vadd.f32 %v877, 1e-05
        %v882 = vadd.f32 %v878, 1e-05
        %v883 = vadd.f32 %v879, 1e-05
        %v884 = vrsqrt.pop %v880
        %v885 = vrsqrt.pop %v881
        %v886 = vrsqrt.pop %v882
        %v887 = vrsqrt.pop %v883
        %v888 = vmul.f32 %v860, %v884
        %v889 = vmul.f32 %v861, %v885
        %v890 = vmul.f32 %v862, %v886
        %v891 = vmul.f32 %v863, %v887
        %v893 = vlaneseq
        %v894 = vshrl.u32 %v893, 7
        %v895 = vsub.s32 0, %v894
        %v896 = vrot.slane %v845, %v895
        %v898 = vmul.f32 %v888, %v896
        %v899 = vmul.f32 %v889, %v896
        %v900 = vmul.f32 %v890, %v896
        %v901 = vmul.f32 %v891, %v896
        %v903 = vlaneseq
        %v904 = vshrl.u32 %v903, 7
        %v905 = vsub.s32 0, %v904
        %v906 = vrot.slane %v846, %v905
        %v908 = vadd.f32 %v898, %v906
        %v909 = vadd.f32 %v899, %v906
        %v910 = vadd.f32 %v900, %v906
        %v911 = vadd.f32 %v901, %v906
        %v912 = vld [vmem:[%s664] sm:$0xff]
        %v913 = vld [vmem:[%s664 + $0x8] sm:$0xff]
        %v914 = vld [vmem:[%s664 + $0x10] sm:$0xff]
        %v915 = vld [vmem:[%s664 + $0x18] sm:$0xff]
        %v916 = vld [vmem:[%s664 + $0x20] sm:$0xff]
        %v917 = vld [vmem:[%s664 + $0x28] sm:$0xff]
        %v918 = vld [vmem:[%s664 + $0x30] sm:$0xff]
        %v919 = vld [vmem:[%s664 + $0x38] sm:$0xff]
        %v920 = vld [vmem:[%s664 + $0x40] sm:$0xff]
        %v921 = vld [vmem:[%s664 + $0x48] sm:$0xff]
        %v922 = vld [vmem:[%s664 + $0x50] sm:$0xff]
        %v923 = vld [vmem:[%s664 + $0x58] sm:$0xff]
        %v924 = vld [vmem:[%s664 + $0x60] sm:$0xff]
        %v925 = vld [vmem:[%s664 + $0x68] sm:$0xff]
        %v926 = vld [vmem:[%s664 + $0x70] sm:$0xff]
        %v927 = vld [vmem:[%s664 + $0x78] sm:$0xff]
        %v928 = vld [vmem:[%s664 + $0x80] sm:$0xff]
        %v929 = vld [vmem:[%s664 + $0x88] sm:$0xff]
        %v930 = vld [vmem:[%s664 + $0x90] sm:$0xff]
        %v931 = vld [vmem:[%s664 + $0x98] sm:$0xff]
        %v932 = vld [vmem:[%s664 + $0xa0] sm:$0xff]
        %v933 = vld [vmem:[%s664 + $0xa8] sm:$0xff]
        %v934 = vld [vmem:[%s664 + $0xb0] sm:$0xff]
        %v935 = vld [vmem:[%s664 + $0xb8] sm:$0xff]
        %v936 = vld [vmem:[%s664 + $0xc0] sm:$0xff]
        %v937 = vld [vmem:[%s664 + $0xc8] sm:$0xff]
        %v938 = vld [vmem:[%s664 + $0xd0] sm:$0xff]
        %v939 = vld [vmem:[%s664 + $0xd8] sm:$0xff]
        %v940 = vld [vmem:[%s664 + $0xe0] sm:$0xff]
        %v941 = vld [vmem:[%s664 + $0xe8] sm:$0xff]
        %v942 = vld [vmem:[%s664 + $0xf0] sm:$0xff]
        %v943 = vld [vmem:[%s664 + $0xf8] sm:$0xff]
        %v944 = vld [vmem:[%s664 + $0x100] sm:$0xff]
        %v945 = vld [vmem:[%s664 + $0x108] sm:$0xff]
        %v946 = vld [vmem:[%s664 + $0x110] sm:$0xff]
        %v947 = vld [vmem:[%s664 + $0x118] sm:$0xff]
        %v948 = vld [vmem:[%s664 + $0x120] sm:$0xff]
        %v949 = vld [vmem:[%s664 + $0x128] sm:$0xff]
        %v950 = vld [vmem:[%s664 + $0x130] sm:$0xff]
        %v951 = vld [vmem:[%s664 + $0x138] sm:$0xff]
        %v952 = vld [vmem:[%s664 + $0x140] sm:$0xff]
        %v953 = vld [vmem:[%s664 + $0x148] sm:$0xff]
        %v954 = vld [vmem:[%s664 + $0x150] sm:$0xff]
        %v955 = vld [vmem:[%s664 + $0x158] sm:$0xff]
        %v956 = vld [vmem:[%s664 + $0x160] sm:$0xff]
        %v957 = vld [vmem:[%s664 + $0x168] sm:$0xff]
        %v958 = vld [vmem:[%s664 + $0x170] sm:$0xff]
        %v959 = vld [vmem:[%s664 + $0x178] sm:$0xff]
        %960 = vmatprep.subr.mxu0 %v958
        %961 = vmatpush1.msra.mxu0 %v957
        %962 = vmatprep.subr.mxu0 %v955
        %963 = vmatpush1.msra.mxu0 %v954
        %964 = vmatprep.subr.mxu0 %v952
        %965 = vmatpush1.msra.mxu0 %v951
        %966 = vmatprep.subr.mxu0 %v949
        %967 = vmatpush1.msra.mxu0 %v948
        %968 = vmatprep.subr.mxu0 %v946
        %969 = vmatpush1.msra.mxu0 %v945
        %970 = vmatprep.subr.mxu0 %v943
        %971 = vmatpush1.msra.mxu0 %v942
        %972 = vmatprep.subr.mxu0 %v940
        %973 = vmatpush1.msra.mxu0 %v939
        %974 = vmatprep.subr.mxu0 %v937
        %975 = vmatpush1.msra.mxu0 %v936
        %976 = vmatprep.subr.mxu0 %v934
        %977 = vmatpush1.msra.mxu0 %v933
        %978 = vmatprep.subr.mxu0 %v931
        %979 = vmatpush1.msra.mxu0 %v930
        %980 = vmatprep.subr.mxu0 %v928
        %981 = vmatpush1.msra.mxu0 %v927
        %982 = vmatprep.subr.mxu0 %v925
        %983 = vmatpush1.msra.mxu0 %v924
        %984 = vmatprep.subr.mxu0 %v922
        %985 = vmatpush1.msra.mxu0 %v921
        %986 = vmatprep.subr.mxu0 %v919
        %987 = vmatpush1.msra.mxu0 %v918
        %988 = vmatprep.subr.mxu0 %v916
        %989 = vmatpush1.msra.mxu0 %v915
        %990 = vmatprep.subr.mxu0 %v913
        %991 = vmatpush1.msra.mxu0 %v912
        %992 = vmatprep.subr.mxu0 0.0
        %993 = vmatpush2.msra.mxu0 0.0
        %994 = vmatprep.subr.mxu0 0.0
        %995 = vmatpush2.msra.mxu0 0.0
        %996 = vmatprep.subr.mxu0 0.0
        %997 = vmatpush2.msra.mxu0 0.0
        %998 = vmatprep.subr.mxu0 0.0
        %999 = vmatpush2.msra.mxu0 0.0
        %1000 = vmatprep.subr.mxu0 0.0
        %1001 = vmatpush2.msra.mxu0 0.0
        %1002 = vmatprep.subr.mxu0 0.0
        %1003 = vmatpush2.msra.mxu0 0.0
        %1004 = vmatprep.subr.mxu0 0.0
        %1005 = vmatpush2.msra.mxu0 0.0
        %1006 = vmatprep.subr.mxu0 0.0
        %1007 = vmatpush2.msra.mxu0 0.0
        %1008 = vmatprep.subr.mxu0 0.0
        %1009 = vmatpush2.msra.mxu0 0.0
        %1010 = vmatprep.subr.mxu0 0.0
        %1011 = vmatpush2.msra.mxu0 0.0
        %1012 = vmatprep.subr.mxu0 0.0
        %1013 = vmatpush2.msra.mxu0 0.0
        %1014 = vmatprep.subr.mxu0 0.0
        %1015 = vmatpush2.msra.mxu0 0.0
        %1016 = vmatprep.subr.mxu0 0.0
        %1017 = vmatpush2.msra.mxu0 0.0
        %1018 = vmatprep.subr.mxu0 0.0
        %1019 = vmatpush2.msra.mxu0 0.0
        %1020 = vmatprep.subr.mxu0 0.0
        %1021 = vmatpush2.msra.mxu0 0.0
        %1022 = vmatprep.subr.mxu0 0.0
        %1023 = vmatpush2.msra.mxu0 0.0
        %1024 = vmatprep.mubr.f32.mxu0 0.0
        %1025 = vmatmul.mubr.f32.gmra.mxu0 %v908
        %v1026 = vpop.f32.mrf.mxu0
        %v1027 = vadd.f32 0.0, %v1026
        %v1028 = vpop.f32.mrf.mxu0
        %v1029 = vadd.f32 0.0, %v1028
        %1030 = vmatprep.mubr.f32.mxu0 0.0
        %1031 = vmatmul.mubr.f32.gmra.mxu0 %v909
        %v1032 = vpop.f32.mrf.mxu0
        %v1033 = vadd.f32 0.0, %v1032
        %v1034 = vpop.f32.mrf.mxu0
        %v1035 = vadd.f32 0.0, %v1034
        %1036 = vmatprep.mubr.f32.mxu0 0.0
        %1037 = vmatmul.mubr.f32.gmra.mxu0 %v910
        %v1038 = vpop.f32.mrf.mxu0
        %v1039 = vadd.f32 0.0, %v1038
        %v1040 = vpop.f32.mrf.mxu0
        %v1041 = vadd.f32 0.0, %v1040
        %1042 = vmatprep.mubr.f32.mxu0 0.0
        %1043 = vmatmul.mubr.f32.gmra.mxu0 %v911
        %v1044 = vpop.f32.mrf.mxu0
        %v1045 = vadd.f32 0.0, %v1044
        %v1046 = vpop.f32.mrf.mxu0
        %v1047 = vadd.f32 0.0, %v1046
        %1048 = vdwg.mxu0
        %1049 = vmatprep.subr.mxu0 0.0
        %1050 = vmatpush1.msra.mxu0 %v959
        %1051 = vmatprep.subr.mxu0 0.0
        %1052 = vmatpush1.msra.mxu0 %v956
        %1053 = vmatprep.subr.mxu0 0.0
        %1054 = vmatpush1.msra.mxu0 %v953
        %1055 = vmatprep.subr.mxu0 0.0
        %1056 = vmatpush1.msra.mxu0 %v950
        %1057 = vmatprep.subr.mxu0 0.0
        %1058 = vmatpush1.msra.mxu0 %v947
        %1059 = vmatprep.subr.mxu0 0.0
        %1060 = vmatpush1.msra.mxu0 %v944
        %1061 = vmatprep.subr.mxu0 0.0
        %1062 = vmatpush1.msra.mxu0 %v941
        %1063 = vmatprep.subr.mxu0 0.0
        %1064 = vmatpush1.msra.mxu0 %v938
        %1065 = vmatprep.subr.mxu0 0.0
        %1066 = vmatpush1.msra.mxu0 %v935
        %1067 = vmatprep.subr.mxu0 0.0
        %1068 = vmatpush1.msra.mxu0 %v932
        %1069 = vmatprep.subr.mxu0 0.0
        %1070 = vmatpush1.msra.mxu0 %v929
        %1071 = vmatprep.subr.mxu0 0.0
        %1072 = vmatpush1.msra.mxu0 %v926
        %1073 = vmatprep.subr.mxu0 0.0
        %1074 = vmatpush1.msra.mxu0 %v923
        %1075 = vmatprep.subr.mxu0 0.0
        %1076 = vmatpush1.msra.mxu0 %v920
        %1077 = vmatprep.subr.mxu0 0.0
        %1078 = vmatpush1.msra.mxu0 %v917
        %1079 = vmatprep.subr.mxu0 0.0
        %1080 = vmatpush1.msra.mxu0 %v914
        %1081 = vmatprep.subr.mxu0 0.0
        %1082 = vmatpush2.msra.mxu0 0.0
        %1083 = vmatprep.subr.mxu0 0.0
        %1084 = vmatpush2.msra.mxu0 0.0
        %1085 = vmatprep.subr.mxu0 0.0
        %1086 = vmatpush2.msra.mxu0 0.0
        %1087 = vmatprep.subr.mxu0 0.0
        %1088 = vmatpush2.msra.mxu0 0.0
        %1089 = vmatprep.subr.mxu0 0.0
        %1090 = vmatpush2.msra.mxu0 0.0
        %1091 = vmatprep.subr.mxu0 0.0
        %1092 = vmatpush2.msra.mxu0 0.0
        %1093 = vmatprep.subr.mxu0 0.0
        %1094 = vmatpush2.msra.mxu0 0.0
        %1095 = vmatprep.subr.mxu0 0.0
        %1096 = vmatpush2.msra.mxu0 0.0
        %1097 = vmatprep.subr.mxu0 0.0
        %1098 = vmatpush2.msra.mxu0 0.0
        %1099 = vmatprep.subr.mxu0 0.0
        %1100 = vmatpush2.msra.mxu0 0.0
        %1101 = vmatprep.subr.mxu0 0.0
        %1102 = vmatpush2.msra.mxu0 0.0
        %1103 = vmatprep.subr.mxu0 0.0
        %1104 = vmatpush2.msra.mxu0 0.0
        %1105 = vmatprep.subr.mxu0 0.0
        %1106 = vmatpush2.msra.mxu0 0.0
        %1107 = vmatprep.subr.mxu0 0.0
        %1108 = vmatpush2.msra.mxu0 0.0
        %1109 = vmatprep.subr.mxu0 0.0
        %1110 = vmatpush2.msra.mxu0 0.0
        %1111 = vmatprep.subr.mxu0 0.0
        %1112 = vmatpush2.msra.mxu0 0.0
        %1113 = vmatprep.mubr.f32.mxu0 0.0
        %1114 = vmatmul.mubr.f32.gmra.mxu0 %v908
        %v1115 = vpop.f32.mrf.mxu0
        %v1116 = vadd.f32 0.0, %v1115
        %v1117 = vpop.f32.mrf.mxu0
        %1118 = vmatprep.mubr.f32.mxu0 0.0
        %1119 = vmatmul.mubr.f32.gmra.mxu0 %v909
        %v1120 = vpop.f32.mrf.mxu0
        %v1121 = vadd.f32 0.0, %v1120
        %v1122 = vpop.f32.mrf.mxu0
        %1123 = vmatprep.mubr.f32.mxu0 0.0
        %1124 = vmatmul.mubr.f32.gmra.mxu0 %v910
        %v1125 = vpop.f32.mrf.mxu0
        %v1126 = vadd.f32 0.0, %v1125
        %v1127 = vpop.f32.mrf.mxu0
        %1128 = vmatprep.mubr.f32.mxu0 0.0
        %1129 = vmatmul.mubr.f32.gmra.mxu0 %v911
        %v1130 = vpop.f32.mrf.mxu0
        %v1131 = vadd.f32 0.0, %v1130
        %v1132 = vpop.f32.mrf.mxu0
        %1133 = vdwg.mxu0
        %vm1134 = vcmask 261120
        %v1136 = vsel %vm1134, %v1027, 0
        %v1139 = vsel %vm1134, %v1033, 0
        %v1142 = vsel %vm1134, %v1039, 0
        %v1145 = vsel %vm1134, %v1045, 0
        %v1148 = vsel %vm1134, %v1029, 0
        %v1151 = vsel %vm1134, %v1035, 0
        %v1154 = vsel %vm1134, %v1041, 0
        %v1157 = vsel %vm1134, %v1047, 0
        %1159 = vmatprep.subr.mxu0 0.0
        %1160 = vmatpush1.xpose.msra.mxu0 0.0
        %1161 = vmatprep.subr.mxu0 0.0
        %1162 = vmatpush1.xpose.msra.mxu0 0.0
        %1163 = vmatprep.subr.mxu0 0.0
        %1164 = vmatpush1.xpose.msra.mxu0 0.0
        %1165 = vmatprep.subr.mxu0 0.0
        %1166 = vmatpush1.xpose.msra.mxu0 0.0
        %1167 = vmatprep.subr.mxu0 0.0
        %1168 = vmatpush1.xpose.msra.mxu0 0.0
        %1169 = vmatprep.subr.mxu0 0.0
        %1170 = vmatpush1.xpose.msra.mxu0 0.0
        %1171 = vmatprep.subr.mxu0 0.0
        %1172 = vmatpush1.xpose.msra.mxu0 0.0
        %1173 = vmatprep.subr.mxu0 0.0
        %1174 = vmatpush1.xpose.msra.mxu0 0.0
        %1175 = vmatprep.subr.mxu0 0.0
        %1176 = vmatpush1.xpose.msra.mxu0 0.0
        %1177 = vmatprep.subr.mxu0 0.0
        %1178 = vmatpush1.xpose.msra.mxu0 0.0
        %1179 = vmatprep.subr.mxu0 0.0
        %1180 = vmatpush1.xpose.msra.mxu0 0.0
        %1181 = vmatprep.subr.mxu0 0.0
        %1182 = vmatpush1.xpose.msra.mxu0 0.0
        %1183 = vmatprep.subr.mxu0 0.0
        %1184 = vmatpush1.xpose.msra.mxu0 %v1157
        %1185 = vmatprep.subr.mxu0 0.0
        %1186 = vmatpush1.xpose.msra.mxu0 %v1154
        %1187 = vmatprep.subr.mxu0 0.0
        %1188 = vmatpush1.xpose.msra.mxu0 %v1151
        %1189 = vmatprep.subr.mxu0 0.0
        %1190 = vmatpush1.xpose.msra.mxu0 %v1148
        %1191 = vmatprep.subr.mxu0 0.0
        %1192 = vmatpush2.xpose.msra.mxu0 0.0
        %1193 = vmatprep.subr.mxu0 0.0
        %1194 = vmatpush2.xpose.msra.mxu0 0.0
        %1195 = vmatprep.subr.mxu0 0.0
        %1196 = vmatpush2.xpose.msra.mxu0 0.0
        %1197 = vmatprep.subr.mxu0 0.0
        %1198 = vmatpush2.xpose.msra.mxu0 0.0
        %1199 = vmatprep.subr.mxu0 0.0
        %1200 = vmatpush2.xpose.msra.mxu0 0.0
        %1201 = vmatprep.subr.mxu0 0.0
        %1202 = vmatpush2.xpose.msra.mxu0 0.0
        %1203 = vmatprep.subr.mxu0 0.0
        %1204 = vmatpush2.xpose.msra.mxu0 0.0
        %1205 = vmatprep.subr.mxu0 0.0
        %1206 = vmatpush2.xpose.msra.mxu0 0.0
        %1207 = vmatprep.subr.mxu0 0.0
        %1208 = vmatpush2.xpose.msra.mxu0 0.0
        %1209 = vmatprep.subr.mxu0 0.0
        %1210 = vmatpush2.xpose.msra.mxu0 0.0
        %1211 = vmatprep.subr.mxu0 0.0
        %1212 = vmatpush2.xpose.msra.mxu0 0.0
        %1213 = vmatprep.subr.mxu0 0.0
        %1214 = vmatpush2.xpose.msra.mxu0 0.0
        %1215 = vmatprep.subr.mxu0 0.0
        %1216 = vmatpush2.xpose.msra.mxu0 0.0
        %1217 = vmatprep.subr.mxu0 0.0
        %1218 = vmatpush2.xpose.msra.mxu0 0.0
        %1219 = vmatprep.subr.mxu0 0.0
        %1220 = vmatpush2.xpose.msra.mxu0 0.0
        %1221 = vmatprep.subr.mxu0 0.0
        %1222 = vmatpush2.xpose.msra.mxu0 0.0
        %1223 = vmatprep.mubr.f32.mxu0 0.0
        %1224 = vmatmul.mubr.f32.gmra.mxu0 %v1136
        %v1225 = vpop.f32.mrf.mxu0
        %v1226 = vadd.f32 0.0, %v1225
        %v1227 = vpop.f32.mrf.mxu0
        %1228 = vmatprep.mubr.f32.mxu0 0.0
        %1229 = vmatmul.mubr.f32.gmra.mxu0 %v1139
        %v1230 = vpop.f32.mrf.mxu0
        %v1231 = vadd.f32 0.0, %v1230
        %v1232 = vpop.f32.mrf.mxu0
        %1233 = vmatprep.mubr.f32.mxu0 0.0
        %1234 = vmatmul.mubr.f32.gmra.mxu0 %v1142
        %v1235 = vpop.f32.mrf.mxu0
        %v1236 = vadd.f32 0.0, %v1235
        %v1237 = vpop.f32.mrf.mxu0
        %1238 = vmatprep.mubr.f32.mxu0 0.0
        %1239 = vmatmul.mubr.f32.gmra.mxu0 %v1145
        %v1240 = vpop.f32.mrf.mxu0
        %v1241 = vadd.f32 0.0, %v1240
        %v1242 = vpop.f32.mrf.mxu0
        %1243 = vdwg.mxu0
        %v1244 = vsel %vm1134, %v1226, -inf
        %1245 = vmax.xlane.f32.xlu0 %v1244
        %v1246 = vpop.xlane.xlu0 %1245
        %v1247 = vsel %vm1134, %v1231, -inf
        %1248 = vmax.xlane.f32.xlu0 %v1247
        %v1249 = vpop.xlane.xlu0 %1248
        %v1250 = vsel %vm1134, %v1236, -inf
        %1251 = vmax.xlane.f32.xlu0 %v1250
        %v1252 = vpop.xlane.xlu0 %1251
        %v1253 = vsel %vm1134, %v1241, -inf
        %1254 = vmax.xlane.f32.xlu0 %v1253
        %v1255 = vpop.xlane.xlu0 %1254
        %v1256 = vsub.f32 %v1226, %v1246
        %v1257 = vsub.f32 %v1231, %v1249
        %v1258 = vsub.f32 %v1236, %v1252
        %v1259 = vsub.f32 %v1241, %v1255
        %v1260 = vmul.f32 %v1256, 1.442695
        %v1261 = vpow.pop %v1260
        %v1262 = vmul.f32 %v1257, 1.442695
        %v1263 = vpow.pop %v1262
        %v1264 = vmul.f32 %v1258, 1.442695
        %v1265 = vpow.pop %v1264
        %v1266 = vmul.f32 %v1259, 1.442695
        %v1267 = vpow.pop %v1266
        %v1268 = vsel %vm1134, %v1261, 0.0
        %1269 = vadd.xlane.f32.xlu0 %v1268
        %v1270 = vpop.xlane.xlu0 %1269
        %v1271 = vsel %vm1134, %v1263, 0.0
        %1272 = vadd.xlane.f32.xlu0 %v1271
        %v1273 = vpop.xlane.xlu0 %1272
        %v1274 = vsel %vm1134, %v1265, 0.0
        %1275 = vadd.xlane.f32.xlu0 %v1274
        %v1276 = vpop.xlane.xlu0 %1275
        %v1277 = vsel %vm1134, %v1267, 0.0
        %1278 = vadd.xlane.f32.xlu0 %v1277
        %v1279 = vpop.xlane.xlu0 %1278
        %v1280 = vrcp.pop %v1270
        %v1281 = vmul.f32 %v1261, %v1280
        %v1282 = vrcp.pop %v1273
        %v1283 = vmul.f32 %v1263, %v1282
        %v1284 = vrcp.pop %v1276
        %v1285 = vmul.f32 %v1265, %v1284
        %v1286 = vrcp.pop %v1279
        %v1287 = vmul.f32 %v1267, %v1286
        %v1289 = vsel %vm1134, %v1281, 0
        %v1292 = vsel %vm1134, %v1283, 0
        %v1295 = vsel %vm1134, %v1285, 0
        %v1298 = vsel %vm1134, %v1287, 0
        %1300 = vmatprep.subr.mxu0 0.0
        %1301 = vmatpush1.msra.mxu0 0.0
        %1302 = vmatprep.subr.mxu0 0.0
        %1303 = vmatpush1.msra.mxu0 0.0
        %1304 = vmatprep.subr.mxu0 0.0
        %1305 = vmatpush1.msra.mxu0 0.0
        %1306 = vmatprep.subr.mxu0 0.0
        %1307 = vmatpush1.msra.mxu0 0.0
        %1308 = vmatprep.subr.mxu0 0.0
        %1309 = vmatpush1.msra.mxu0 0.0
        %1310 = vmatprep.subr.mxu0 0.0
        %1311 = vmatpush1.msra.mxu0 0.0
        %1312 = vmatprep.subr.mxu0 0.0
        %1313 = vmatpush1.msra.mxu0 0.0
        %1314 = vmatprep.subr.mxu0 0.0
        %1315 = vmatpush1.msra.mxu0 0.0
        %1316 = vmatprep.subr.mxu0 0.0
        %1317 = vmatpush1.msra.mxu0 0.0
        %1318 = vmatprep.subr.mxu0 0.0
        %1319 = vmatpush1.msra.mxu0 0.0
        %1320 = vmatprep.subr.mxu0 0.0
        %1321 = vmatpush1.msra.mxu0 0.0
        %1322 = vmatprep.subr.mxu0 0.0
        %1323 = vmatpush1.msra.mxu0 0.0
        %1324 = vmatprep.subr.mxu0 0.0
        %1325 = vmatpush1.msra.mxu0 %v1131
        %1326 = vmatprep.subr.mxu0 0.0
        %1327 = vmatpush1.msra.mxu0 %v1126
        %1328 = vmatprep.subr.mxu0 0.0
        %1329 = vmatpush1.msra.mxu0 %v1121
        %1330 = vmatprep.subr.mxu0 0.0
        %1331 = vmatpush1.msra.mxu0 %v1116
        %1332 = vmatprep.subr.mxu0 0.0
        %1333 = vmatpush2.msra.mxu0 0.0
        %1334 = vmatprep.subr.mxu0 0.0
        %1335 = vmatpush2.msra.mxu0 0.0
        %1336 = vmatprep.subr.mxu0 0.0
        %1337 = vmatpush2.msra.mxu0 0.0
        %1338 = vmatprep.subr.mxu0 0.0
        %1339 = vmatpush2.msra.mxu0 0.0
        %1340 = vmatprep.subr.mxu0 0.0
        %1341 = vmatpush2.msra.mxu0 0.0
        %1342 = vmatprep.subr.mxu0 0.0
        %1343 = vmatpush2.msra.mxu0 0.0
        %1344 = vmatprep.subr.mxu0 0.0
        %1345 = vmatpush2.msra.mxu0 0.0
        %1346 = vmatprep.subr.mxu0 0.0
        %1347 = vmatpush2.msra.mxu0 0.0
        %1348 = vmatprep.subr.mxu0 0.0
        %1349 = vmatpush2.msra.mxu0 0.0
        %1350 = vmatprep.subr.mxu0 0.0
        %1351 = vmatpush2.msra.mxu0 0.0
        %1352 = vmatprep.subr.mxu0 0.0
        %1353 = vmatpush2.msra.mxu0 0.0
        %1354 = vmatprep.subr.mxu0 0.0
        %1355 = vmatpush2.msra.mxu0 0.0
        %1356 = vmatprep.subr.mxu0 0.0
        %1357 = vmatpush2.msra.mxu0 0.0
        %1358 = vmatprep.subr.mxu0 0.0
        %1359 = vmatpush2.msra.mxu0 0.0
        %1360 = vmatprep.subr.mxu0 0.0
        %1361 = vmatpush2.msra.mxu0 0.0
        %1362 = vmatprep.subr.mxu0 0.0
        %1363 = vmatpush2.msra.mxu0 0.0
        %1364 = vmatprep.mubr.f32.mxu0 0.0
        %1365 = vmatmul.mubr.f32.gmra.mxu0 %v1289
        %v1366 = vpop.f32.mrf.mxu0
        %v1367 = vadd.f32 0.0, %v1366
        %v1368 = vpop.f32.mrf.mxu0
        %1369 = vmatprep.mubr.f32.mxu0 0.0
        %1370 = vmatmul.mubr.f32.gmra.mxu0 %v1292
        %v1371 = vpop.f32.mrf.mxu0
        %v1372 = vadd.f32 0.0, %v1371
        %v1373 = vpop.f32.mrf.mxu0
        %1374 = vmatprep.mubr.f32.mxu0 0.0
        %1375 = vmatmul.mubr.f32.gmra.mxu0 %v1295
        %v1376 = vpop.f32.mrf.mxu0
        %v1377 = vadd.f32 0.0, %v1376
        %v1378 = vpop.f32.mrf.mxu0
        %1379 = vmatprep.mubr.f32.mxu0 0.0
        %1380 = vmatmul.mubr.f32.gmra.mxu0 %v1298
        %v1381 = vpop.f32.mrf.mxu0
        %v1382 = vadd.f32 0.0, %v1381
        %v1383 = vpop.f32.mrf.mxu0
        %1384 = vdwg.mxu0
        %1385 = vrot.lane.b32.xlu0 %v1027, 96
        %v1386 = vpop.permute.xlu0 %1385
        %1387 = vrot.lane.b32.xlu0 %v1033, 96
        %v1388 = vpop.permute.xlu0 %1387
        %1389 = vrot.lane.b32.xlu0 %v1039, 96
        %v1390 = vpop.permute.xlu0 %1389
        %1391 = vrot.lane.b32.xlu0 %v1045, 96
        %v1392 = vpop.permute.xlu0 %1391
        %1393 = vrot.lane.b32.xlu0 %v1029, 96
        %v1394 = vpop.permute.xlu0 %1393
        %1395 = vrot.lane.b32.xlu0 %v1035, 96
        %v1396 = vpop.permute.xlu0 %1395
        %1397 = vrot.lane.b32.xlu0 %v1041, 96
        %v1398 = vpop.permute.xlu0 %1397
        %1399 = vrot.lane.b32.xlu0 %v1047, 96
        %v1400 = vpop.permute.xlu0 %1399
        %v1401 = vsel %vm1134, %v1386, 0
        %v1403 = vsel %vm1134, %v1388, 0
        %v1405 = vsel %vm1134, %v1390, 0
        %v1407 = vsel %vm1134, %v1392, 0
        %v1409 = vsel %vm1134, %v1394, 0
        %v1411 = vsel %vm1134, %v1396, 0
        %v1413 = vsel %vm1134, %v1398, 0
        %v1415 = vsel %vm1134, %v1400, 0
        %1417 = vmatprep.subr.mxu0 0.0
        %1418 = vmatpush1.xpose.msra.mxu0 0.0
        %1419 = vmatprep.subr.mxu0 0.0
        %1420 = vmatpush1.xpose.msra.mxu0 0.0
        %1421 = vmatprep.subr.mxu0 0.0
        %1422 = vmatpush1.xpose.msra.mxu0 0.0
        %1423 = vmatprep.subr.mxu0 0.0
        %1424 = vmatpush1.xpose.msra.mxu0 0.0
        %1425 = vmatprep.subr.mxu0 0.0
        %1426 = vmatpush1.xpose.msra.mxu0 0.0
        %1427 = vmatprep.subr.mxu0 0.0
        %1428 = vmatpush1.xpose.msra.mxu0 0.0
        %1429 = vmatprep.subr.mxu0 0.0
        %1430 = vmatpush1.xpose.msra.mxu0 0.0
        %1431 = vmatprep.subr.mxu0 0.0
        %1432 = vmatpush1.xpose.msra.mxu0 0.0
        %1433 = vmatprep.subr.mxu0 0.0
        %1434 = vmatpush1.xpose.msra.mxu0 0.0
        %1435 = vmatprep.subr.mxu0 0.0
        %1436 = vmatpush1.xpose.msra.mxu0 0.0
        %1437 = vmatprep.subr.mxu0 0.0
        %1438 = vmatpush1.xpose.msra.mxu0 0.0
        %1439 = vmatprep.subr.mxu0 0.0
        %1440 = vmatpush1.xpose.msra.mxu0 0.0
        %1441 = vmatprep.subr.mxu0 0.0
        %1442 = vmatpush1.xpose.msra.mxu0 %v1415
        %1443 = vmatprep.subr.mxu0 0.0
        %1444 = vmatpush1.xpose.msra.mxu0 %v1413
        %1445 = vmatprep.subr.mxu0 0.0
        %1446 = vmatpush1.xpose.msra.mxu0 %v1411
        %1447 = vmatprep.subr.mxu0 0.0
        %1448 = vmatpush1.xpose.msra.mxu0 %v1409
        %1449 = vmatprep.subr.mxu0 0.0
        %1450 = vmatpush2.xpose.msra.mxu0 0.0
        %1451 = vmatprep.subr.mxu0 0.0
        %1452 = vmatpush2.xpose.msra.mxu0 0.0
        %1453 = vmatprep.subr.mxu0 0.0
        %1454 = vmatpush2.xpose.msra.mxu0 0.0
        %1455 = vmatprep.subr.mxu0 0.0
        %1456 = vmatpush2.xpose.msra.mxu0 0.0
        %1457 = vmatprep.subr.mxu0 0.0
        %1458 = vmatpush2.xpose.msra.mxu0 0.0
        %1459 = vmatprep.subr.mxu0 0.0
        %1460 = vmatpush2.xpose.msra.mxu0 0.0
        %1461 = vmatprep.subr.mxu0 0.0
        %1462 = vmatpush2.xpose.msra.mxu0 0.0
        %1463 = vmatprep.subr.mxu0 0.0
        %1464 = vmatpush2.xpose.msra.mxu0 0.0
        %1465 = vmatprep.subr.mxu0 0.0
        %1466 = vmatpush2.xpose.msra.mxu0 0.0
        %1467 = vmatprep.subr.mxu0 0.0
        %1468 = vmatpush2.xpose.msra.mxu0 0.0
        %1469 = vmatprep.subr.mxu0 0.0
        %1470 = vmatpush2.xpose.msra.mxu0 0.0
        %1471 = vmatprep.subr.mxu0 0.0
        %1472 = vmatpush2.xpose.msra.mxu0 0.0
        %1473 = vmatprep.subr.mxu0 0.0
        %1474 = vmatpush2.xpose.msra.mxu0 0.0
        %1475 = vmatprep.subr.mxu0 0.0
        %1476 = vmatpush2.xpose.msra.mxu0 0.0
        %1477 = vmatprep.subr.mxu0 0.0
        %1478 = vmatpush2.xpose.msra.mxu0 0.0
        %1479 = vmatprep.subr.mxu0 0.0
        %1480 = vmatpush2.xpose.msra.mxu0 0.0
        %1481 = vmatprep.mubr.f32.mxu0 0.0
        %1482 = vmatmul.mubr.f32.gmra.mxu0 %v1401
        %v1483 = vpop.f32.mrf.mxu0
        %v1484 = vadd.f32 0.0, %v1483
        %v1485 = vpop.f32.mrf.mxu0
        %1486 = vmatprep.mubr.f32.mxu0 0.0
        %1487 = vmatmul.mubr.f32.gmra.mxu0 %v1403
        %v1488 = vpop.f32.mrf.mxu0
        %v1489 = vadd.f32 0.0, %v1488
        %v1490 = vpop.f32.mrf.mxu0
        %1491 = vmatprep.mubr.f32.mxu0 0.0
        %1492 = vmatmul.mubr.f32.gmra.mxu0 %v1405
        %v1493 = vpop.f32.mrf.mxu0
        %v1494 = vadd.f32 0.0, %v1493
        %v1495 = vpop.f32.mrf.mxu0
        %1496 = vmatprep.mubr.f32.mxu0 0.0
        %1497 = vmatmul.mubr.f32.gmra.mxu0 %v1407
        %v1498 = vpop.f32.mrf.mxu0
        %v1499 = vadd.f32 0.0, %v1498
        %v1500 = vpop.f32.mrf.mxu0
        %1501 = vdwg.mxu0
        %v1502 = vsel %vm1134, %v1484, -inf
        %1503 = vmax.xlane.f32.xlu0 %v1502
        %v1504 = vpop.xlane.xlu0 %1503
        %v1505 = vsel %vm1134, %v1489, -inf
        %1506 = vmax.xlane.f32.xlu0 %v1505
        %v1507 = vpop.xlane.xlu0 %1506
        %v1508 = vsel %vm1134, %v1494, -inf
        %1509 = vmax.xlane.f32.xlu0 %v1508
        %v1510 = vpop.xlane.xlu0 %1509
        %v1511 = vsel %vm1134, %v1499, -inf
        %1512 = vmax.xlane.f32.xlu0 %v1511
        %v1513 = vpop.xlane.xlu0 %1512
        %v1514 = vsub.f32 %v1484, %v1504
        %v1515 = vsub.f32 %v1489, %v1507
        %v1516 = vsub.f32 %v1494, %v1510
        %v1517 = vsub.f32 %v1499, %v1513
        %v1518 = vmul.f32 %v1514, 1.442695
        %v1519 = vpow.pop %v1518
        %v1520 = vmul.f32 %v1515, 1.442695
        %v1521 = vpow.pop %v1520
        %v1522 = vmul.f32 %v1516, 1.442695
        %v1523 = vpow.pop %v1522
        %v1524 = vmul.f32 %v1517, 1.442695
        %v1525 = vpow.pop %v1524
        %v1526 = vsel %vm1134, %v1519, 0.0
        %1527 = vadd.xlane.f32.xlu0 %v1526
        %v1528 = vpop.xlane.xlu0 %1527
        %v1529 = vsel %vm1134, %v1521, 0.0
        %1530 = vadd.xlane.f32.xlu0 %v1529
        %v1531 = vpop.xlane.xlu0 %1530
        %v1532 = vsel %vm1134, %v1523, 0.0
        %1533 = vadd.xlane.f32.xlu0 %v1532
        %v1534 = vpop.xlane.xlu0 %1533
        %v1535 = vsel %vm1134, %v1525, 0.0
        %1536 = vadd.xlane.f32.xlu0 %v1535
        %v1537 = vpop.xlane.xlu0 %1536
        %v1538 = vrcp.pop %v1528
        %v1539 = vmul.f32 %v1519, %v1538
        %v1540 = vrcp.pop %v1531
        %v1541 = vmul.f32 %v1521, %v1540
        %v1542 = vrcp.pop %v1534
        %v1543 = vmul.f32 %v1523, %v1542
        %v1544 = vrcp.pop %v1537
        %v1545 = vmul.f32 %v1525, %v1544
        %1550 = vrot.lane.b32.xlu0 %v1116, 96
        %v1551 = vpop.permute.xlu0 %1550
        %1552 = vrot.lane.b32.xlu0 %v1121, 96
        %v1553 = vpop.permute.xlu0 %1552
        %1554 = vrot.lane.b32.xlu0 %v1126, 96
        %v1555 = vpop.permute.xlu0 %1554
        %1556 = vrot.lane.b32.xlu0 %v1131, 96
        %v1557 = vpop.permute.xlu0 %1556
        %v1563 = vsel %vm1134, %v1539, 0
        %v1566 = vsel %vm1134, %v1541, 0
        %v1569 = vsel %vm1134, %v1543, 0
        %v1572 = vsel %vm1134, %v1545, 0
        %1574 = vmatprep.subr.mxu0 0.0
        %1575 = vmatpush1.msra.mxu0 0.0
        %1576 = vmatprep.subr.mxu0 0.0
        %1577 = vmatpush1.msra.mxu0 0.0
        %1578 = vmatprep.subr.mxu0 0.0
        %1579 = vmatpush1.msra.mxu0 0.0
        %1580 = vmatprep.subr.mxu0 0.0
        %1581 = vmatpush1.msra.mxu0 0.0
        %1582 = vmatprep.subr.mxu0 0.0
        %1583 = vmatpush1.msra.mxu0 0.0
        %1584 = vmatprep.subr.mxu0 0.0
        %1585 = vmatpush1.msra.mxu0 0.0
        %1586 = vmatprep.subr.mxu0 0.0
        %1587 = vmatpush1.msra.mxu0 0.0
        %1588 = vmatprep.subr.mxu0 0.0
        %1589 = vmatpush1.msra.mxu0 0.0
        %1590 = vmatprep.subr.mxu0 0.0
        %1591 = vmatpush1.msra.mxu0 0.0
        %1592 = vmatprep.subr.mxu0 0.0
        %1593 = vmatpush1.msra.mxu0 0.0
        %1594 = vmatprep.subr.mxu0 0.0
        %1595 = vmatpush1.msra.mxu0 0.0
        %1596 = vmatprep.subr.mxu0 0.0
        %1597 = vmatpush1.msra.mxu0 0.0
        %1598 = vmatprep.subr.mxu0 0.0
        %1599 = vmatpush1.msra.mxu0 %v1557
        %1600 = vmatprep.subr.mxu0 0.0
        %1601 = vmatpush1.msra.mxu0 %v1555
        %1602 = vmatprep.subr.mxu0 0.0
        %1603 = vmatpush1.msra.mxu0 %v1553
        %1604 = vmatprep.subr.mxu0 0.0
        %1605 = vmatpush1.msra.mxu0 %v1551
        %1606 = vmatprep.subr.mxu0 0.0
        %1607 = vmatpush2.msra.mxu0 0.0
        %1608 = vmatprep.subr.mxu0 0.0
        %1609 = vmatpush2.msra.mxu0 0.0
        %1610 = vmatprep.subr.mxu0 0.0
        %1611 = vmatpush2.msra.mxu0 0.0
        %1612 = vmatprep.subr.mxu0 0.0
        %1613 = vmatpush2.msra.mxu0 0.0
        %1614 = vmatprep.subr.mxu0 0.0
        %1615 = vmatpush2.msra.mxu0 0.0
        %1616 = vmatprep.subr.mxu0 0.0
        %1617 = vmatpush2.msra.mxu0 0.0
        %1618 = vmatprep.subr.mxu0 0.0
        %1619 = vmatpush2.msra.mxu0 0.0
        %1620 = vmatprep.subr.mxu0 0.0
        %1621 = vmatpush2.msra.mxu0 0.0
        %1622 = vmatprep.subr.mxu0 0.0
        %1623 = vmatpush2.msra.mxu0 0.0
        %1624 = vmatprep.subr.mxu0 0.0
        %1625 = vmatpush2.msra.mxu0 0.0
        %1626 = vmatprep.subr.mxu0 0.0
        %1627 = vmatpush2.msra.mxu0 0.0
        %1628 = vmatprep.subr.mxu0 0.0
        %1629 = vmatpush2.msra.mxu0 0.0
        %1630 = vmatprep.subr.mxu0 0.0
        %1631 = vmatpush2.msra.mxu0 0.0
        %1632 = vmatprep.subr.mxu0 0.0
        %1633 = vmatpush2.msra.mxu0 0.0
        %1634 = vmatprep.subr.mxu0 0.0
        %1635 = vmatpush2.msra.mxu0 0.0
        %1636 = vmatprep.subr.mxu0 0.0
        %1637 = vmatpush2.msra.mxu0 0.0
        %1638 = vmatprep.mubr.f32.mxu0 0.0
        %1639 = vmatmul.mubr.f32.gmra.mxu0 %v1563
        %v1640 = vpop.f32.mrf.mxu0
        %v1641 = vadd.f32 0.0, %v1640
        %v1642 = vpop.f32.mrf.mxu0
        %1643 = vmatprep.mubr.f32.mxu0 0.0
        %1644 = vmatmul.mubr.f32.gmra.mxu0 %v1566
        %v1645 = vpop.f32.mrf.mxu0
        %v1646 = vadd.f32 0.0, %v1645
        %v1647 = vpop.f32.mrf.mxu0
        %1648 = vmatprep.mubr.f32.mxu0 0.0
        %1649 = vmatmul.mubr.f32.gmra.mxu0 %v1569
        %v1650 = vpop.f32.mrf.mxu0
        %v1651 = vadd.f32 0.0, %v1650
        %v1652 = vpop.f32.mrf.mxu0
        %1653 = vmatprep.mubr.f32.mxu0 0.0
        %1654 = vmatmul.mubr.f32.gmra.mxu0 %v1572
        %v1655 = vpop.f32.mrf.mxu0
        %v1656 = vadd.f32 0.0, %v1655
        %v1657 = vpop.f32.mrf.mxu0
        %1658 = vdwg.mxu0
        %1659 = vrot.lane.b32.xlu0 %v1027, 64
        %v1660 = vpop.permute.xlu0 %1659
        %1661 = vrot.lane.b32.xlu0 %v1033, 64
        %v1662 = vpop.permute.xlu0 %1661
        %1663 = vrot.lane.b32.xlu0 %v1039, 64
        %v1664 = vpop.permute.xlu0 %1663
        %1665 = vrot.lane.b32.xlu0 %v1045, 64
        %v1666 = vpop.permute.xlu0 %1665
        %1667 = vrot.lane.b32.xlu0 %v1029, 64
        %v1668 = vpop.permute.xlu0 %1667
        %1669 = vrot.lane.b32.xlu0 %v1035, 64
        %v1670 = vpop.permute.xlu0 %1669
        %1671 = vrot.lane.b32.xlu0 %v1041, 64
        %v1672 = vpop.permute.xlu0 %1671
        %1673 = vrot.lane.b32.xlu0 %v1047, 64
        %v1674 = vpop.permute.xlu0 %1673
        %v1675 = vsel %vm1134, %v1660, 0
        %v1677 = vsel %vm1134, %v1662, 0
        %v1679 = vsel %vm1134, %v1664, 0
        %v1681 = vsel %vm1134, %v1666, 0
        %v1683 = vsel %vm1134, %v1668, 0
        %v1685 = vsel %vm1134, %v1670, 0
        %v1687 = vsel %vm1134, %v1672, 0
        %v1689 = vsel %vm1134, %v1674, 0
        %1691 = vmatprep.subr.mxu0 0.0
        %1692 = vmatpush1.xpose.msra.mxu0 0.0
        %1693 = vmatprep.subr.mxu0 0.0
        %1694 = vmatpush1.xpose.msra.mxu0 0.0
        %1695 = vmatprep.subr.mxu0 0.0
        %1696 = vmatpush1.xpose.msra.mxu0 0.0
        %1697 = vmatprep.subr.mxu0 0.0
        %1698 = vmatpush1.xpose.msra.mxu0 0.0
        %1699 = vmatprep.subr.mxu0 0.0
        %1700 = vmatpush1.xpose.msra.mxu0 0.0
        %1701 = vmatprep.subr.mxu0 0.0
        %1702 = vmatpush1.xpose.msra.mxu0 0.0
        %1703 = vmatprep.subr.mxu0 0.0
        %1704 = vmatpush1.xpose.msra.mxu0 0.0
        %1705 = vmatprep.subr.mxu0 0.0
        %1706 = vmatpush1.xpose.msra.mxu0 0.0
        %1707 = vmatprep.subr.mxu0 0.0
        %1708 = vmatpush1.xpose.msra.mxu0 0.0
        %1709 = vmatprep.subr.mxu0 0.0
        %1710 = vmatpush1.xpose.msra.mxu0 0.0
        %1711 = vmatprep.subr.mxu0 0.0
        %1712 = vmatpush1.xpose.msra.mxu0 0.0
        %1713 = vmatprep.subr.mxu0 0.0
        %1714 = vmatpush1.xpose.msra.mxu0 0.0
        %1715 = vmatprep.subr.mxu0 0.0
        %1716 = vmatpush1.xpose.msra.mxu0 %v1689
        %1717 = vmatprep.subr.mxu0 0.0
        %1718 = vmatpush1.xpose.msra.mxu0 %v1687
        %1719 = vmatprep.subr.mxu0 0.0
        %1720 = vmatpush1.xpose.msra.mxu0 %v1685
        %1721 = vmatprep.subr.mxu0 0.0
        %1722 = vmatpush1.xpose.msra.mxu0 %v1683
        %1723 = vmatprep.subr.mxu0 0.0
        %1724 = vmatpush2.xpose.msra.mxu0 0.0
        %1725 = vmatprep.subr.mxu0 0.0
        %1726 = vmatpush2.xpose.msra.mxu0 0.0
        %1727 = vmatprep.subr.mxu0 0.0
        %1728 = vmatpush2.xpose.msra.mxu0 0.0
        %1729 = vmatprep.subr.mxu0 0.0
        %1730 = vmatpush2.xpose.msra.mxu0 0.0
        %1731 = vmatprep.subr.mxu0 0.0
        %1732 = vmatpush2.xpose.msra.mxu0 0.0
        %1733 = vmatprep.subr.mxu0 0.0
        %1734 = vmatpush2.xpose.msra.mxu0 0.0
        %1735 = vmatprep.subr.mxu0 0.0
        %1736 = vmatpush2.xpose.msra.mxu0 0.0
        %1737 = vmatprep.subr.mxu0 0.0
        %1738 = vmatpush2.xpose.msra.mxu0 0.0
        %1739 = vmatprep.subr.mxu0 0.0
        %1740 = vmatpush2.xpose.msra.mxu0 0.0
        %1741 = vmatprep.subr.mxu0 0.0
        %1742 = vmatpush2.xpose.msra.mxu0 0.0
        %1743 = vmatprep.subr.mxu0 0.0
        %1744 = vmatpush2.xpose.msra.mxu0 0.0
        %1745 = vmatprep.subr.mxu0 0.0
        %1746 = vmatpush2.xpose.msra.mxu0 0.0
        %1747 = vmatprep.subr.mxu0 0.0
        %1748 = vmatpush2.xpose.msra.mxu0 0.0
        %1749 = vmatprep.subr.mxu0 0.0
        %1750 = vmatpush2.xpose.msra.mxu0 0.0
        %1751 = vmatprep.subr.mxu0 0.0
        %1752 = vmatpush2.xpose.msra.mxu0 0.0
        %1753 = vmatprep.subr.mxu0 0.0
        %1754 = vmatpush2.xpose.msra.mxu0 0.0
        %1755 = vmatprep.mubr.f32.mxu0 0.0
        %1756 = vmatmul.mubr.f32.gmra.mxu0 %v1675
        %v1757 = vpop.f32.mrf.mxu0
        %v1758 = vadd.f32 0.0, %v1757
        %v1759 = vpop.f32.mrf.mxu0
        %1760 = vmatprep.mubr.f32.mxu0 0.0
        %1761 = vmatmul.mubr.f32.gmra.mxu0 %v1677
        %v1762 = vpop.f32.mrf.mxu0
        %v1763 = vadd.f32 0.0, %v1762
        %v1764 = vpop.f32.mrf.mxu0
        %1765 = vmatprep.mubr.f32.mxu0 0.0
        %1766 = vmatmul.mubr.f32.gmra.mxu0 %v1679
        %v1767 = vpop.f32.mrf.mxu0
        %v1768 = vadd.f32 0.0, %v1767
        %v1769 = vpop.f32.mrf.mxu0
        %1770 = vmatprep.mubr.f32.mxu0 0.0
        %1771 = vmatmul.mubr.f32.gmra.mxu0 %v1681
        %v1772 = vpop.f32.mrf.mxu0
        %v1773 = vadd.f32 0.0, %v1772
        %v1774 = vpop.f32.mrf.mxu0
        %1775 = vdwg.mxu0
        %v1776 = vsel %vm1134, %v1758, -inf
        %1777 = vmax.xlane.f32.xlu0 %v1776
        %v1778 = vpop.xlane.xlu0 %1777
        %v1779 = vsel %vm1134, %v1763, -inf
        %1780 = vmax.xlane.f32.xlu0 %v1779
        %v1781 = vpop.xlane.xlu0 %1780
        %v1782 = vsel %vm1134, %v1768, -inf
        %1783 = vmax.xlane.f32.xlu0 %v1782
        %v1784 = vpop.xlane.xlu0 %1783
        %v1785 = vsel %vm1134, %v1773, -inf
        %1786 = vmax.xlane.f32.xlu0 %v1785
        %v1787 = vpop.xlane.xlu0 %1786
        %v1788 = vsub.f32 %v1758, %v1778
        %v1789 = vsub.f32 %v1763, %v1781
        %v1790 = vsub.f32 %v1768, %v1784
        %v1791 = vsub.f32 %v1773, %v1787
        %v1792 = vmul.f32 %v1788, 1.442695
        %v1793 = vpow.pop %v1792
        %v1794 = vmul.f32 %v1789, 1.442695
        %v1795 = vpow.pop %v1794
        %v1796 = vmul.f32 %v1790, 1.442695
        %v1797 = vpow.pop %v1796
        %v1798 = vmul.f32 %v1791, 1.442695
        %v1799 = vpow.pop %v1798
        %v1800 = vsel %vm1134, %v1793, 0.0
        %1801 = vadd.xlane.f32.xlu0 %v1800
        %v1802 = vpop.xlane.xlu0 %1801
        %v1803 = vsel %vm1134, %v1795, 0.0
        %1804 = vadd.xlane.f32.xlu0 %v1803
        %v1805 = vpop.xlane.xlu0 %1804
        %v1806 = vsel %vm1134, %v1797, 0.0
        %1807 = vadd.xlane.f32.xlu0 %v1806
        %v1808 = vpop.xlane.xlu0 %1807
        %v1809 = vsel %vm1134, %v1799, 0.0
        %1810 = vadd.xlane.f32.xlu0 %v1809
        %v1811 = vpop.xlane.xlu0 %1810
        %v1812 = vrcp.pop %v1802
        %v1813 = vmul.f32 %v1793, %v1812
        %v1814 = vrcp.pop %v1805
        %v1815 = vmul.f32 %v1795, %v1814
        %v1816 = vrcp.pop %v1808
        %v1817 = vmul.f32 %v1797, %v1816
        %v1818 = vrcp.pop %v1811
        %v1819 = vmul.f32 %v1799, %v1818
        %1820 = vrot.lane.b32.xlu0 %v1116, 64
        %v1821 = vpop.permute.xlu0 %1820
        %1822 = vrot.lane.b32.xlu0 %v1121, 64
        %v1823 = vpop.permute.xlu0 %1822
        %1824 = vrot.lane.b32.xlu0 %v1126, 64
        %v1825 = vpop.permute.xlu0 %1824
        %1826 = vrot.lane.b32.xlu0 %v1131, 64
        %v1827 = vpop.permute.xlu0 %1826
        %v1833 = vsel %vm1134, %v1813, 0
        %v1836 = vsel %vm1134, %v1815, 0
        %v1839 = vsel %vm1134, %v1817, 0
        %v1842 = vsel %vm1134, %v1819, 0
        %1844 = vmatprep.subr.mxu0 0.0
        %1845 = vmatpush1.msra.mxu0 0.0
        %1846 = vmatprep.subr.mxu0 0.0
        %1847 = vmatpush1.msra.mxu0 0.0
        %1848 = vmatprep.subr.mxu0 0.0
        %1849 = vmatpush1.msra.mxu0 0.0
        %1850 = vmatprep.subr.mxu0 0.0
        %1851 = vmatpush1.msra.mxu0 0.0
        %1852 = vmatprep.subr.mxu0 0.0
        %1853 = vmatpush1.msra.mxu0 0.0
        %1854 = vmatprep.subr.mxu0 0.0
        %1855 = vmatpush1.msra.mxu0 0.0
        %1856 = vmatprep.subr.mxu0 0.0
        %1857 = vmatpush1.msra.mxu0 0.0
        %1858 = vmatprep.subr.mxu0 0.0
        %1859 = vmatpush1.msra.mxu0 0.0
        %1860 = vmatprep.subr.mxu0 0.0
        %1861 = vmatpush1.msra.mxu0 0.0
        %1862 = vmatprep.subr.mxu0 0.0
        %1863 = vmatpush1.msra.mxu0 0.0
        %1864 = vmatprep.subr.mxu0 0.0
        %1865 = vmatpush1.msra.mxu0 0.0
        %1866 = vmatprep.subr.mxu0 0.0
        %1867 = vmatpush1.msra.mxu0 0.0
        %1868 = vmatprep.subr.mxu0 0.0
        %1869 = vmatpush1.msra.mxu0 %v1827
        %1870 = vmatprep.subr.mxu0 0.0
        %1871 = vmatpush1.msra.mxu0 %v1825
        %1872 = vmatprep.subr.mxu0 0.0
        %1873 = vmatpush1.msra.mxu0 %v1823
        %1874 = vmatprep.subr.mxu0 0.0
        %1875 = vmatpush1.msra.mxu0 %v1821
        %1876 = vmatprep.subr.mxu0 0.0
        %1877 = vmatpush2.msra.mxu0 0.0
        %1878 = vmatprep.subr.mxu0 0.0
        %1879 = vmatpush2.msra.mxu0 0.0
        %1880 = vmatprep.subr.mxu0 0.0
        %1881 = vmatpush2.msra.mxu0 0.0
        %1882 = vmatprep.subr.mxu0 0.0
        %1883 = vmatpush2.msra.mxu0 0.0
        %1884 = vmatprep.subr.mxu0 0.0
        %1885 = vmatpush2.msra.mxu0 0.0
        %1886 = vmatprep.subr.mxu0 0.0
        %1887 = vmatpush2.msra.mxu0 0.0
        %1888 = vmatprep.subr.mxu0 0.0
        %1889 = vmatpush2.msra.mxu0 0.0
        %1890 = vmatprep.subr.mxu0 0.0
        %1891 = vmatpush2.msra.mxu0 0.0
        %1892 = vmatprep.subr.mxu0 0.0
        %1893 = vmatpush2.msra.mxu0 0.0
        %1894 = vmatprep.subr.mxu0 0.0
        %1895 = vmatpush2.msra.mxu0 0.0
        %1896 = vmatprep.subr.mxu0 0.0
        %1897 = vmatpush2.msra.mxu0 0.0
        %1898 = vmatprep.subr.mxu0 0.0
        %1899 = vmatpush2.msra.mxu0 0.0
        %1900 = vmatprep.subr.mxu0 0.0
        %1901 = vmatpush2.msra.mxu0 0.0
        %1902 = vmatprep.subr.mxu0 0.0
        %1903 = vmatpush2.msra.mxu0 0.0
        %1904 = vmatprep.subr.mxu0 0.0
        %1905 = vmatpush2.msra.mxu0 0.0
        %1906 = vmatprep.subr.mxu0 0.0
        %1907 = vmatpush2.msra.mxu0 0.0
        %1908 = vmatprep.mubr.f32.mxu0 0.0
        %1909 = vmatmul.mubr.f32.gmra.mxu0 %v1833
        %v1910 = vpop.f32.mrf.mxu0
        %v1911 = vadd.f32 0.0, %v1910
        %v1912 = vpop.f32.mrf.mxu0
        %1913 = vmatprep.mubr.f32.mxu0 0.0
        %1914 = vmatmul.mubr.f32.gmra.mxu0 %v1836
        %v1915 = vpop.f32.mrf.mxu0
        %v1916 = vadd.f32 0.0, %v1915
        %v1917 = vpop.f32.mrf.mxu0
        %1918 = vmatprep.mubr.f32.mxu0 0.0
        %1919 = vmatmul.mubr.f32.gmra.mxu0 %v1839
        %v1920 = vpop.f32.mrf.mxu0
        %v1921 = vadd.f32 0.0, %v1920
        %v1922 = vpop.f32.mrf.mxu0
        %1923 = vmatprep.mubr.f32.mxu0 0.0
        %1924 = vmatmul.mubr.f32.gmra.mxu0 %v1842
        %v1925 = vpop.f32.mrf.mxu0
        %v1926 = vadd.f32 0.0, %v1925
        %v1927 = vpop.f32.mrf.mxu0
        %1928 = vdwg.mxu0
        %1929 = vrot.lane.b32.xlu0 %v1027, 32
        %v1930 = vpop.permute.xlu0 %1929
        %1931 = vrot.lane.b32.xlu0 %v1033, 32
        %v1932 = vpop.permute.xlu0 %1931
        %1933 = vrot.lane.b32.xlu0 %v1039, 32
        %v1934 = vpop.permute.xlu0 %1933
        %1935 = vrot.lane.b32.xlu0 %v1045, 32
        %v1936 = vpop.permute.xlu0 %1935
        %1937 = vrot.lane.b32.xlu0 %v1029, 32
        %v1938 = vpop.permute.xlu0 %1937
        %1939 = vrot.lane.b32.xlu0 %v1035, 32
        %v1940 = vpop.permute.xlu0 %1939
        %1941 = vrot.lane.b32.xlu0 %v1041, 32
        %v1942 = vpop.permute.xlu0 %1941
        %1943 = vrot.lane.b32.xlu0 %v1047, 32
        %v1944 = vpop.permute.xlu0 %1943
        %v1945 = vsel %vm1134, %v1930, 0
        %v1947 = vsel %vm1134, %v1932, 0
        %v1949 = vsel %vm1134, %v1934, 0
        %v1951 = vsel %vm1134, %v1936, 0
        %v1953 = vsel %vm1134, %v1938, 0
        %v1955 = vsel %vm1134, %v1940, 0
        %v1957 = vsel %vm1134, %v1942, 0
        %v1959 = vsel %vm1134, %v1944, 0
        %1961 = vmatprep.subr.mxu0 0.0
        %1962 = vmatpush1.xpose.msra.mxu0 0.0
        %1963 = vmatprep.subr.mxu0 0.0
        %1964 = vmatpush1.xpose.msra.mxu0 0.0
        %1965 = vmatprep.subr.mxu0 0.0
        %1966 = vmatpush1.xpose.msra.mxu0 0.0
        %1967 = vmatprep.subr.mxu0 0.0
        %1968 = vmatpush1.xpose.msra.mxu0 0.0
        %1969 = vmatprep.subr.mxu0 0.0
        %1970 = vmatpush1.xpose.msra.mxu0 0.0
        %1971 = vmatprep.subr.mxu0 0.0
        %1972 = vmatpush1.xpose.msra.mxu0 0.0
        %1973 = vmatprep.subr.mxu0 0.0
        %1974 = vmatpush1.xpose.msra.mxu0 0.0
        %1975 = vmatprep.subr.mxu0 0.0
        %1976 = vmatpush1.xpose.msra.mxu0 0.0
        %1977 = vmatprep.subr.mxu0 0.0
        %1978 = vmatpush1.xpose.msra.mxu0 0.0
        %1979 = vmatprep.subr.mxu0 0.0
        %1980 = vmatpush1.xpose.msra.mxu0 0.0
        %1981 = vmatprep.subr.mxu0 0.0
        %1982 = vmatpush1.xpose.msra.mxu0 0.0
        %1983 = vmatprep.subr.mxu0 0.0
        %1984 = vmatpush1.xpose.msra.mxu0 0.0
        %1985 = vmatprep.subr.mxu0 0.0
        %1986 = vmatpush1.xpose.msra.mxu0 %v1959
        %1987 = vmatprep.subr.mxu0 0.0
        %1988 = vmatpush1.xpose.msra.mxu0 %v1957
        %1989 = vmatprep.subr.mxu0 0.0
        %1990 = vmatpush1.xpose.msra.mxu0 %v1955
        %1991 = vmatprep.subr.mxu0 0.0
        %1992 = vmatpush1.xpose.msra.mxu0 %v1953
        %1993 = vmatprep.subr.mxu0 0.0
        %1994 = vmatpush2.xpose.msra.mxu0 0.0
        %1995 = vmatprep.subr.mxu0 0.0
        %1996 = vmatpush2.xpose.msra.mxu0 0.0
        %1997 = vmatprep.subr.mxu0 0.0
        %1998 = vmatpush2.xpose.msra.mxu0 0.0
        %1999 = vmatprep.subr.mxu0 0.0
        %2000 = vmatpush2.xpose.msra.mxu0 0.0
        %2001 = vmatprep.subr.mxu0 0.0
        %2002 = vmatpush2.xpose.msra.mxu0 0.0
        %2003 = vmatprep.subr.mxu0 0.0
        %2004 = vmatpush2.xpose.msra.mxu0 0.0
        %2005 = vmatprep.subr.mxu0 0.0
        %2006 = vmatpush2.xpose.msra.mxu0 0.0
        %2007 = vmatprep.subr.mxu0 0.0
        %2008 = vmatpush2.xpose.msra.mxu0 0.0
        %2009 = vmatprep.subr.mxu0 0.0
        %2010 = vmatpush2.xpose.msra.mxu0 0.0
        %2011 = vmatprep.subr.mxu0 0.0
        %2012 = vmatpush2.xpose.msra.mxu0 0.0
        %2013 = vmatprep.subr.mxu0 0.0
        %2014 = vmatpush2.xpose.msra.mxu0 0.0
        %2015 = vmatprep.subr.mxu0 0.0
        %2016 = vmatpush2.xpose.msra.mxu0 0.0
        %2017 = vmatprep.subr.mxu0 0.0
        %2018 = vmatpush2.xpose.msra.mxu0 0.0
        %2019 = vmatprep.subr.mxu0 0.0
        %2020 = vmatpush2.xpose.msra.mxu0 0.0
        %2021 = vmatprep.subr.mxu0 0.0
        %2022 = vmatpush2.xpose.msra.mxu0 0.0
        %2023 = vmatprep.subr.mxu0 0.0
        %2024 = vmatpush2.xpose.msra.mxu0 0.0
        %2025 = vmatprep.mubr.f32.mxu0 0.0
        %2026 = vmatmul.mubr.f32.gmra.mxu0 %v1945
        %v2027 = vpop.f32.mrf.mxu0
        %v2028 = vadd.f32 0.0, %v2027
        %v2029 = vpop.f32.mrf.mxu0
        %2030 = vmatprep.mubr.f32.mxu0 0.0
        %2031 = vmatmul.mubr.f32.gmra.mxu0 %v1947
        %v2032 = vpop.f32.mrf.mxu0
        %v2033 = vadd.f32 0.0, %v2032
        %v2034 = vpop.f32.mrf.mxu0
        %2035 = vmatprep.mubr.f32.mxu0 0.0
        %2036 = vmatmul.mubr.f32.gmra.mxu0 %v1949
        %v2037 = vpop.f32.mrf.mxu0
        %v2038 = vadd.f32 0.0, %v2037
        %v2039 = vpop.f32.mrf.mxu0
        %2040 = vmatprep.mubr.f32.mxu0 0.0
        %2041 = vmatmul.mubr.f32.gmra.mxu0 %v1951
        %v2042 = vpop.f32.mrf.mxu0
        %v2043 = vadd.f32 0.0, %v2042
        %v2044 = vpop.f32.mrf.mxu0
        %2045 = vdwg.mxu0
        %v2046 = vsel %vm1134, %v2028, -inf
        %2047 = vmax.xlane.f32.xlu0 %v2046
        %v2048 = vpop.xlane.xlu0 %2047
        %v2049 = vsel %vm1134, %v2033, -inf
        %2050 = vmax.xlane.f32.xlu0 %v2049
        %v2051 = vpop.xlane.xlu0 %2050
        %v2052 = vsel %vm1134, %v2038, -inf
        %2053 = vmax.xlane.f32.xlu0 %v2052
        %v2054 = vpop.xlane.xlu0 %2053
        %v2055 = vsel %vm1134, %v2043, -inf
        %2056 = vmax.xlane.f32.xlu0 %v2055
        %v2057 = vpop.xlane.xlu0 %2056
        %v2058 = vsub.f32 %v2028, %v2048
        %v2059 = vsub.f32 %v2033, %v2051
        %v2060 = vsub.f32 %v2038, %v2054
        %v2061 = vsub.f32 %v2043, %v2057
        %v2062 = vmul.f32 %v2058, 1.442695
        %v2063 = vpow.pop %v2062
        %v2064 = vmul.f32 %v2059, 1.442695
        %v2065 = vpow.pop %v2064
        %v2066 = vmul.f32 %v2060, 1.442695
        %v2067 = vpow.pop %v2066
        %v2068 = vmul.f32 %v2061, 1.442695
        %v2069 = vpow.pop %v2068
        %v2070 = vsel %vm1134, %v2063, 0.0
        %2071 = vadd.xlane.f32.xlu0 %v2070
        %v2072 = vpop.xlane.xlu0 %2071
        %v2073 = vsel %vm1134, %v2065, 0.0
        %2074 = vadd.xlane.f32.xlu0 %v2073
        %v2075 = vpop.xlane.xlu0 %2074
        %v2076 = vsel %vm1134, %v2067, 0.0
        %2077 = vadd.xlane.f32.xlu0 %v2076
        %v2078 = vpop.xlane.xlu0 %2077
        %v2079 = vsel %vm1134, %v2069, 0.0
        %2080 = vadd.xlane.f32.xlu0 %v2079
        %v2081 = vpop.xlane.xlu0 %2080
        %v2082 = vrcp.pop %v2072
        %v2083 = vmul.f32 %v2063, %v2082
        %v2084 = vrcp.pop %v2075
        %v2085 = vmul.f32 %v2065, %v2084
        %v2086 = vrcp.pop %v2078
        %v2087 = vmul.f32 %v2067, %v2086
        %v2088 = vrcp.pop %v2081
        %v2089 = vmul.f32 %v2069, %v2088
        %2090 = vrot.lane.b32.xlu0 %v1116, 32
        %v2091 = vpop.permute.xlu0 %2090
        %2092 = vrot.lane.b32.xlu0 %v1121, 32
        %v2093 = vpop.permute.xlu0 %2092
        %2094 = vrot.lane.b32.xlu0 %v1126, 32
        %v2095 = vpop.permute.xlu0 %2094
        %2096 = vrot.lane.b32.xlu0 %v1131, 32
        %v2097 = vpop.permute.xlu0 %2096
        %v2103 = vsel %vm1134, %v2083, 0
        %v2106 = vsel %vm1134, %v2085, 0
        %v2109 = vsel %vm1134, %v2087, 0
        %v2112 = vsel %vm1134, %v2089, 0
        %2114 = vmatprep.subr.mxu0 0.0
        %2115 = vmatpush1.msra.mxu0 0.0
        %2116 = vmatprep.subr.mxu0 0.0
        %2117 = vmatpush1.msra.mxu0 0.0
        %2118 = vmatprep.subr.mxu0 0.0
        %2119 = vmatpush1.msra.mxu0 0.0
        %2120 = vmatprep.subr.mxu0 0.0
        %2121 = vmatpush1.msra.mxu0 0.0
        %2122 = vmatprep.subr.mxu0 0.0
        %2123 = vmatpush1.msra.mxu0 0.0
        %2124 = vmatprep.subr.mxu0 0.0
        %2125 = vmatpush1.msra.mxu0 0.0
        %2126 = vmatprep.subr.mxu0 0.0
        %2127 = vmatpush1.msra.mxu0 0.0
        %2128 = vmatprep.subr.mxu0 0.0
        %2129 = vmatpush1.msra.mxu0 0.0
        %2130 = vmatprep.subr.mxu0 0.0
        %2131 = vmatpush1.msra.mxu0 0.0
        %2132 = vmatprep.subr.mxu0 0.0
        %2133 = vmatpush1.msra.mxu0 0.0
        %2134 = vmatprep.subr.mxu0 0.0
        %2135 = vmatpush1.msra.mxu0 0.0
        %2136 = vmatprep.subr.mxu0 0.0
        %2137 = vmatpush1.msra.mxu0 0.0
        %2138 = vmatprep.subr.mxu0 0.0
        %2139 = vmatpush1.msra.mxu0 %v2097
        %2140 = vmatprep.subr.mxu0 0.0
        %2141 = vmatpush1.msra.mxu0 %v2095
        %2142 = vmatprep.subr.mxu0 0.0
        %2143 = vmatpush1.msra.mxu0 %v2093
        %2144 = vmatprep.subr.mxu0 0.0
        %2145 = vmatpush1.msra.mxu0 %v2091
        %2146 = vmatprep.subr.mxu0 0.0
        %2147 = vmatpush2.msra.mxu0 0.0
        %2148 = vmatprep.subr.mxu0 0.0
        %2149 = vmatpush2.msra.mxu0 0.0
        %2150 = vmatprep.subr.mxu0 0.0
        %2151 = vmatpush2.msra.mxu0 0.0
        %2152 = vmatprep.subr.mxu0 0.0
        %2153 = vmatpush2.msra.mxu0 0.0
        %2154 = vmatprep.subr.mxu0 0.0
        %2155 = vmatpush2.msra.mxu0 0.0
        %2156 = vmatprep.subr.mxu0 0.0
        %2157 = vmatpush2.msra.mxu0 0.0
        %2158 = vmatprep.subr.mxu0 0.0
        %2159 = vmatpush2.msra.mxu0 0.0
        %2160 = vmatprep.subr.mxu0 0.0
        %2161 = vmatpush2.msra.mxu0 0.0
        %2162 = vmatprep.subr.mxu0 0.0
        %2163 = vmatpush2.msra.mxu0 0.0
        %2164 = vmatprep.subr.mxu0 0.0
        %2165 = vmatpush2.msra.mxu0 0.0
        %2166 = vmatprep.subr.mxu0 0.0
        %2167 = vmatpush2.msra.mxu0 0.0
        %2168 = vmatprep.subr.mxu0 0.0
        %2169 = vmatpush2.msra.mxu0 0.0
        %2170 = vmatprep.subr.mxu0 0.0
        %2171 = vmatpush2.msra.mxu0 0.0
        %2172 = vmatprep.subr.mxu0 0.0
        %2173 = vmatpush2.msra.mxu0 0.0
        %2174 = vmatprep.subr.mxu0 0.0
        %2175 = vmatpush2.msra.mxu0 0.0
        %2176 = vmatprep.subr.mxu0 0.0
        %2177 = vmatpush2.msra.mxu0 0.0
        %2178 = vmatprep.mubr.f32.mxu0 0.0
        %2179 = vmatmul.mubr.f32.gmra.mxu0 %v2103
        %v2180 = vpop.f32.mrf.mxu0
        %v2181 = vadd.f32 0.0, %v2180
        %v2182 = vpop.f32.mrf.mxu0
        %2183 = vmatprep.mubr.f32.mxu0 0.0
        %2184 = vmatmul.mubr.f32.gmra.mxu0 %v2106
        %v2185 = vpop.f32.mrf.mxu0
        %v2186 = vadd.f32 0.0, %v2185
        %v2187 = vpop.f32.mrf.mxu0
        %2188 = vmatprep.mubr.f32.mxu0 0.0
        %2189 = vmatmul.mubr.f32.gmra.mxu0 %v2109
        %v2190 = vpop.f32.mrf.mxu0
        %v2191 = vadd.f32 0.0, %v2190
        %v2192 = vpop.f32.mrf.mxu0
        %2193 = vmatprep.mubr.f32.mxu0 0.0
        %2194 = vmatmul.mubr.f32.gmra.mxu0 %v2112
        %v2195 = vpop.f32.mrf.mxu0
        %v2196 = vadd.f32 0.0, %v2195
        %v2197 = vpop.f32.mrf.mxu0
        %2198 = vdwg.mxu0
        %2203 = vrot.lane.b32.xlu0 %v1641, 32
        %v2204 = vpop.permute.xlu0 %2203
        %2205 = vrot.lane.b32.xlu0 %v1646, 32
        %v2206 = vpop.permute.xlu0 %2205
        %2207 = vrot.lane.b32.xlu0 %v1651, 32
        %v2208 = vpop.permute.xlu0 %2207
        %2209 = vrot.lane.b32.xlu0 %v1656, 32
        %v2210 = vpop.permute.xlu0 %2209
        %2219 = vrot.lane.b32.xlu0 %v1911, 64
        %v2220 = vpop.permute.xlu0 %2219
        %2221 = vrot.lane.b32.xlu0 %v1916, 64
        %v2222 = vpop.permute.xlu0 %2221
        %2223 = vrot.lane.b32.xlu0 %v1921, 64
        %v2224 = vpop.permute.xlu0 %2223
        %2225 = vrot.lane.b32.xlu0 %v1926, 64
        %v2226 = vpop.permute.xlu0 %2225
        %2235 = vrot.lane.b32.xlu0 %v2181, 96
        %v2236 = vpop.permute.xlu0 %2235
        %2237 = vrot.lane.b32.xlu0 %v2186, 96
        %v2238 = vpop.permute.xlu0 %2237
        %2239 = vrot.lane.b32.xlu0 %v2191, 96
        %v2240 = vpop.permute.xlu0 %2239
        %2241 = vrot.lane.b32.xlu0 %v2196, 96
        %v2242 = vpop.permute.xlu0 %2241
        %v2247 = vsel %vm1134, %v1367, %v2204
        %v2248 = vsel %vm1134, %v1372, %v2206
        %v2249 = vsel %vm1134, %v1377, %v2208
        %v2250 = vsel %vm1134, %v1382, %v2210
        %vm2251 = vcmask 523264
        %v2252 = vsel %vm2251, %v2247, %v2220
        %v2253 = vsel %vm2251, %v2248, %v2222
        %v2254 = vsel %vm2251, %v2249, %v2224
        %v2255 = vsel %vm2251, %v2250, %v2226
        %vm2256 = vcmask 785408
        %v2257 = vsel %vm2256, %v2252, %v2236
        %v2258 = vsel %vm2256, %v2253, %v2238
        %v2259 = vsel %vm2256, %v2254, %v2240
        %v2260 = vsel %vm2256, %v2255, %v2242
        %v2261 = vld [vmem:[%s673] sm:$0xff]
        %v2262 = vld [vmem:[%s673 + $0x8] sm:$0xff]
        %v2263 = vld [vmem:[%s673 + $0x10] sm:$0xff]
        %v2264 = vld [vmem:[%s673 + $0x18] sm:$0xff]
        %v2265 = vld [vmem:[%s673 + $0x20] sm:$0xff]
        %v2266 = vld [vmem:[%s673 + $0x28] sm:$0xff]
        %v2267 = vld [vmem:[%s673 + $0x30] sm:$0xff]
        %v2268 = vld [vmem:[%s673 + $0x38] sm:$0xff]
        %v2269 = vld [vmem:[%s673 + $0x40] sm:$0xff]
        %v2270 = vld [vmem:[%s673 + $0x48] sm:$0xff]
        %v2271 = vld [vmem:[%s673 + $0x50] sm:$0xff]
        %v2272 = vld [vmem:[%s673 + $0x58] sm:$0xff]
        %v2273 = vld [vmem:[%s673 + $0x60] sm:$0xff]
        %v2274 = vld [vmem:[%s673 + $0x68] sm:$0xff]
        %v2275 = vld [vmem:[%s673 + $0x70] sm:$0xff]
        %v2276 = vld [vmem:[%s673 + $0x78] sm:$0xff]
        %v2277 = vld [vmem:[%s681] sm:$0x1]
        %v2279 = vlaneseq
        %v2280 = vshrl.u32 %v2279, 7
        %v2281 = vsub.s32 0, %v2280
        %v2282 = vrot.slane %v2277, %v2281
        %2284 = vmatprep.subr.mxu0 0.0
        %2285 = vmatpush1.msra.mxu0 %v2276
        %2286 = vmatprep.subr.mxu0 0.0
        %2287 = vmatpush1.msra.mxu0 %v2275
        %2288 = vmatprep.subr.mxu0 0.0
        %2289 = vmatpush1.msra.mxu0 %v2274
        %2290 = vmatprep.subr.mxu0 0.0
        %2291 = vmatpush1.msra.mxu0 %v2273
        %2292 = vmatprep.subr.mxu0 0.0
        %2293 = vmatpush1.msra.mxu0 %v2272
        %2294 = vmatprep.subr.mxu0 0.0
        %2295 = vmatpush1.msra.mxu0 %v2271
        %2296 = vmatprep.subr.mxu0 0.0
        %2297 = vmatpush1.msra.mxu0 %v2270
        %2298 = vmatprep.subr.mxu0 0.0
        %2299 = vmatpush1.msra.mxu0 %v2269
        %2300 = vmatprep.subr.mxu0 0.0
        %2301 = vmatpush1.msra.mxu0 %v2268
        %2302 = vmatprep.subr.mxu0 0.0
        %2303 = vmatpush1.msra.mxu0 %v2267
        %2304 = vmatprep.subr.mxu0 0.0
        %2305 = vmatpush1.msra.mxu0 %v2266
        %2306 = vmatprep.subr.mxu0 0.0
        %2307 = vmatpush1.msra.mxu0 %v2265
        %2308 = vmatprep.subr.mxu0 0.0
        %2309 = vmatpush1.msra.mxu0 %v2264
        %2310 = vmatprep.subr.mxu0 0.0
        %2311 = vmatpush1.msra.mxu0 %v2263
        %2312 = vmatprep.subr.mxu0 0.0
        %2313 = vmatpush1.msra.mxu0 %v2262
        %2314 = vmatprep.subr.mxu0 0.0
        %2315 = vmatpush1.msra.mxu0 %v2261
        %2316 = vmatprep.subr.mxu0 0.0
        %2317 = vmatpush2.msra.mxu0 0.0
        %2318 = vmatprep.subr.mxu0 0.0
        %2319 = vmatpush2.msra.mxu0 0.0
        %2320 = vmatprep.subr.mxu0 0.0
        %2321 = vmatpush2.msra.mxu0 0.0
        %2322 = vmatprep.subr.mxu0 0.0
        %2323 = vmatpush2.msra.mxu0 0.0
        %2324 = vmatprep.subr.mxu0 0.0
        %2325 = vmatpush2.msra.mxu0 0.0
        %2326 = vmatprep.subr.mxu0 0.0
        %2327 = vmatpush2.msra.mxu0 0.0
        %2328 = vmatprep.subr.mxu0 0.0
        %2329 = vmatpush2.msra.mxu0 0.0
        %2330 = vmatprep.subr.mxu0 0.0
        %2331 = vmatpush2.msra.mxu0 0.0
        %2332 = vmatprep.subr.mxu0 0.0
        %2333 = vmatpush2.msra.mxu0 0.0
        %2334 = vmatprep.subr.mxu0 0.0
        %2335 = vmatpush2.msra.mxu0 0.0
        %2336 = vmatprep.subr.mxu0 0.0
        %2337 = vmatpush2.msra.mxu0 0.0
        %2338 = vmatprep.subr.mxu0 0.0
        %2339 = vmatpush2.msra.mxu0 0.0
        %2340 = vmatprep.subr.mxu0 0.0
        %2341 = vmatpush2.msra.mxu0 0.0
        %2342 = vmatprep.subr.mxu0 0.0
        %2343 = vmatpush2.msra.mxu0 0.0
        %2344 = vmatprep.subr.mxu0 0.0
        %2345 = vmatpush2.msra.mxu0 0.0
        %2346 = vmatprep.subr.mxu0 0.0
        %2347 = vmatpush2.msra.mxu0 0.0
        %2348 = vmatprep.mubr.f32.mxu0 0.0
        %2349 = vmatmul.mubr.f32.gmra.mxu0 %v2257
        %v2350 = vpop.f32.mrf.mxu0
        %v2351 = vadd.f32 %v2282, %v2350
        %v2352 = vpop.f32.mrf.mxu0
        %2353 = vmatprep.mubr.f32.mxu0 0.0
        %2354 = vmatmul.mubr.f32.gmra.mxu0 %v2258
        %v2355 = vpop.f32.mrf.mxu0
        %v2356 = vadd.f32 %v2282, %v2355
        %v2357 = vpop.f32.mrf.mxu0
        %2358 = vmatprep.mubr.f32.mxu0 0.0
        %2359 = vmatmul.mubr.f32.gmra.mxu0 %v2259
        %v2360 = vpop.f32.mrf.mxu0
        %v2361 = vadd.f32 %v2282, %v2360
        %v2362 = vpop.f32.mrf.mxu0
        %2363 = vmatprep.mubr.f32.mxu0 0.0
        %2364 = vmatmul.mubr.f32.gmra.mxu0 %v2260
        %v2365 = vpop.f32.mrf.mxu0
        %v2366 = vadd.f32 %v2282, %v2365
        %v2367 = vpop.f32.mrf.mxu0
        %2368 = vdwg.mxu0
        %v2369 = vadd.f32 %v841, %v2351
        %v2370 = vadd.f32 %v842, %v2356
        %v2371 = vadd.f32 %v843, %v2361
        %v2372 = vadd.f32 %v844, %v2366
        %v2373 = vld [vmem:[%s817] sm:$0x1]
        %v2374 = vld [vmem:[%s820] sm:$0x1]
        %2375 = vadd.xlane.f32.xlu0 %v2369
        %v2376 = vpop.xlane.xlu0 %2375
        %2377 = vadd.xlane.f32.xlu0 %v2370
        %v2378 = vpop.xlane.xlu0 %2377
        %2379 = vadd.xlane.f32.xlu0 %v2371
        %v2380 = vpop.xlane.xlu0 %2379
        %2381 = vadd.xlane.f32.xlu0 %v2372
        %v2382 = vpop.xlane.xlu0 %2381
        %v2383 = vmul.f32 %v2376, %v855
        %v2384 = vmul.f32 %v2378, %v855
        %v2385 = vmul.f32 %v2380, %v855
        %v2386 = vmul.f32 %v2382, %v855
        %v2387 = vsub.f32 %v2369, %v2383
        %v2388 = vsub.f32 %v2370, %v2384
        %v2389 = vsub.f32 %v2371, %v2385
        %v2390 = vsub.f32 %v2372, %v2386
        %v2391 = vmul.f32 %v2387, %v2387
        %v2392 = vmul.f32 %v2388, %v2388
        %v2393 = vmul.f32 %v2389, %v2389
        %v2394 = vmul.f32 %v2390, %v2390
        %2395 = vadd.xlane.f32.xlu0 %v2391
        %v2396 = vpop.xlane.xlu0 %2395
        %2397 = vadd.xlane.f32.xlu0 %v2392
        %v2398 = vpop.xlane.xlu0 %2397
        %2399 = vadd.xlane.f32.xlu0 %v2393
        %v2400 = vpop.xlane.xlu0 %2399
        %2401 = vadd.xlane.f32.xlu0 %v2394
        %v2402 = vpop.xlane.xlu0 %2401
        %v2403 = vmul.f32 %v2396, %v855
        %v2404 = vmul.f32 %v2398, %v855
        %v2405 = vmul.f32 %v2400, %v855
        %v2406 = vmul.f32 %v2402, %v855
        %v2407 = vadd.f32 %v2403, 1e-05
        %v2408 = vadd.f32 %v2404, 1e-05
        %v2409 = vadd.f32 %v2405, 1e-05
        %v2410 = vadd.f32 %v2406, 1e-05
        %v2411 = vrsqrt.pop %v2407
        %v2412 = vrsqrt.pop %v2408
        %v2413 = vrsqrt.pop %v2409
        %v2414 = vrsqrt.pop %v2410
        %v2415 = vmul.f32 %v2387, %v2411
        %v2416 = vmul.f32 %v2388, %v2412
        %v2417 = vmul.f32 %v2389, %v2413
        %v2418 = vmul.f32 %v2390, %v2414
        %v2420 = vlaneseq
        %v2421 = vshrl.u32 %v2420, 7
        %v2422 = vsub.s32 0, %v2421
        %v2423 = vrot.slane %v2373, %v2422
        %v2425 = vmul.f32 %v2415, %v2423
        %v2426 = vmul.f32 %v2416, %v2423
        %v2427 = vmul.f32 %v2417, %v2423
        %v2428 = vmul.f32 %v2418, %v2423
        %v2430 = vlaneseq
        %v2431 = vshrl.u32 %v2430, 7
        %v2432 = vsub.s32 0, %v2431
        %v2433 = vrot.slane %v2374, %v2432
        %v2435 = vadd.f32 %v2425, %v2433
        %v2436 = vadd.f32 %v2426, %v2433
        %v2437 = vadd.f32 %v2427, %v2433
        %v2438 = vadd.f32 %v2428, %v2433
        %v2439 = vld [vmem:[%s690] sm:$0xff]
        %v2440 = vld [vmem:[%s690 + $0x8] sm:$0xff]
        %v2441 = vld [vmem:[%s690 + $0x10] sm:$0xff]
        %v2442 = vld [vmem:[%s690 + $0x18] sm:$0xff]
        %v2443 = vld [vmem:[%s690 + $0x20] sm:$0xff]
        %v2444 = vld [vmem:[%s690 + $0x28] sm:$0xff]
        %v2445 = vld [vmem:[%s690 + $0x30] sm:$0xff]
        %v2446 = vld [vmem:[%s690 + $0x38] sm:$0xff]
        %v2447 = vld [vmem:[%s690 + $0x40] sm:$0xff]
        %v2448 = vld [vmem:[%s690 + $0x48] sm:$0xff]
        %v2449 = vld [vmem:[%s690 + $0x50] sm:$0xff]
        %v2450 = vld [vmem:[%s690 + $0x58] sm:$0xff]
        %v2451 = vld [vmem:[%s690 + $0x60] sm:$0xff]
        %v2452 = vld [vmem:[%s690 + $0x68] sm:$0xff]
        %v2453 = vld [vmem:[%s690 + $0x70] sm:$0xff]
        %v2454 = vld [vmem:[%s690 + $0x78] sm:$0xff]
        %v2455 = vld [vmem:[%s690 + $0x80] sm:$0xff]
        %v2456 = vld [vmem:[%s690 + $0x88] sm:$0xff]
        %v2457 = vld [vmem:[%s690 + $0x90] sm:$0xff]
        %v2458 = vld [vmem:[%s690 + $0x98] sm:$0xff]
        %v2459 = vld [vmem:[%s690 + $0xa0] sm:$0xff]
        %v2460 = vld [vmem:[%s690 + $0xa8] sm:$0xff]
        %v2461 = vld [vmem:[%s690 + $0xb0] sm:$0xff]
        %v2462 = vld [vmem:[%s690 + $0xb8] sm:$0xff]
        %v2463 = vld [vmem:[%s690 + $0xc0] sm:$0xff]
        %v2464 = vld [vmem:[%s690 + $0xc8] sm:$0xff]
        %v2465 = vld [vmem:[%s690 + $0xd0] sm:$0xff]
        %v2466 = vld [vmem:[%s690 + $0xd8] sm:$0xff]
        %v2467 = vld [vmem:[%s690 + $0xe0] sm:$0xff]
        %v2468 = vld [vmem:[%s690 + $0xe8] sm:$0xff]
        %v2469 = vld [vmem:[%s690 + $0xf0] sm:$0xff]
        %v2470 = vld [vmem:[%s690 + $0xf8] sm:$0xff]
        %v2471 = vld [vmem:[%s690 + $0x100] sm:$0xff]
        %v2472 = vld [vmem:[%s690 + $0x108] sm:$0xff]
        %v2473 = vld [vmem:[%s690 + $0x110] sm:$0xff]
        %v2474 = vld [vmem:[%s690 + $0x118] sm:$0xff]
        %v2475 = vld [vmem:[%s690 + $0x120] sm:$0xff]
        %v2476 = vld [vmem:[%s690 + $0x128] sm:$0xff]
        %v2477 = vld [vmem:[%s690 + $0x130] sm:$0xff]
        %v2478 = vld [vmem:[%s690 + $0x138] sm:$0xff]
        %v2479 = vld [vmem:[%s690 + $0x140] sm:$0xff]
        %v2480 = vld [vmem:[%s690 + $0x148] sm:$0xff]
        %v2481 = vld [vmem:[%s690 + $0x150] sm:$0xff]
        %v2482 = vld [vmem:[%s690 + $0x158] sm:$0xff]
        %v2483 = vld [vmem:[%s690 + $0x160] sm:$0xff]
        %v2484 = vld [vmem:[%s690 + $0x168] sm:$0xff]
        %v2485 = vld [vmem:[%s690 + $0x170] sm:$0xff]
        %v2486 = vld [vmem:[%s690 + $0x178] sm:$0xff]
        %v2487 = vld [vmem:[%s690 + $0x180] sm:$0xff]
        %v2488 = vld [vmem:[%s690 + $0x188] sm:$0xff]
        %v2489 = vld [vmem:[%s690 + $0x190] sm:$0xff]
        %v2490 = vld [vmem:[%s690 + $0x198] sm:$0xff]
        %v2491 = vld [vmem:[%s690 + $0x1a0] sm:$0xff]
        %v2492 = vld [vmem:[%s690 + $0x1a8] sm:$0xff]
        %v2493 = vld [vmem:[%s690 + $0x1b0] sm:$0xff]
        %v2494 = vld [vmem:[%s690 + $0x1b8] sm:$0xff]
        %v2495 = vld [vmem:[%s690 + $0x1c0] sm:$0xff]
        %v2496 = vld [vmem:[%s690 + $0x1c8] sm:$0xff]
        %v2497 = vld [vmem:[%s690 + $0x1d0] sm:$0xff]
        %v2498 = vld [vmem:[%s690 + $0x1d8] sm:$0xff]
        %v2499 = vld [vmem:[%s690 + $0x1e0] sm:$0xff]
        %v2500 = vld [vmem:[%s690 + $0x1e8] sm:$0xff]
        %v2501 = vld [vmem:[%s690 + $0x1f0] sm:$0xff]
        %v2502 = vld [vmem:[%s690 + $0x1f8] sm:$0xff]
        %v2503 = vld [vmem:[%s699] sm:$0xf]
        %v2505 = vlaneseq
        %v2506 = vshrl.u32 %v2505, 7
        %v2507 = vsub.s32 0, %v2506
        %v2508 = vrot.slane %v2503, %v2507
        %v2509 = vlaneseq
        %v2510 = vshrl.u32 %v2509, 7
        %v2511 = vsub.s32 1, %v2510
        %v2512 = vrot.slane %v2503, %v2511
        %v2513 = vlaneseq
        %v2514 = vshrl.u32 %v2513, 7
        %v2515 = vsub.s32 2, %v2514
        %v2516 = vrot.slane %v2503, %v2515
        %v2517 = vlaneseq
        %v2518 = vshrl.u32 %v2517, 7
        %v2519 = vsub.s32 3, %v2518
        %v2520 = vrot.slane %v2503, %v2519
        %2525 = vmatprep.subr.mxu0 %v2500
        %2526 = vmatpush1.msra.mxu0 %v2499
        %2527 = vmatprep.subr.mxu0 %v2496
        %2528 = vmatpush1.msra.mxu0 %v2495
        %2529 = vmatprep.subr.mxu0 %v2492
        %2530 = vmatpush1.msra.mxu0 %v2491
        %2531 = vmatprep.subr.mxu0 %v2488
        %2532 = vmatpush1.msra.mxu0 %v2487
        %2533 = vmatprep.subr.mxu0 %v2484
        %2534 = vmatpush1.msra.mxu0 %v2483
        %2535 = vmatprep.subr.mxu0 %v2480
        %2536 = vmatpush1.msra.mxu0 %v2479
        %2537 = vmatprep.subr.mxu0 %v2476
        %2538 = vmatpush1.msra.mxu0 %v2475
        %2539 = vmatprep.subr.mxu0 %v2472
        %2540 = vmatpush1.msra.mxu0 %v2471
        %2541 = vmatprep.subr.mxu0 %v2468
        %2542 = vmatpush1.msra.mxu0 %v2467
        %2543 = vmatprep.subr.mxu0 %v2464
        %2544 = vmatpush1.msra.mxu0 %v2463
        %2545 = vmatprep.subr.mxu0 %v2460
        %2546 = vmatpush1.msra.mxu0 %v2459
        %2547 = vmatprep.subr.mxu0 %v2456
        %2548 = vmatpush1.msra.mxu0 %v2455
        %2549 = vmatprep.subr.mxu0 %v2452
        %2550 = vmatpush1.msra.mxu0 %v2451
        %2551 = vmatprep.subr.mxu0 %v2448
        %2552 = vmatpush1.msra.mxu0 %v2447
        %2553 = vmatprep.subr.mxu0 %v2444
        %2554 = vmatpush1.msra.mxu0 %v2443
        %2555 = vmatprep.subr.mxu0 %v2440
        %2556 = vmatpush1.msra.mxu0 %v2439
        %2557 = vmatprep.subr.mxu0 0.0
        %2558 = vmatpush2.msra.mxu0 0.0
        %2559 = vmatprep.subr.mxu0 0.0
        %2560 = vmatpush2.msra.mxu0 0.0
        %2561 = vmatprep.subr.mxu0 0.0
        %2562 = vmatpush2.msra.mxu0 0.0
        %2563 = vmatprep.subr.mxu0 0.0
        %2564 = vmatpush2.msra.mxu0 0.0
        %2565 = vmatprep.subr.mxu0 0.0
        %2566 = vmatpush2.msra.mxu0 0.0
        %2567 = vmatprep.subr.mxu0 0.0
        %2568 = vmatpush2.msra.mxu0 0.0
        %2569 = vmatprep.subr.mxu0 0.0
        %2570 = vmatpush2.msra.mxu0 0.0
        %2571 = vmatprep.subr.mxu0 0.0
        %2572 = vmatpush2.msra.mxu0 0.0
        %2573 = vmatprep.subr.mxu0 0.0
        %2574 = vmatpush2.msra.mxu0 0.0
        %2575 = vmatprep.subr.mxu0 0.0
        %2576 = vmatpush2.msra.mxu0 0.0
        %2577 = vmatprep.subr.mxu0 0.0
        %2578 = vmatpush2.msra.mxu0 0.0
        %2579 = vmatprep.subr.mxu0 0.0
        %2580 = vmatpush2.msra.mxu0 0.0
        %2581 = vmatprep.subr.mxu0 0.0
        %2582 = vmatpush2.msra.mxu0 0.0
        %2583 = vmatprep.subr.mxu0 0.0
        %2584 = vmatpush2.msra.mxu0 0.0
        %2585 = vmatprep.subr.mxu0 0.0
        %2586 = vmatpush2.msra.mxu0 0.0
        %2587 = vmatprep.subr.mxu0 0.0
        %2588 = vmatpush2.msra.mxu0 0.0
        %2589 = vmatprep.mubr.f32.mxu0 0.0
        %2590 = vmatmul.mubr.f32.gmra.mxu0 %v2435
        %v2591 = vpop.f32.mrf.mxu0
        %v2592 = vadd.f32 %v2508, %v2591
        %v2593 = vpop.f32.mrf.mxu0
        %v2594 = vadd.f32 %v2512, %v2593
        %2595 = vmatprep.mubr.f32.mxu0 0.0
        %2596 = vmatmul.mubr.f32.gmra.mxu0 %v2436
        %v2597 = vpop.f32.mrf.mxu0
        %v2598 = vadd.f32 %v2508, %v2597
        %v2599 = vpop.f32.mrf.mxu0
        %v2600 = vadd.f32 %v2512, %v2599
        %2601 = vmatprep.mubr.f32.mxu0 0.0
        %2602 = vmatmul.mubr.f32.gmra.mxu0 %v2437
        %v2603 = vpop.f32.mrf.mxu0
        %v2604 = vadd.f32 %v2508, %v2603
        %v2605 = vpop.f32.mrf.mxu0
        %v2606 = vadd.f32 %v2512, %v2605
        %2607 = vmatprep.mubr.f32.mxu0 0.0
        %2608 = vmatmul.mubr.f32.gmra.mxu0 %v2438
        %v2609 = vpop.f32.mrf.mxu0
        %v2610 = vadd.f32 %v2508, %v2609
        %v2611 = vpop.f32.mrf.mxu0
        %v2612 = vadd.f32 %v2512, %v2611
        %2613 = vdwg.mxu0
        %2614 = vmatprep.subr.mxu0 %v2502
        %2615 = vmatpush1.msra.mxu0 %v2501
        %2616 = vmatprep.subr.mxu0 %v2498
        %2617 = vmatpush1.msra.mxu0 %v2497
        %2618 = vmatprep.subr.mxu0 %v2494
        %2619 = vmatpush1.msra.mxu0 %v2493
        %2620 = vmatprep.subr.mxu0 %v2490
        %2621 = vmatpush1.msra.mxu0 %v2489
        %2622 = vmatprep.subr.mxu0 %v2486
        %2623 = vmatpush1.msra.mxu0 %v2485
        %2624 = vmatprep.subr.mxu0 %v2482
        %2625 = vmatpush1.msra.mxu0 %v2481
        %2626 = vmatprep.subr.mxu0 %v2478
        %2627 = vmatpush1.msra.mxu0 %v2477
        %2628 = vmatprep.subr.mxu0 %v2474
        %2629 = vmatpush1.msra.mxu0 %v2473
        %2630 = vmatprep.subr.mxu0 %v2470
        %2631 = vmatpush1.msra.mxu0 %v2469
        %2632 = vmatprep.subr.mxu0 %v2466
        %2633 = vmatpush1.msra.mxu0 %v2465
        %2634 = vmatprep.subr.mxu0 %v2462
        %2635 = vmatpush1.msra.mxu0 %v2461
        %2636 = vmatprep.subr.mxu0 %v2458
        %2637 = vmatpush1.msra.mxu0 %v2457
        %2638 = vmatprep.subr.mxu0 %v2454
        %2639 = vmatpush1.msra.mxu0 %v2453
        %2640 = vmatprep.subr.mxu0 %v2450
        %2641 = vmatpush1.msra.mxu0 %v2449
        %2642 = vmatprep.subr.mxu0 %v2446
        %2643 = vmatpush1.msra.mxu0 %v2445
        %2644 = vmatprep.subr.mxu0 %v2442
        %2645 = vmatpush1.msra.mxu0 %v2441
        %2646 = vmatprep.subr.mxu0 0.0
        %2647 = vmatpush2.msra.mxu0 0.0
        %2648 = vmatprep.subr.mxu0 0.0
        %2649 = vmatpush2.msra.mxu0 0.0
        %2650 = vmatprep.subr.mxu0 0.0
        %2651 = vmatpush2.msra.mxu0 0.0
        %2652 = vmatprep.subr.mxu0 0.0
        %2653 = vmatpush2.msra.mxu0 0.0
        %2654 = vmatprep.subr.mxu0 0.0
        %2655 = vmatpush2.msra.mxu0 0.0
        %2656 = vmatprep.subr.mxu0 0.0
        %2657 = vmatpush2.msra.mxu0 0.0
        %2658 = vmatprep.subr.mxu0 0.0
        %2659 = vmatpush2.msra.mxu0 0.0
        %2660 = vmatprep.subr.mxu0 0.0
        %2661 = vmatpush2.msra.mxu0 0.0
        %2662 = vmatprep.subr.mxu0 0.0
        %2663 = vmatpush2.msra.mxu0 0.0
        %2664 = vmatprep.subr.mxu0 0.0
        %2665 = vmatpush2.msra.mxu0 0.0
        %2666 = vmatprep.subr.mxu0 0.0
        %2667 = vmatpush2.msra.mxu0 0.0
        %2668 = vmatprep.subr.mxu0 0.0
        %2669 = vmatpush2.msra.mxu0 0.0
        %2670 = vmatprep.subr.mxu0 0.0
        %2671 = vmatpush2.msra.mxu0 0.0
        %2672 = vmatprep.subr.mxu0 0.0
        %2673 = vmatpush2.msra.mxu0 0.0
        %2674 = vmatprep.subr.mxu0 0.0
        %2675 = vmatpush2.msra.mxu0 0.0
        %2676 = vmatprep.subr.mxu0 0.0
        %2677 = vmatpush2.msra.mxu0 0.0
        %2678 = vmatprep.mubr.f32.mxu0 0.0
        %2679 = vmatmul.mubr.f32.gmra.mxu0 %v2435
        %v2680 = vpop.f32.mrf.mxu0
        %v2681 = vadd.f32 %v2516, %v2680
        %v2682 = vpop.f32.mrf.mxu0
        %v2683 = vadd.f32 %v2520, %v2682
        %2684 = vmatprep.mubr.f32.mxu0 0.0
        %2685 = vmatmul.mubr.f32.gmra.mxu0 %v2436
        %v2686 = vpop.f32.mrf.mxu0
        %v2687 = vadd.f32 %v2516, %v2686
        %v2688 = vpop.f32.mrf.mxu0
        %v2689 = vadd.f32 %v2520, %v2688
        %2690 = vmatprep.mubr.f32.mxu0 0.0
        %2691 = vmatmul.mubr.f32.gmra.mxu0 %v2437
        %v2692 = vpop.f32.mrf.mxu0
        %v2693 = vadd.f32 %v2516, %v2692
        %v2694 = vpop.f32.mrf.mxu0
        %v2695 = vadd.f32 %v2520, %v2694
        %2696 = vmatprep.mubr.f32.mxu0 0.0
        %2697 = vmatmul.mubr.f32.gmra.mxu0 %v2438
        %v2698 = vpop.f32.mrf.mxu0
        %v2699 = vadd.f32 %v2516, %v2698
        %v2700 = vpop.f32.mrf.mxu0
        %v2701 = vadd.f32 %v2520, %v2700
        %2702 = vdwg.mxu0
        %v2703 = vmul.f32 %v2592, 0.5
        %v2704 = vmul.f32 %v2594, 0.5
        %v2705 = vmul.f32 %v2681, 0.5
        %v2706 = vmul.f32 %v2683, 0.5
        %v2707 = vmul.f32 %v2598, 0.5
        %v2708 = vmul.f32 %v2600, 0.5
        %v2709 = vmul.f32 %v2687, 0.5
        %v2710 = vmul.f32 %v2689, 0.5
        %v2711 = vmul.f32 %v2604, 0.5
        %v2712 = vmul.f32 %v2606, 0.5
        %v2713 = vmul.f32 %v2693, 0.5
        %v2714 = vmul.f32 %v2695, 0.5
        %v2715 = vmul.f32 %v2610, 0.5
        %v2716 = vmul.f32 %v2612, 0.5
        %v2717 = vmul.f32 %v2699, 0.5
        %v2718 = vmul.f32 %v2701, 0.5
        %v2719 = vmul.f32 %v2592, 0.70710677
        %v2720 = vmul.f32 %v2594, 0.70710677
        %v2721 = vmul.f32 %v2681, 0.70710677
        %v2722 = vmul.f32 %v2683, 0.70710677
        %v2723 = vmul.f32 %v2598, 0.70710677
        %v2724 = vmul.f32 %v2600, 0.70710677
        %v2725 = vmul.f32 %v2687, 0.70710677
        %v2726 = vmul.f32 %v2689, 0.70710677
        %v2727 = vmul.f32 %v2604, 0.70710677
        %v2728 = vmul.f32 %v2606, 0.70710677
        %v2729 = vmul.f32 %v2693, 0.70710677
        %v2730 = vmul.f32 %v2695, 0.70710677
        %v2731 = vmul.f32 %v2610, 0.70710677
        %v2732 = vmul.f32 %v2612, 0.70710677
        %v2733 = vmul.f32 %v2699, 0.70710677
        %v2734 = vmul.f32 %v2701, 0.70710677
        %v2735 = verf.f32.pop %v2719
        %v2736 = verf.f32.pop %v2720
        %v2737 = verf.f32.pop %v2721
        %v2738 = verf.f32.pop %v2722
        %v2739 = verf.f32.pop %v2723
        %v2740 = verf.f32.pop %v2724
        %v2741 = verf.f32.pop %v2725
        %v2742 = verf.f32.pop %v2726
        %v2743 = verf.f32.pop %v2727
        %v2744 = verf.f32.pop %v2728
        %v2745 = verf.f32.pop %v2729
        %v2746 = verf.f32.pop %v2730
        %v2747 = verf.f32.pop %v2731
        %v2748 = verf.f32.pop %v2732
        %v2749 = verf.f32.pop %v2733
        %v2750 = verf.f32.pop %v2734
        %v2751 = vadd.f32 %v2735, 1.0
        %v2752 = vadd.f32 %v2736, 1.0
        %v2753 = vadd.f32 %v2737, 1.0
        %v2754 = vadd.f32 %v2738, 1.0
        %v2755 = vadd.f32 %v2739, 1.0
        %v2756 = vadd.f32 %v2740, 1.0
        %v2757 = vadd.f32 %v2741, 1.0
        %v2758 = vadd.f32 %v2742, 1.0
        %v2759 = vadd.f32 %v2743, 1.0
        %v2760 = vadd.f32 %v2744, 1.0
        %v2761 = vadd.f32 %v2745, 1.0
        %v2762 = vadd.f32 %v2746, 1.0
        %v2763 = vadd.f32 %v2747, 1.0
        %v2764 = vadd.f32 %v2748, 1.0
        %v2765 = vadd.f32 %v2749, 1.0
        %v2766 = vadd.f32 %v2750, 1.0
        %v2767 = vmul.f32 %v2703, %v2751
        %v2768 = vmul.f32 %v2704, %v2752
        %v2769 = vmul.f32 %v2705, %v2753
        %v2770 = vmul.f32 %v2706, %v2754
        %v2771 = vmul.f32 %v2707, %v2755
        %v2772 = vmul.f32 %v2708, %v2756
        %v2773 = vmul.f32 %v2709, %v2757
        %v2774 = vmul.f32 %v2710, %v2758
        %v2775 = vmul.f32 %v2711, %v2759
        %v2776 = vmul.f32 %v2712, %v2760
        %v2777 = vmul.f32 %v2713, %v2761
        %v2778 = vmul.f32 %v2714, %v2762
        %v2779 = vmul.f32 %v2715, %v2763
        %v2780 = vmul.f32 %v2716, %v2764
        %v2781 = vmul.f32 %v2717, %v2765
        %v2782 = vmul.f32 %v2718, %v2766
        %v2783 = vld [vmem:[%s708] sm:$0xff]
        %v2784 = vld [vmem:[%s708 + $0x8] sm:$0xff]
        %v2785 = vld [vmem:[%s708 + $0x10] sm:$0xff]
        %v2786 = vld [vmem:[%s708 + $0x18] sm:$0xff]
        %v2787 = vld [vmem:[%s708 + $0x20] sm:$0xff]
        %v2788 = vld [vmem:[%s708 + $0x28] sm:$0xff]
        %v2789 = vld [vmem:[%s708 + $0x30] sm:$0xff]
        %v2790 = vld [vmem:[%s708 + $0x38] sm:$0xff]
        %v2791 = vld [vmem:[%s708 + $0x40] sm:$0xff]
        %v2792 = vld [vmem:[%s708 + $0x48] sm:$0xff]
        %v2793 = vld [vmem:[%s708 + $0x50] sm:$0xff]
        %v2794 = vld [vmem:[%s708 + $0x58] sm:$0xff]
        %v2795 = vld [vmem:[%s708 + $0x60] sm:$0xff]
        %v2796 = vld [vmem:[%s708 + $0x68] sm:$0xff]
        %v2797 = vld [vmem:[%s708 + $0x70] sm:$0xff]
        %v2798 = vld [vmem:[%s708 + $0x78] sm:$0xff]
        %v2799 = vld [vmem:[%s708 + $0x80] sm:$0xff]
        %v2800 = vld [vmem:[%s708 + $0x88] sm:$0xff]
        %v2801 = vld [vmem:[%s708 + $0x90] sm:$0xff]
        %v2802 = vld [vmem:[%s708 + $0x98] sm:$0xff]
        %v2803 = vld [vmem:[%s708 + $0xa0] sm:$0xff]
        %v2804 = vld [vmem:[%s708 + $0xa8] sm:$0xff]
        %v2805 = vld [vmem:[%s708 + $0xb0] sm:$0xff]
        %v2806 = vld [vmem:[%s708 + $0xb8] sm:$0xff]
        %v2807 = vld [vmem:[%s708 + $0xc0] sm:$0xff]
        %v2808 = vld [vmem:[%s708 + $0xc8] sm:$0xff]
        %v2809 = vld [vmem:[%s708 + $0xd0] sm:$0xff]
        %v2810 = vld [vmem:[%s708 + $0xd8] sm:$0xff]
        %v2811 = vld [vmem:[%s708 + $0xe0] sm:$0xff]
        %v2812 = vld [vmem:[%s708 + $0xe8] sm:$0xff]
        %v2813 = vld [vmem:[%s708 + $0xf0] sm:$0xff]
        %v2814 = vld [vmem:[%s708 + $0xf8] sm:$0xff]
        %v2815 = vld [vmem:[%s708 + $0x100] sm:$0xff]
        %v2816 = vld [vmem:[%s708 + $0x108] sm:$0xff]
        %v2817 = vld [vmem:[%s708 + $0x110] sm:$0xff]
        %v2818 = vld [vmem:[%s708 + $0x118] sm:$0xff]
        %v2819 = vld [vmem:[%s708 + $0x120] sm:$0xff]
        %v2820 = vld [vmem:[%s708 + $0x128] sm:$0xff]
        %v2821 = vld [vmem:[%s708 + $0x130] sm:$0xff]
        %v2822 = vld [vmem:[%s708 + $0x138] sm:$0xff]
        %v2823 = vld [vmem:[%s708 + $0x140] sm:$0xff]
        %v2824 = vld [vmem:[%s708 + $0x148] sm:$0xff]
        %v2825 = vld [vmem:[%s708 + $0x150] sm:$0xff]
        %v2826 = vld [vmem:[%s708 + $0x158] sm:$0xff]
        %v2827 = vld [vmem:[%s708 + $0x160] sm:$0xff]
        %v2828 = vld [vmem:[%s708 + $0x168] sm:$0xff]
        %v2829 = vld [vmem:[%s708 + $0x170] sm:$0xff]
        %v2830 = vld [vmem:[%s708 + $0x178] sm:$0xff]
        %v2831 = vld [vmem:[%s708 + $0x180] sm:$0xff]
        %v2832 = vld [vmem:[%s708 + $0x188] sm:$0xff]
        %v2833 = vld [vmem:[%s708 + $0x190] sm:$0xff]
        %v2834 = vld [vmem:[%s708 + $0x198] sm:$0xff]
        %v2835 = vld [vmem:[%s708 + $0x1a0] sm:$0xff]
        %v2836 = vld [vmem:[%s708 + $0x1a8] sm:$0xff]
        %v2837 = vld [vmem:[%s708 + $0x1b0] sm:$0xff]
        %v2838 = vld [vmem:[%s708 + $0x1b8] sm:$0xff]
        %v2839 = vld [vmem:[%s708 + $0x1c0] sm:$0xff]
        %v2840 = vld [vmem:[%s708 + $0x1c8] sm:$0xff]
        %v2841 = vld [vmem:[%s708 + $0x1d0] sm:$0xff]
        %v2842 = vld [vmem:[%s708 + $0x1d8] sm:$0xff]
        %v2843 = vld [vmem:[%s708 + $0x1e0] sm:$0xff]
        %v2844 = vld [vmem:[%s708 + $0x1e8] sm:$0xff]
        %v2845 = vld [vmem:[%s708 + $0x1f0] sm:$0xff]
        %v2846 = vld [vmem:[%s708 + $0x1f8] sm:$0xff]
        %v2847 = vld [vmem:[%s716] sm:$0x1]
        %v2849 = vlaneseq
        %v2850 = vshrl.u32 %v2849, 7
        %v2851 = vsub.s32 0, %v2850
        %v2852 = vrot.slane %v2847, %v2851
        %2854 = vmatprep.subr.mxu0 0.0
        %2855 = vmatpush1.msra.mxu0 %v2798
        %2856 = vmatprep.subr.mxu0 0.0
        %2857 = vmatpush1.msra.mxu0 %v2797
        %2858 = vmatprep.subr.mxu0 0.0
        %2859 = vmatpush1.msra.mxu0 %v2796
        %2860 = vmatprep.subr.mxu0 0.0
        %2861 = vmatpush1.msra.mxu0 %v2795
        %2862 = vmatprep.subr.mxu0 0.0
        %2863 = vmatpush1.msra.mxu0 %v2794
        %2864 = vmatprep.subr.mxu0 0.0
        %2865 = vmatpush1.msra.mxu0 %v2793
        %2866 = vmatprep.subr.mxu0 0.0
        %2867 = vmatpush1.msra.mxu0 %v2792
        %2868 = vmatprep.subr.mxu0 0.0
        %2869 = vmatpush1.msra.mxu0 %v2791
        %2870 = vmatprep.subr.mxu0 0.0
        %2871 = vmatpush1.msra.mxu0 %v2790
        %2872 = vmatprep.subr.mxu0 0.0
        %2873 = vmatpush1.msra.mxu0 %v2789
        %2874 = vmatprep.subr.mxu0 0.0
        %2875 = vmatpush1.msra.mxu0 %v2788
        %2876 = vmatprep.subr.mxu0 0.0
        %2877 = vmatpush1.msra.mxu0 %v2787
        %2878 = vmatprep.subr.mxu0 0.0
        %2879 = vmatpush1.msra.mxu0 %v2786
        %2880 = vmatprep.subr.mxu0 0.0
        %2881 = vmatpush1.msra.mxu0 %v2785
        %2882 = vmatprep.subr.mxu0 0.0
        %2883 = vmatpush1.msra.mxu0 %v2784
        %2884 = vmatprep.subr.mxu0 0.0
        %2885 = vmatpush1.msra.mxu0 %v2783
        %2886 = vmatprep.subr.mxu0 0.0
        %2887 = vmatpush2.msra.mxu0 %v2814
        %2888 = vmatprep.subr.mxu0 0.0
        %2889 = vmatpush2.msra.mxu0 %v2813
        %2890 = vmatprep.subr.mxu0 0.0
        %2891 = vmatpush2.msra.mxu0 %v2812
        %2892 = vmatprep.subr.mxu0 0.0
        %2893 = vmatpush2.msra.mxu0 %v2811
        %2894 = vmatprep.subr.mxu0 0.0
        %2895 = vmatpush2.msra.mxu0 %v2810
        %2896 = vmatprep.subr.mxu0 0.0
        %2897 = vmatpush2.msra.mxu0 %v2809
        %2898 = vmatprep.subr.mxu0 0.0
        %2899 = vmatpush2.msra.mxu0 %v2808
        %2900 = vmatprep.subr.mxu0 0.0
        %2901 = vmatpush2.msra.mxu0 %v2807
        %2902 = vmatprep.subr.mxu0 0.0
        %2903 = vmatpush2.msra.mxu0 %v2806
        %2904 = vmatprep.subr.mxu0 0.0
        %2905 = vmatpush2.msra.mxu0 %v2805
        %2906 = vmatprep.subr.mxu0 0.0
        %2907 = vmatpush2.msra.mxu0 %v2804
        %2908 = vmatprep.subr.mxu0 0.0
        %2909 = vmatpush2.msra.mxu0 %v2803
        %2910 = vmatprep.subr.mxu0 0.0
        %2911 = vmatpush2.msra.mxu0 %v2802
        %2912 = vmatprep.subr.mxu0 0.0
        %2913 = vmatpush2.msra.mxu0 %v2801
        %2914 = vmatprep.subr.mxu0 0.0
        %2915 = vmatpush2.msra.mxu0 %v2800
        %2916 = vmatprep.subr.mxu0 0.0
        %2917 = vmatpush2.msra.mxu0 %v2799
        %2918 = vmatprep.mubr.f32.mxu0 %v2768
        %2919 = vmatmul.mubr.f32.gmra.mxu0 %v2767
        %v2920 = vpop.f32.mrf.mxu0
        %v2921 = vadd.f32 %v2852, %v2920
        %v2922 = vpop.f32.mrf.mxu0
        %2923 = vmatprep.mubr.f32.mxu0 %v2772
        %2924 = vmatmul.mubr.f32.gmra.mxu0 %v2771
        %v2925 = vpop.f32.mrf.mxu0
        %v2926 = vadd.f32 %v2852, %v2925
        %v2927 = vpop.f32.mrf.mxu0
        %2928 = vmatprep.mubr.f32.mxu0 %v2776
        %2929 = vmatmul.mubr.f32.gmra.mxu0 %v2775
        %v2930 = vpop.f32.mrf.mxu0
        %v2931 = vadd.f32 %v2852, %v2930
        %v2932 = vpop.f32.mrf.mxu0
        %2933 = vmatprep.mubr.f32.mxu0 %v2780
        %2934 = vmatmul.mubr.f32.gmra.mxu0 %v2779
        %v2935 = vpop.f32.mrf.mxu0
        %v2936 = vadd.f32 %v2852, %v2935
        %v2937 = vpop.f32.mrf.mxu0
        %2938 = vdwg.mxu0
        %2939 = vmatprep.subr.mxu0 0.0
        %2940 = vmatpush1.msra.mxu0 %v2830
        %2941 = vmatprep.subr.mxu0 0.0
        %2942 = vmatpush1.msra.mxu0 %v2829
        %2943 = vmatprep.subr.mxu0 0.0
        %2944 = vmatpush1.msra.mxu0 %v2828
        %2945 = vmatprep.subr.mxu0 0.0
        %2946 = vmatpush1.msra.mxu0 %v2827
        %2947 = vmatprep.subr.mxu0 0.0
        %2948 = vmatpush1.msra.mxu0 %v2826
        %2949 = vmatprep.subr.mxu0 0.0
        %2950 = vmatpush1.msra.mxu0 %v2825
        %2951 = vmatprep.subr.mxu0 0.0
        %2952 = vmatpush1.msra.mxu0 %v2824
        %2953 = vmatprep.subr.mxu0 0.0
        %2954 = vmatpush1.msra.mxu0 %v2823
        %2955 = vmatprep.subr.mxu0 0.0
        %2956 = vmatpush1.msra.mxu0 %v2822
        %2957 = vmatprep.subr.mxu0 0.0
        %2958 = vmatpush1.msra.mxu0 %v2821
        %2959 = vmatprep.subr.mxu0 0.0
        %2960 = vmatpush1.msra.mxu0 %v2820
        %2961 = vmatprep.subr.mxu0 0.0
        %2962 = vmatpush1.msra.mxu0 %v2819
        %2963 = vmatprep.subr.mxu0 0.0
        %2964 = vmatpush1.msra.mxu0 %v2818
        %2965 = vmatprep.subr.mxu0 0.0
        %2966 = vmatpush1.msra.mxu0 %v2817
        %2967 = vmatprep.subr.mxu0 0.0
        %2968 = vmatpush1.msra.mxu0 %v2816
        %2969 = vmatprep.subr.mxu0 0.0
        %2970 = vmatpush1.msra.mxu0 %v2815
        %2971 = vmatprep.subr.mxu0 0.0
        %2972 = vmatpush2.msra.mxu0 %v2846
        %2973 = vmatprep.subr.mxu0 0.0
        %2974 = vmatpush2.msra.mxu0 %v2845
        %2975 = vmatprep.subr.mxu0 0.0
        %2976 = vmatpush2.msra.mxu0 %v2844
        %2977 = vmatprep.subr.mxu0 0.0
        %2978 = vmatpush2.msra.mxu0 %v2843
        %2979 = vmatprep.subr.mxu0 0.0
        %2980 = vmatpush2.msra.mxu0 %v2842
        %2981 = vmatprep.subr.mxu0 0.0
        %2982 = vmatpush2.msra.mxu0 %v2841
        %2983 = vmatprep.subr.mxu0 0.0
        %2984 = vmatpush2.msra.mxu0 %v2840
        %2985 = vmatprep.subr.mxu0 0.0
        %2986 = vmatpush2.msra.mxu0 %v2839
        %2987 = vmatprep.subr.mxu0 0.0
        %2988 = vmatpush2.msra.mxu0 %v2838
        %2989 = vmatprep.subr.mxu0 0.0
        %2990 = vmatpush2.msra.mxu0 %v2837
        %2991 = vmatprep.subr.mxu0 0.0
        %2992 = vmatpush2.msra.mxu0 %v2836
        %2993 = vmatprep.subr.mxu0 0.0
        %2994 = vmatpush2.msra.mxu0 %v2835
        %2995 = vmatprep.subr.mxu0 0.0
        %2996 = vmatpush2.msra.mxu0 %v2834
        %2997 = vmatprep.subr.mxu0 0.0
        %2998 = vmatpush2.msra.mxu0 %v2833
        %2999 = vmatprep.subr.mxu0 0.0
        %3000 = vmatpush2.msra.mxu0 %v2832
        %3001 = vmatprep.subr.mxu0 0.0
        %3002 = vmatpush2.msra.mxu0 %v2831
        %3003 = vmatprep.mubr.f32.mxu0 %v2770
        %3004 = vmatmul.mubr.f32.gmra.mxu0 %v2769
        %v3005 = vpop.f32.mrf.mxu0
        %v3006 = vadd.f32 %v2921, %v3005
        %v3007 = vpop.f32.mrf.mxu0
        %3008 = vmatprep.mubr.f32.mxu0 %v2774
        %3009 = vmatmul.mubr.f32.gmra.mxu0 %v2773
        %v3010 = vpop.f32.mrf.mxu0
        %v3011 = vadd.f32 %v2926, %v3010
        %v3012 = vpop.f32.mrf.mxu0
        %3013 = vmatprep.mubr.f32.mxu0 %v2778
        %3014 = vmatmul.mubr.f32.gmra.mxu0 %v2777
        %v3015 = vpop.f32.mrf.mxu0
        %v3016 = vadd.f32 %v2931, %v3015
        %v3017 = vpop.f32.mrf.mxu0
        %3018 = vmatprep.mubr.f32.mxu0 %v2782
        %3019 = vmatmul.mubr.f32.gmra.mxu0 %v2781
        %v3020 = vpop.f32.mrf.mxu0
        %v3021 = vadd.f32 %v2936, %v3020
        %v3022 = vpop.f32.mrf.mxu0
        %3023 = vdwg.mxu0
        %v3024 = vadd.f32 %v2369, %v3006
        %v3025 = vadd.f32 %v2370, %v3011
        %v3026 = vadd.f32 %v2371, %v3016
        %v3027 = vadd.f32 %v2372, %v3021
        %3028 = vst [vmem:[#allocation2] sm:$0xff] %v3024
        %3029 = vst [vmem:[#allocation2 + $0x8] sm:$0xff] %v3025
        %3030 = vst [vmem:[#allocation2 + $0x10] sm:$0xff] %v3026
        %3031 = vst [vmem:[#allocation2 + $0x18] sm:$0xff] %v3027
        %p3032 = scmp.eq.s32.totalorder %s47, 2
        // Predicated region
        $region113: #{transformer_encoder.1} parent=71 // pred_check
          %p3033 = pneg %p3032
        $region114: #{transformer_encoder.1} parent=71 // pred_check_branch
          %3035 = sbr.rel (%p3033) target = $region116
        $region115: #{transformer_encoder.1} parent=71 // pred_region
          %3036 = vst [vmem:[%s808] sm:$0xff] %v3024
          %3037 = vst [vmem:[%s808 + $0x8] sm:$0xff] %v3025
          %3038 = vst [vmem:[%s808 + $0x10] sm:$0xff] %v3026
          %3039 = vst [vmem:[%s808 + $0x18] sm:$0xff] %v3027
        $region116: #{transformer_encoder.1} parent=71 // pred_fallthru
          _
        %s3040 = sand.u32 %s400, 1
        %s3041 = scalar_lea.sflag [#allocation5], %s3040
        %s3042 = sand.u32 %s400, 1
        %s3043 = smul.addr %s3042, 32
        %s3044 = scalar_lea.vmem [#allocation18], %s3043
        // Predicated region
        $region117: #{transformer_encoder.1} parent=71 // pred_check
          %p3045 = pneg %p410
        $region118: #{transformer_encoder.1} parent=71 // pred_check_branch
          %3047 = sbr.rel (%p3045) target = $region120
        $region119: #{transformer_encoder.1} parent=71 // pred_region
          %s3049 = ssub.s32 512, 512
          %3050 = vsyncadd %s3041, %s3049
          %s3051 = smul.addr %s46, 4
          %s3052 = smul.addr %s3051, 128
          %s3053 = scalar_lea.hbm %s13, %s3052
          %s3054 = sshll.u32 %s3044, 4
          %s3055 = int_to_ptr.vmem [resolvable:$true] %s3054
          %3060 = dma.vmem_to_hbm [thread:$0]  %s3055, 512, %s3053, %s3041, 128, 128, 8
        $region120: #{transformer_encoder.1} parent=71 // pred_fallthru
          _
      $region72: #{transformer_encoder.1} parent=5 // pred_fallthru
        _
      %p3061 = scmp.le.s32.totalorder 2, %s37
      // Predicated region
      $region121: #{transformer_encoder.1} parent=5 // pred_check
        %p3062 = pneg %p3061
      $region122: #{transformer_encoder.1} parent=5 // pred_check_branch
        %3064 = sbr.rel (%p3062) target = $region124
      $region123: #{transformer_encoder.1} parent=5 // pred_region
        %s3065 = ssub.s32 %s37, 2
        // Predicated region
        $region125: #{transformer_encoder.1} parent=123 // pred_check
          %p3066 = pneg %p416
        $region126: #{transformer_encoder.1} parent=123 // pred_check_branch
          %3068 = sbr.rel (%p3066) target = $region128
        $region127: #{transformer_encoder.1} parent=123 // pred_region
          %s3069 = sand.u32 %s401, 1
          %s3070 = scalar_lea.sflag [#allocation5], %s3069
          %s3071 = sand.u32 %s401, 1
          %s3072 = smul.addr %s3071, 32
          %s3073 = scalar_lea.vmem [#allocation18], %s3072
          %3074 = dma.done %s3070, 512
        $region128: #{transformer_encoder.1} parent=123 // pred_fallthru
          _
      $region124: #{transformer_encoder.1} parent=5 // pred_fallthru
        _
    $region6: #{transformer_encoder.1} parent=1 // loop_footer
      %s41 = sadd.s32 1, %s37
    $region7: #{transformer_encoder.1} parent=1 // loop_footer_branch
      %36 = sbr.rel target = $region3
    $region8: #{transformer_encoder.1} parent=1 // loop_exit
      _
    %3075 = vsyncpa [#allocation4], 1
    %s3076 = scalar_lea.sflag [#allocation4], 1
    %3077 = vsyncpa %s3076, 1
    %3078 = vsyncpa [#allocation7], 1
    %s3079 = scalar_lea.sflag [#allocation7], 1
    %3080 = vsyncpa %s3079, 1
    %3081 = vsyncpa [#allocation10], 1
    %s3082 = scalar_lea.sflag [#allocation10], 1
    %3083 = vsyncpa %s3082, 1
    %3084 = vsyncpa [#allocation13], 1
    %s3085 = scalar_lea.sflag [#allocation13], 1
    %3086 = vsyncpa %s3085, 1
    %3087 = vsyncpa [#allocation16], 1
    %s3088 = scalar_lea.sflag [#allocation16], 1
    %3089 = vsyncpa %s3088, 1
    %3090 = vsyncpa [#allocation5], 1
    %s3091 = scalar_lea.sflag [#allocation5], 1
    %3092 = vsyncpa %s3091, 1

</llo_original>
